<compile_context>
chip_gen: v6e
topology: v6e:2x2x1
jax: 0.10.0
libtpu: 0.0.40
codegen_flags: <defaults>
</compile_context>

<pallas_src>
import math

import jax
import jax.numpy as jnp
from jax.experimental import pallas as pl
from jax.experimental.pallas import tpu as pltpu

# ---------------- model hyper-params (from the PyTorch script) ----------------
INPUT_DIM = 11
HIDDEN_DIM = 256
EMBEDDING_DIM = 24
EPAD = 128                 # layer-2 gate width padded to one full vreg lane group
STEP = 5
MLP_DIMS = (256, 64)
BN_EPS = 1e-5
LEAKY_SLOPE = 0.8


# ================================ kernels =====================================
def lstm_encoder_kernel(x_ref, wih1_ref, whh1_ref, b1_ref, w2_ref, b2_ref,
                        h1_out_ref):
    """Two stacked LSTMCells, STEP fully unrolled, one batch tile per grid step.

    x_ref   : (STEP, TB, INPUT_DIM) f32   time-major batch tile
    wih1_ref: (INPUT_DIM, 4H) bf16        i/f/o gate columns pre-scaled by 0.5
    whh1_ref: (H, 4H)        bf16         i/f/o gate columns pre-scaled by 0.5
    b1_ref  : (1, 4H)        f32          i/f/o gate columns pre-scaled by 0.5
    w2_ref  : (H+EPAD, 4*EPAD) bf16       stacked [wih2; whh2], gate-padded + prescaled
    b2_ref  : (1, 4*EPAD)    f32          gate-padded + prescaled
    h1_out  : (TB, EPAD)     f32          lanes >= EMBEDDING_DIM stay exactly 0
    """
    TB = h1_out_ref.shape[0]
    H, G = HIDDEN_DIM, EPAD
    bf16, f32 = jnp.bfloat16, jnp.float32

    wih1 = wih1_ref[...]
    whh1 = whh1_ref[...]
    b1 = b1_ref[...]
    w2 = w2_ref[...]
    b2 = b2_ref[...]

    def sig_pre(x):            # the 0.5 input scale already lives in the weights
        return 0.5 * jnp.tanh(x) + 0.5

    c0 = jnp.zeros((TB, H), f32)
    c1 = jnp.zeros((TB, G), f32)
    h1 = jnp.zeros((TB, G), f32)
    h0b = jnp.zeros((TB, H), bf16)   # bf16 copies of the h-state, reused across dots
    h1b = jnp.zeros((TB, G), bf16)

    # step=5 is tiny and static -> fully unrolled recurrence inside the kernel.
    for t in range(STEP):
        # layer-1 input projection: no h-dependence, scheduler hoists it off the chain
        xg = jnp.dot(x_ref[t].astype(bf16), wih1, preferred_element_type=f32) + b1

        # ----- LSTMCell 1 (hidden_dim=256; gate slices 128-lane aligned) -----
        if t == 0:
            gv1 = xg                                   # h0 is exactly zero at t=0
        else:
            gv1 = xg + jnp.dot(h0b, whh1, preferred_element_type=f32)   # (TB, 4H)
        i1 = sig_pre(gv1[:, 0 * H:1 * H])
        f1 = sig_pre(gv1[:, 1 * H:2 * H])
        g1 = jnp.tanh(gv1[:, 2 * H:3 * H])
        o1 = sig_pre(gv1[:, 3 * H:4 * H])
        c0 = f1 * c0 + i1 * g1
        h0 = o1 * jnp.tanh(c0)
        h0b = h0.astype(bf16)                          # single cast, reused next step

        # ----- LSTMCell 2: merged K=384 dot  [h0 | h1_pad] @ [wih2; whh2] -----
        h01 = jnp.concatenate([h0b, h1b], axis=-1)                  # (TB, H+G) bf16
        gv2 = jnp.dot(h01, w2, preferred_element_type=f32) + b2     # (TB, 4G)
        i2 = sig_pre(gv2[:, 0 * G:1 * G])
        f2 = sig_pre(gv2[:, 1 * G:2 * G])
        g2 = jnp.tanh(gv2[:, 2 * G:3 * G])
        o2 = sig_pre(gv2[:, 3 * G:4 * G])
        c1 = f2 * c1 + i2 * g2      # padded lanes: g2==0 and c1 starts 0 -> stays 0
        h1 = o2 * jnp.tanh(c1)      # padded lanes of h1 stay exactly 0
        h1b = h1.astype(bf16)

    h1_out_ref[...] = h1


def mlp_head_kernel(h1_ref, wm1_ref, bm1_ref, g1_ref, be1_ref,
                    wm2_ref, bm2_ref, g2_ref, be2_ref, wm3_ref, bm3_ref,
                    out_ref):
    """[Linear -> BN(train) -> LeakyReLU(0.8) -> Dropout(0)] x2 -> Linear(.,1).

    Gridless over the whole real batch so BatchNorm statistics are full-batch exact.
    h1_ref is (B, EPAD) with padded lanes zero; wm1's padded rows are zero too.
    """
    bf16, f32 = jnp.bfloat16, jnp.float32

    def bn_leaky(z, gamma, beta):
        mean = jnp.mean(z, axis=0, keepdims=True)
        var = jnp.mean((z - mean) ** 2, axis=0, keepdims=True)  # biased var (BN train)
        zn = (z - mean) * jax.lax.rsqrt(var + BN_EPS)
        zn = zn * gamma + beta
        return jnp.where(zn > 0, zn, LEAKY_SLOPE * zn)

    z = jnp.dot(h1_ref[...].astype(bf16), wm1_ref[...],
                preferred_element_type=f32) + bm1_ref[...]
    z = bn_leaky(z, g1_ref[...], be1_ref[...])
    z = jnp.dot(z.astype(bf16), wm2_ref[...],
                preferred_element_type=f32) + bm2_ref[...]
    z = bn_leaky(z, g2_ref[...], be2_ref[...])
    # final (B,64)@(64,1): broadcast-mul + lane reduce (skip an N=1 MXU push/pop)
    out_ref[...] = jnp.sum(z * wm3_ref[...], axis=-1, keepdims=True) + bm3_ref[...]
    # TODO(synk): PyTorch train-mode BatchNorm also updates running_mean/running_var
    # buffers in-place; that side effect is not materialized here (forward unaffected).


# ================================ wrapper =====================================
def finetune_lstm_forward(x_btd, kernel_params, *, batch_tile=32):
    """x_btd: (B, step, input_dim) f32 (PyTorch layout). Returns (B, 1) f32."""
    (wih1, whh1, b1, w2, b2,
     wm1, bm1, g1, be1, wm2, bm2, g2, be2, wm3, bm3) = kernel_params

    B, S, D = x_btd.shape
    assert S == STEP and D == INPUT_DIM

    # batch tile: multiple of 8 (f32 sublane) so per-step slices stay tile-aligned
    TB = max(8, (min(batch_tile, B) + 7) // 8 * 8)
    B_pad = (B + TB - 1) // TB * TB
    n_tiles = B_pad // TB

    # time-major so each batch-tile block is a contiguous (STEP, TB, INPUT_DIM) window
    x_tmb = jnp.transpose(x_btd, (1, 0, 2))
    if B_pad != B:
        x_tmb = jnp.pad(x_tmb, ((0, 0), (0, B_pad - B), (0, 0)))

    def resident(a):
        # whole array, same block index for every grid step -> DMA'd once, kept in VMEM
        return pl.BlockSpec(a.shape, lambda i: (0,) * a.ndim)

    h1_pad = pl.pallas_call(
        lstm_encoder_kernel,
        out_shape=jax.ShapeDtypeStruct((B_pad, EPAD), jnp.float32),
        grid=(n_tiles,),
        in_specs=[
            pl.BlockSpec((STEP, TB, INPUT_DIM), lambda i: (0, i, 0)),
            resident(wih1), resident(whh1), resident(b1),
            resident(w2), resident(b2),
        ],
        out_specs=pl.BlockSpec((TB, EPAD), lambda i: (i, 0)),
        compiler_params=pltpu.CompilerParams(
            dimension_semantics=("parallel",)),   # both TensorCores on v7x
    )(x_tmb, wih1, whh1, b1, w2, b2)

    # MLP head over the real batch only (drop padded rows) -> exact full-batch BN stats.
    h1 = h1_pad[:B]
    vmem = pl.BlockSpec(memory_space=pltpu.MemorySpace.VMEM)
    mlp_inputs = (h1, wm1, bm1, g1, be1, wm2, bm2, g2, be2, wm3, bm3)
    return pl.pallas_call(
        mlp_head_kernel,
        out_shape=jax.ShapeDtypeStruct((B, 1), jnp.float32),
        in_specs=[vmem] * len(mlp_inputs),
        out_specs=vmem,
    )(*mlp_inputs)


# ---------------------------- parameter construction ----------------------------
def _uniform(key, shape, bound):
    return jax.random.uniform(key, shape, jnp.float32, -bound, bound)


def make_params(key):
    """Logical f32 parameters, PyTorch init, stored transposed to (in, out)."""
    ks = jax.random.split(key, 16)
    kH = 1.0 / math.sqrt(HIDDEN_DIM)
    kE = 1.0 / math.sqrt(EMBEDDING_DIM)

    # LSTMCell 1: input_dim -> hidden_dim (PyTorch weight (4H,in); stored transposed)
    wih1 = _uniform(ks[0], (4 * HIDDEN_DIM, INPUT_DIM), kH).T
    whh1 = _uniform(ks[1], (4 * HIDDEN_DIM, HIDDEN_DIM), kH).T
    b1 = (_uniform(ks[2], (4 * HIDDEN_DIM,), kH)
          + _uniform(ks[3], (4 * HIDDEN_DIM,), kH)).reshape(1, -1)

    # LSTMCell 2: hidden_dim -> embedding_dim
    wih2 = _uniform(ks[4], (4 * EMBEDDING_DIM, HIDDEN_DIM), kE).T
    whh2 = _uniform(ks[5], (4 * EMBEDDING_DIM, EMBEDDING_DIM), kE).T
    b2 = (_uniform(ks[6], (4 * EMBEDDING_DIM,), kE)
          + _uniform(ks[7], (4 * EMBEDDING_DIM,), kE)).reshape(1, -1)

    # MLP: Linear(24,256) BN LeakyReLU; Linear(256,64) BN LeakyReLU; Linear(64,1)
    k1 = 1.0 / math.sqrt(EMBEDDING_DIM)
    wm1 = _uniform(ks[8], (MLP_DIMS[0], EMBEDDING_DIM), k1).T
    bm1 = _uniform(ks[9], (MLP_DIMS[0],), k1).reshape(1, -1)
    g1 = jnp.ones((1, MLP_DIMS[0]), jnp.float32)
    be1 = jnp.zeros((1, MLP_DIMS[0]), jnp.float32)

    k2 = 1.0 / math.sqrt(MLP_DIMS[0])
    wm2 = _uniform(ks[10], (MLP_DIMS[1], MLP_DIMS[0]), k2).T
    bm2 = _uniform(ks[11], (MLP_DIMS[1],), k2).reshape(1, -1)
    g2 = jnp.ones((1, MLP_DIMS[1]), jnp.float32)
    be2 = jnp.zeros((1, MLP_DIMS[1]), jnp.float32)

    k3 = 1.0 / math.sqrt(MLP_DIMS[1])
    wm3 = _uniform(ks[12], (1, MLP_DIMS[1]), k3)      # row vector (1,64), f32 (VPU path)
    bm3 = _uniform(ks[13], (1,), k3).reshape(1, 1)

    return (wih1, whh1, b1, wih2, whh2, b2,
            wm1, bm1, g1, be1, wm2, bm2, g2, be2, wm3, bm3)


def _pad_gates(w, e, epad):
    """(rows, 4*e) -> (rows, 4*epad): zero-pad each gate block along the lane axis."""
    parts = [jnp.pad(w[:, g * e:(g + 1) * e], ((0, 0), (0, epad - e))) for g in range(4)]
    return jnp.concatenate(parts, axis=-1)


def _prescale_ifo(w, hd):
    """Scale i/f/o gate column blocks by 0.5 (g untouched). Exact (power-of-two)."""
    return jnp.concatenate(
        [0.5 * w[:, 0 * hd:1 * hd], 0.5 * w[:, 1 * hd:2 * hd],
         w[:, 2 * hd:3 * hd], 0.5 * w[:, 3 * hd:4 * hd]], axis=-1)


def pack_kernel_params(p):
    """Kernel layout: bf16 matmul weights, layer-2 gates padded 24->128, [wih2; whh2]
    stacked into one K=384 weight, and sigmoid's 0.5 prescale folded into i/f/o columns.
    All transforms are mathematically exact (zero padding + power-of-two scaling)."""
    (wih1, whh1, b1, wih2, whh2, b2,
     wm1, bm1, g1, be1, wm2, bm2, g2, be2, wm3, bm3) = p
    bf16 = jnp.bfloat16
    E, G, H = EMBEDDING_DIM, EPAD, HIDDEN_DIM

    wih1_k = _prescale_ifo(wih1, H).astype(bf16)                     # (IN, 4H)
    whh1_k = _prescale_ifo(whh1, H).astype(bf16)                     # (H, 4H)
    b1_k = _prescale_ifo(b1, H)                                      # (1, 4H) f32

    wih2_p = _pad_gates(wih2, E, G)                                  # (H, 4G)
    whh2_p = _pad_gates(jnp.pad(whh2, ((0, G - E), (0, 0))), E, G)   # (G, 4G)
    w2_k = _prescale_ifo(jnp.concatenate([wih2_p, whh2_p], axis=0), G).astype(bf16)
    b2_k = _prescale_ifo(_pad_gates(b2, E, G), G)                    # (1, 4G) f32

    wm1_k = jnp.pad(wm1, ((0, G - E), (0, 0))).astype(bf16)          # (G, 256)
    wm2_k = wm2.astype(bf16)                                         # (256, 64)

    return (wih1_k, whh1_k, b1_k, w2_k, b2_k,
            wm1_k, bm1, g1, be1, wm2_k, bm2, g2, be2, wm3, bm3)


# ------------------- pure-JAX reference (matches kernel precision) -------------------
def reference_forward(x_btd, p):
    (wih1, whh1, b1, wih2, whh2, b2,
     wm1, bm1, g1, be1, wm2, bm2, g2, be2, wm3, bm3) = p
    B = x_btd.shape[0]
    bf16, f32 = jnp.bfloat16, jnp.float32

    def sig(x):
        return 0.5 * jnp.tanh(0.5 * x) + 0.5

    def cell(x, h, c, wih, whh, b, hd):
        gates = (jnp.dot(x.astype(bf16), wih.astype(bf16), preferred_element_type=f32)
                 + jnp.dot(h.astype(bf16), whh.astype(bf16), preferred_element_type=f32)
                 + b)
        i = sig(gates[:, 0 * hd:1 * hd])
        f = sig(gates[:, 1 * hd:2 * hd])
        g = jnp.tanh(gates[:, 2 * hd:3 * hd])
        o = sig(gates[:, 3 * hd:4 * hd])
        c = f * c + i * g
        return o * jnp.tanh(c), c

    h0 = jnp.zeros((B, HIDDEN_DIM), f32); c0 = jnp.zeros((B, HIDDEN_DIM), f32)
    h1 = jnp.zeros((B, EMBEDDING_DIM), f32); c1 = jnp.zeros((B, EMBEDDING_DIM), f32)
    for t in range(STEP):
        h0, c0 = cell(x_btd[:, t, :], h0, c0, wih1, whh1, b1, HIDDEN_DIM)
        h1, c1 = cell(h0, h1, c1, wih2, whh2, b2, EMBEDDING_DIM)

    def bn_leaky(z, gamma, beta):
        m = jnp.mean(z, axis=0, keepdims=True)
        v = jnp.mean((z - m) ** 2, axis=0, keepdims=True)
        zn = (z - m) * jax.lax.rsqrt(v + BN_EPS) * gamma + beta
        return jnp.where(zn > 0, zn, LEAKY_SLOPE * zn)

    z = bn_leaky(jnp.dot(h1.astype(bf16), wm1.astype(bf16),
                         preferred_element_type=f32) + bm1, g1, be1)
    z = bn_leaky(jnp.dot(z.astype(bf16), wm2.astype(bf16),
                         preferred_element_type=f32) + bm2, g2, be2)
    return jnp.sum(z * wm3, axis=-1, keepdims=True) + bm3


if __name__ == "__main__":
    key = jax.random.PRNGKey(0)
    k_x, k_p = jax.random.split(key)

    B = 64   # small demo batch; two batch tiles of 32 exercise the grid / parallel axis
    x = jax.random.normal(k_x, (B, STEP, INPUT_DIM), jnp.float32)  # (batch, time, feature)

    params = make_params(k_p)
    kernel_params = pack_kernel_params(params)

    out = finetune_lstm_forward(x, kernel_params, batch_tile=32)
    out = jax.block_until_ready(out)

    ref = reference_forward(x, params)
    assert out.shape == (B, 1)
    assert jnp.allclose(out, ref, rtol=2e-3, atol=2e-3), "mismatch vs reference"

    print("KERNEL_OK")
</pallas_src>

<mosaic_0001>
module attributes {stable_mosaic.version = 11 : i64} {
  func.func @lstm_encoder_kernel(%arg0: i32, %arg1: memref<5x32x11xf32, #tpu.memory_space<vmem>>, %arg2: memref<11x1024xbf16, #tpu.memory_space<vmem>>, %arg3: memref<256x1024xbf16, #tpu.memory_space<vmem>>, %arg4: memref<1x1024xf32, #tpu.memory_space<vmem>>, %arg5: memref<384x512xbf16, #tpu.memory_space<vmem>>, %arg6: memref<1x512xf32, #tpu.memory_space<vmem>>, %arg7: memref<32x128xf32, #tpu.memory_space<vmem>>) attributes {dimension_semantics = [#tpu.dimension_semantics<parallel>], iteration_bounds = array<i64: 2>, scalar_prefetch = 0 : i64, scratch_operands = 0 : i64, tpu.core_type = #tpu.core_type<tc>, window_params = [{transform_indices = @transform_0, window_bounds = array<i64: 5, 32, 11>}, {pipeline_mode = #tpu.pipeline_mode<synchronous>, transform_indices = @transform_1, window_bounds = array<i64: 11, 1024>}, {pipeline_mode = #tpu.pipeline_mode<synchronous>, transform_indices = @transform_2, window_bounds = array<i64: 256, 1024>}, {pipeline_mode = #tpu.pipeline_mode<synchronous>, transform_indices = @transform_3, window_bounds = array<i64: 1, 1024>}, {pipeline_mode = #tpu.pipeline_mode<synchronous>, transform_indices = @transform_4, window_bounds = array<i64: 384, 512>}, {pipeline_mode = #tpu.pipeline_mode<synchronous>, transform_indices = @transform_5, window_bounds = array<i64: 1, 512>}, {transform_indices = @transform_6, window_bounds = array<i64: 32, 128>}]} {
    %c0 = arith.constant 0 : index
    %c0_0 = arith.constant 0 : index
    %0 = vector.load %arg2[%c0, %c0_0] : memref<11x1024xbf16, #tpu.memory_space<vmem>>, vector<11x1024xbf16>
    %c0_1 = arith.constant 0 : index
    %c0_2 = arith.constant 0 : index
    %1 = vector.load %arg3[%c0_1, %c0_2] : memref<256x1024xbf16, #tpu.memory_space<vmem>>, vector<256x1024xbf16>
    %c0_3 = arith.constant 0 : index
    %c0_4 = arith.constant 0 : index
    %2 = vector.load %arg4[%c0_3, %c0_4] : memref<1x1024xf32, #tpu.memory_space<vmem>>, vector<1x1024xf32>
    %c0_5 = arith.constant 0 : index
    %c0_6 = arith.constant 0 : index
    %3 = vector.load %arg5[%c0_5, %c0_6] : memref<384x512xbf16, #tpu.memory_space<vmem>>, vector<384x512xbf16>
    %c0_7 = arith.constant 0 : index
    %c0_8 = arith.constant 0 : index
    %4 = vector.load %arg6[%c0_7, %c0_8] : memref<1x512xf32, #tpu.memory_space<vmem>>, vector<1x512xf32>
    %cst = arith.constant 0.000000e+00 : f32
    %5 = vector.broadcast %cst : f32 to vector<32x256xf32>
    %cst_9 = arith.constant 0.000000e+00 : f32
    %6 = vector.broadcast %cst_9 : f32 to vector<32x128xf32>
    %cst_10 = arith.constant 0.000000e+00 : bf16
    %7 = vector.broadcast %cst_10 : bf16 to vector<32x128xbf16>
    %c0_11 = arith.constant 0 : index
    %c0_12 = arith.constant 0 : index
    %c0_13 = arith.constant 0 : index
    %8 = vector.load %arg1[%c0_11, %c0_12, %c0_13] : memref<5x32x11xf32, #tpu.memory_space<vmem>>, vector<1x32x11xf32>
    %9 = vector.shape_cast %8 : vector<1x32x11xf32> to vector<32x11xf32>
    %10 = arith.truncf %9 : vector<32x11xf32> to vector<32x11xbf16>
    %cst_14 = arith.constant dense<0.000000e+00> : vector<32x1024xf32>
    %11 = tpu.matmul %10, %0, %cst_14 {dimension_numbers = #tpu.dot_dimension_numbers<[1], [0], [0], [1], [0, 0, 1, 1], [], []>} : vector<32x11xbf16>, vector<11x1024xbf16>, vector<32x1024xf32> -> vector<32x1024xf32>
    %12 = vector.broadcast %2 : vector<1x1024xf32> to vector<32x1024xf32>
    %13 = arith.addf %11, %12 : vector<32x1024xf32>
    %14 = vector.extract_strided_slice %13 {offsets = [0, 0], sizes = [32, 256], strides = [1, 1]} : vector<32x1024xf32> to vector<32x256xf32>
    %15 = math.tanh %14 : vector<32x256xf32>
    %cst_15 = arith.constant 5.000000e-01 : f32
    %16 = vector.broadcast %cst_15 : f32 to vector<32x256xf32>
    %17 = arith.mulf %16, %15 : vector<32x256xf32>
    %cst_16 = arith.constant 5.000000e-01 : f32
    %18 = vector.broadcast %cst_16 : f32 to vector<32x256xf32>
    %19 = arith.addf %17, %18 : vector<32x256xf32>
    %20 = vector.extract_strided_slice %13 {offsets = [0, 256], sizes = [32, 256], strides = [1, 1]} : vector<32x1024xf32> to vector<32x256xf32>
    %21 = math.tanh %20 : vector<32x256xf32>
    %cst_17 = arith.constant 5.000000e-01 : f32
    %22 = vector.broadcast %cst_17 : f32 to vector<32x256xf32>
    %23 = arith.mulf %22, %21 : vector<32x256xf32>
    %cst_18 = arith.constant 5.000000e-01 : f32
    %24 = vector.broadcast %cst_18 : f32 to vector<32x256xf32>
    %25 = arith.addf %23, %24 : vector<32x256xf32>
    %26 = vector.extract_strided_slice %13 {offsets = [0, 512], sizes = [32, 256], strides = [1, 1]} : vector<32x1024xf32> to vector<32x256xf32>
    %27 = math.tanh %26 : vector<32x256xf32>
    %28 = vector.extract_strided_slice %13 {offsets = [0, 768], sizes = [32, 256], strides = [1, 1]} : vector<32x1024xf32> to vector<32x256xf32>
    %29 = math.tanh %28 : vector<32x256xf32>
    %cst_19 = arith.constant 5.000000e-01 : f32
    %30 = vector.broadcast %cst_19 : f32 to vector<32x256xf32>
    %31 = arith.mulf %30, %29 : vector<32x256xf32>
    %cst_20 = arith.constant 5.000000e-01 : f32
    %32 = vector.broadcast %cst_20 : f32 to vector<32x256xf32>
    %33 = arith.addf %31, %32 : vector<32x256xf32>
    %34 = arith.mulf %25, %5 : vector<32x256xf32>
    %35 = arith.mulf %19, %27 : vector<32x256xf32>
    %36 = arith.addf %34, %35 : vector<32x256xf32>
    %37 = math.tanh %36 : vector<32x256xf32>
    %38 = arith.mulf %33, %37 : vector<32x256xf32>
    %39 = arith.truncf %38 : vector<32x256xf32> to vector<32x256xbf16>
    %40 = tpu.concatenate %39, %7 in 1 : vector<32x256xbf16>, vector<32x128xbf16> -> vector<32x384xbf16>
    %cst_21 = arith.constant dense<0.000000e+00> : vector<32x512xf32>
    %41 = tpu.matmul %40, %3, %cst_21 {dimension_numbers = #tpu.dot_dimension_numbers<[1], [0], [0], [1], [0, 0, 1, 1], [], []>} : vector<32x384xbf16>, vector<384x512xbf16>, vector<32x512xf32> -> vector<32x512xf32>
    %42 = vector.broadcast %4 : vector<1x512xf32> to vector<32x512xf32>
    %43 = arith.addf %41, %42 : vector<32x512xf32>
    %44 = vector.extract_strided_slice %43 {offsets = [0, 0], sizes = [32, 128], strides = [1, 1]} : vector<32x512xf32> to vector<32x128xf32>
    %45 = math.tanh %44 : vector<32x128xf32>
    %cst_22 = arith.constant 5.000000e-01 : f32
    %46 = vector.broadcast %cst_22 : f32 to vector<32x128xf32>
    %47 = arith.mulf %46, %45 : vector<32x128xf32>
    %cst_23 = arith.constant 5.000000e-01 : f32
    %48 = vector.broadcast %cst_23 : f32 to vector<32x128xf32>
    %49 = arith.addf %47, %48 : vector<32x128xf32>
    %50 = vector.extract_strided_slice %43 {offsets = [0, 128], sizes = [32, 128], strides = [1, 1]} : vector<32x512xf32> to vector<32x128xf32>
    %51 = math.tanh %50 : vector<32x128xf32>
    %cst_24 = arith.constant 5.000000e-01 : f32
    %52 = vector.broadcast %cst_24 : f32 to vector<32x128xf32>
    %53 = arith.mulf %52, %51 : vector<32x128xf32>
    %cst_25 = arith.constant 5.000000e-01 : f32
    %54 = vector.broadcast %cst_25 : f32 to vector<32x128xf32>
    %55 = arith.addf %53, %54 : vector<32x128xf32>
    %56 = vector.extract_strided_slice %43 {offsets = [0, 256], sizes = [32, 128], strides = [1, 1]} : vector<32x512xf32> to vector<32x128xf32>
    %57 = math.tanh %56 : vector<32x128xf32>
    %58 = vector.extract_strided_slice %43 {offsets = [0, 384], sizes = [32, 128], strides = [1, 1]} : vector<32x512xf32> to vector<32x128xf32>
    %59 = math.tanh %58 : vector<32x128xf32>
    %cst_26 = arith.constant 5.000000e-01 : f32
    %60 = vector.broadcast %cst_26 : f32 to vector<32x128xf32>
    %61 = arith.mulf %60, %59 : vector<32x128xf32>
    %cst_27 = arith.constant 5.000000e-01 : f32
    %62 = vector.broadcast %cst_27 : f32 to vector<32x128xf32>
    %63 = arith.addf %61, %62 : vector<32x128xf32>
    %64 = arith.mulf %55, %6 : vector<32x128xf32>
    %65 = arith.mulf %49, %57 : vector<32x128xf32>
    %66 = arith.addf %64, %65 : vector<32x128xf32>
    %67 = math.tanh %66 : vector<32x128xf32>
    %68 = arith.mulf %63, %67 : vector<32x128xf32>
    %69 = arith.truncf %68 : vector<32x128xf32> to vector<32x128xbf16>
    %c1 = arith.constant 1 : index
    %c0_28 = arith.constant 0 : index
    %c0_29 = arith.constant 0 : index
    %70 = vector.load %arg1[%c1, %c0_28, %c0_29] : memref<5x32x11xf32, #tpu.memory_space<vmem>>, vector<1x32x11xf32>
    %71 = vector.shape_cast %70 : vector<1x32x11xf32> to vector<32x11xf32>
    %72 = arith.truncf %71 : vector<32x11xf32> to vector<32x11xbf16>
    %cst_30 = arith.constant dense<0.000000e+00> : vector<32x1024xf32>
    %73 = tpu.matmul %72, %0, %cst_30 {dimension_numbers = #tpu.dot_dimension_numbers<[1], [0], [0], [1], [0, 0, 1, 1], [], []>} : vector<32x11xbf16>, vector<11x1024xbf16>, vector<32x1024xf32> -> vector<32x1024xf32>
    %74 = vector.broadcast %2 : vector<1x1024xf32> to vector<32x1024xf32>
    %75 = arith.addf %73, %74 : vector<32x1024xf32>
    %cst_31 = arith.constant dense<0.000000e+00> : vector<32x1024xf32>
    %76 = tpu.matmul %39, %1, %cst_31 {dimension_numbers = #tpu.dot_dimension_numbers<[1], [0], [0], [1], [0, 0, 1, 1], [], []>} : vector<32x256xbf16>, vector<256x1024xbf16>, vector<32x1024xf32> -> vector<32x1024xf32>
    %77 = arith.addf %75, %76 : vector<32x1024xf32>
    %78 = vector.extract_strided_slice %77 {offsets = [0, 0], sizes = [32, 256], strides = [1, 1]} : vector<32x1024xf32> to vector<32x256xf32>
    %79 = math.tanh %78 : vector<32x256xf32>
    %cst_32 = arith.constant 5.000000e-01 : f32
    %80 = vector.broadcast %cst_32 : f32 to vector<32x256xf32>
    %81 = arith.mulf %80, %79 : vector<32x256xf32>
    %cst_33 = arith.constant 5.000000e-01 : f32
    %82 = vector.broadcast %cst_33 : f32 to vector<32x256xf32>
    %83 = arith.addf %81, %82 : vector<32x256xf32>
    %84 = vector.extract_strided_slice %77 {offsets = [0, 256], sizes = [32, 256], strides = [1, 1]} : vector<32x1024xf32> to vector<32x256xf32>
    %85 = math.tanh %84 : vector<32x256xf32>
    %cst_34 = arith.constant 5.000000e-01 : f32
    %86 = vector.broadcast %cst_34 : f32 to vector<32x256xf32>
    %87 = arith.mulf %86, %85 : vector<32x256xf32>
    %cst_35 = arith.constant 5.000000e-01 : f32
    %88 = vector.broadcast %cst_35 : f32 to vector<32x256xf32>
    %89 = arith.addf %87, %88 : vector<32x256xf32>
    %90 = vector.extract_strided_slice %77 {offsets = [0, 512], sizes = [32, 256], strides = [1, 1]} : vector<32x1024xf32> to vector<32x256xf32>
    %91 = math.tanh %90 : vector<32x256xf32>
    %92 = vector.extract_strided_slice %77 {offsets = [0, 768], sizes = [32, 256], strides = [1, 1]} : vector<32x1024xf32> to vector<32x256xf32>
    %93 = math.tanh %92 : vector<32x256xf32>
    %cst_36 = arith.constant 5.000000e-01 : f32
    %94 = vector.broadcast %cst_36 : f32 to vector<32x256xf32>
    %95 = arith.mulf %94, %93 : vector<32x256xf32>
    %cst_37 = arith.constant 5.000000e-01 : f32
    %96 = vector.broadcast %cst_37 : f32 to vector<32x256xf32>
    %97 = arith.addf %95, %96 : vector<32x256xf32>
    %98 = arith.mulf %89, %36 : vector<32x256xf32>
    %99 = arith.mulf %83, %91 : vector<32x256xf32>
    %100 = arith.addf %98, %99 : vector<32x256xf32>
    %101 = math.tanh %100 : vector<32x256xf32>
    %102 = arith.mulf %97, %101 : vector<32x256xf32>
    %103 = arith.truncf %102 : vector<32x256xf32> to vector<32x256xbf16>
    %104 = tpu.concatenate %103, %69 in 1 : vector<32x256xbf16>, vector<32x128xbf16> -> vector<32x384xbf16>
    %cst_38 = arith.constant dense<0.000000e+00> : vector<32x512xf32>
    %105 = tpu.matmul %104, %3, %cst_38 {dimension_numbers = #tpu.dot_dimension_numbers<[1], [0], [0], [1], [0, 0, 1, 1], [], []>} : vector<32x384xbf16>, vector<384x512xbf16>, vector<32x512xf32> -> vector<32x512xf32>
    %106 = vector.broadcast %4 : vector<1x512xf32> to vector<32x512xf32>
    %107 = arith.addf %105, %106 : vector<32x512xf32>
    %108 = vector.extract_strided_slice %107 {offsets = [0, 0], sizes = [32, 128], strides = [1, 1]} : vector<32x512xf32> to vector<32x128xf32>
    %109 = math.tanh %108 : vector<32x128xf32>
    %cst_39 = arith.constant 5.000000e-01 : f32
    %110 = vector.broadcast %cst_39 : f32 to vector<32x128xf32>
    %111 = arith.mulf %110, %109 : vector<32x128xf32>
    %cst_40 = arith.constant 5.000000e-01 : f32
    %112 = vector.broadcast %cst_40 : f32 to vector<32x128xf32>
    %113 = arith.addf %111, %112 : vector<32x128xf32>
    %114 = vector.extract_strided_slice %107 {offsets = [0, 128], sizes = [32, 128], strides = [1, 1]} : vector<32x512xf32> to vector<32x128xf32>
    %115 = math.tanh %114 : vector<32x128xf32>
    %cst_41 = arith.constant 5.000000e-01 : f32
    %116 = vector.broadcast %cst_41 : f32 to vector<32x128xf32>
    %117 = arith.mulf %116, %115 : vector<32x128xf32>
    %cst_42 = arith.constant 5.000000e-01 : f32
    %118 = vector.broadcast %cst_42 : f32 to vector<32x128xf32>
    %119 = arith.addf %117, %118 : vector<32x128xf32>
    %120 = vector.extract_strided_slice %107 {offsets = [0, 256], sizes = [32, 128], strides = [1, 1]} : vector<32x512xf32> to vector<32x128xf32>
    %121 = math.tanh %120 : vector<32x128xf32>
    %122 = vector.extract_strided_slice %107 {offsets = [0, 384], sizes = [32, 128], strides = [1, 1]} : vector<32x512xf32> to vector<32x128xf32>
    %123 = math.tanh %122 : vector<32x128xf32>
    %cst_43 = arith.constant 5.000000e-01 : f32
    %124 = vector.broadcast %cst_43 : f32 to vector<32x128xf32>
    %125 = arith.mulf %124, %123 : vector<32x128xf32>
    %cst_44 = arith.constant 5.000000e-01 : f32
    %126 = vector.broadcast %cst_44 : f32 to vector<32x128xf32>
    %127 = arith.addf %125, %126 : vector<32x128xf32>
    %128 = arith.mulf %119, %66 : vector<32x128xf32>
    %129 = arith.mulf %113, %121 : vector<32x128xf32>
    %130 = arith.addf %128, %129 : vector<32x128xf32>
    %131 = math.tanh %130 : vector<32x128xf32>
    %132 = arith.mulf %127, %131 : vector<32x128xf32>
    %133 = arith.truncf %132 : vector<32x128xf32> to vector<32x128xbf16>
    %c2 = arith.constant 2 : index
    %c0_45 = arith.constant 0 : index
    %c0_46 = arith.constant 0 : index
    %134 = vector.load %arg1[%c2, %c0_45, %c0_46] : memref<5x32x11xf32, #tpu.memory_space<vmem>>, vector<1x32x11xf32>
    %135 = vector.shape_cast %134 : vector<1x32x11xf32> to vector<32x11xf32>
    %136 = arith.truncf %135 : vector<32x11xf32> to vector<32x11xbf16>
    %cst_47 = arith.constant dense<0.000000e+00> : vector<32x1024xf32>
    %137 = tpu.matmul %136, %0, %cst_47 {dimension_numbers = #tpu.dot_dimension_numbers<[1], [0], [0], [1], [0, 0, 1, 1], [], []>} : vector<32x11xbf16>, vector<11x1024xbf16>, vector<32x1024xf32> -> vector<32x1024xf32>
    %138 = vector.broadcast %2 : vector<1x1024xf32> to vector<32x1024xf32>
    %139 = arith.addf %137, %138 : vector<32x1024xf32>
    %cst_48 = arith.constant dense<0.000000e+00> : vector<32x1024xf32>
    %140 = tpu.matmul %103, %1, %cst_48 {dimension_numbers = #tpu.dot_dimension_numbers<[1], [0], [0], [1], [0, 0, 1, 1], [], []>} : vector<32x256xbf16>, vector<256x1024xbf16>, vector<32x1024xf32> -> vector<32x1024xf32>
    %141 = arith.addf %139, %140 : vector<32x1024xf32>
    %142 = vector.extract_strided_slice %141 {offsets = [0, 0], sizes = [32, 256], strides = [1, 1]} : vector<32x1024xf32> to vector<32x256xf32>
    %143 = math.tanh %142 : vector<32x256xf32>
    %cst_49 = arith.constant 5.000000e-01 : f32
    %144 = vector.broadcast %cst_49 : f32 to vector<32x256xf32>
    %145 = arith.mulf %144, %143 : vector<32x256xf32>
    %cst_50 = arith.constant 5.000000e-01 : f32
    %146 = vector.broadcast %cst_50 : f32 to vector<32x256xf32>
    %147 = arith.addf %145, %146 : vector<32x256xf32>
    %148 = vector.extract_strided_slice %141 {offsets = [0, 256], sizes = [32, 256], strides = [1, 1]} : vector<32x1024xf32> to vector<32x256xf32>
    %149 = math.tanh %148 : vector<32x256xf32>
    %cst_51 = arith.constant 5.000000e-01 : f32
    %150 = vector.broadcast %cst_51 : f32 to vector<32x256xf32>
    %151 = arith.mulf %150, %149 : vector<32x256xf32>
    %cst_52 = arith.constant 5.000000e-01 : f32
    %152 = vector.broadcast %cst_52 : f32 to vector<32x256xf32>
    %153 = arith.addf %151, %152 : vector<32x256xf32>
    %154 = vector.extract_strided_slice %141 {offsets = [0, 512], sizes = [32, 256], strides = [1, 1]} : vector<32x1024xf32> to vector<32x256xf32>
    %155 = math.tanh %154 : vector<32x256xf32>
    %156 = vector.extract_strided_slice %141 {offsets = [0, 768], sizes = [32, 256], strides = [1, 1]} : vector<32x1024xf32> to vector<32x256xf32>
    %157 = math.tanh %156 : vector<32x256xf32>
    %cst_53 = arith.constant 5.000000e-01 : f32
    %158 = vector.broadcast %cst_53 : f32 to vector<32x256xf32>
    %159 = arith.mulf %158, %157 : vector<32x256xf32>
    %cst_54 = arith.constant 5.000000e-01 : f32
    %160 = vector.broadcast %cst_54 : f32 to vector<32x256xf32>
    %161 = arith.addf %159, %160 : vector<32x256xf32>
    %162 = arith.mulf %153, %100 : vector<32x256xf32>
    %163 = arith.mulf %147, %155 : vector<32x256xf32>
    %164 = arith.addf %162, %163 : vector<32x256xf32>
    %165 = math.tanh %164 : vector<32x256xf32>
    %166 = arith.mulf %161, %165 : vector<32x256xf32>
    %167 = arith.truncf %166 : vector<32x256xf32> to vector<32x256xbf16>
    %168 = tpu.concatenate %167, %133 in 1 : vector<32x256xbf16>, vector<32x128xbf16> -> vector<32x384xbf16>
    %cst_55 = arith.constant dense<0.000000e+00> : vector<32x512xf32>
    %169 = tpu.matmul %168, %3, %cst_55 {dimension_numbers = #tpu.dot_dimension_numbers<[1], [0], [0], [1], [0, 0, 1, 1], [], []>} : vector<32x384xbf16>, vector<384x512xbf16>, vector<32x512xf32> -> vector<32x512xf32>
    %170 = vector.broadcast %4 : vector<1x512xf32> to vector<32x512xf32>
    %171 = arith.addf %169, %170 : vector<32x512xf32>
    %172 = vector.extract_strided_slice %171 {offsets = [0, 0], sizes = [32, 128], strides = [1, 1]} : vector<32x512xf32> to vector<32x128xf32>
    %173 = math.tanh %172 : vector<32x128xf32>
    %cst_56 = arith.constant 5.000000e-01 : f32
    %174 = vector.broadcast %cst_56 : f32 to vector<32x128xf32>
    %175 = arith.mulf %174, %173 : vector<32x128xf32>
    %cst_57 = arith.constant 5.000000e-01 : f32
    %176 = vector.broadcast %cst_57 : f32 to vector<32x128xf32>
    %177 = arith.addf %175, %176 : vector<32x128xf32>
    %178 = vector.extract_strided_slice %171 {offsets = [0, 128], sizes = [32, 128], strides = [1, 1]} : vector<32x512xf32> to vector<32x128xf32>
    %179 = math.tanh %178 : vector<32x128xf32>
    %cst_58 = arith.constant 5.000000e-01 : f32
    %180 = vector.broadcast %cst_58 : f32 to vector<32x128xf32>
    %181 = arith.mulf %180, %179 : vector<32x128xf32>
    %cst_59 = arith.constant 5.000000e-01 : f32
    %182 = vector.broadcast %cst_59 : f32 to vector<32x128xf32>
    %183 = arith.addf %181, %182 : vector<32x128xf32>
    %184 = vector.extract_strided_slice %171 {offsets = [0, 256], sizes = [32, 128], strides = [1, 1]} : vector<32x512xf32> to vector<32x128xf32>
    %185 = math.tanh %184 : vector<32x128xf32>
    %186 = vector.extract_strided_slice %171 {offsets = [0, 384], sizes = [32, 128], strides = [1, 1]} : vector<32x512xf32> to vector<32x128xf32>
    %187 = math.tanh %186 : vector<32x128xf32>
    %cst_60 = arith.constant 5.000000e-01 : f32
    %188 = vector.broadcast %cst_60 : f32 to vector<32x128xf32>
    %189 = arith.mulf %188, %187 : vector<32x128xf32>
    %cst_61 = arith.constant 5.000000e-01 : f32
    %190 = vector.broadcast %cst_61 : f32 to vector<32x128xf32>
    %191 = arith.addf %189, %190 : vector<32x128xf32>
    %192 = arith.mulf %183, %130 : vector<32x128xf32>
    %193 = arith.mulf %177, %185 : vector<32x128xf32>
    %194 = arith.addf %192, %193 : vector<32x128xf32>
    %195 = math.tanh %194 : vector<32x128xf32>
    %196 = arith.mulf %191, %195 : vector<32x128xf32>
    %197 = arith.truncf %196 : vector<32x128xf32> to vector<32x128xbf16>
    %c3 = arith.constant 3 : index
    %c0_62 = arith.constant 0 : index
    %c0_63 = arith.constant 0 : index
    %198 = vector.load %arg1[%c3, %c0_62, %c0_63] : memref<5x32x11xf32, #tpu.memory_space<vmem>>, vector<1x32x11xf32>
    %199 = vector.shape_cast %198 : vector<1x32x11xf32> to vector<32x11xf32>
    %200 = arith.truncf %199 : vector<32x11xf32> to vector<32x11xbf16>
    %cst_64 = arith.constant dense<0.000000e+00> : vector<32x1024xf32>
    %201 = tpu.matmul %200, %0, %cst_64 {dimension_numbers = #tpu.dot_dimension_numbers<[1], [0], [0], [1], [0, 0, 1, 1], [], []>} : vector<32x11xbf16>, vector<11x1024xbf16>, vector<32x1024xf32> -> vector<32x1024xf32>
    %202 = vector.broadcast %2 : vector<1x1024xf32> to vector<32x1024xf32>
    %203 = arith.addf %201, %202 : vector<32x1024xf32>
    %cst_65 = arith.constant dense<0.000000e+00> : vector<32x1024xf32>
    %204 = tpu.matmul %167, %1, %cst_65 {dimension_numbers = #tpu.dot_dimension_numbers<[1], [0], [0], [1], [0, 0, 1, 1], [], []>} : vector<32x256xbf16>, vector<256x1024xbf16>, vector<32x1024xf32> -> vector<32x1024xf32>
    %205 = arith.addf %203, %204 : vector<32x1024xf32>
    %206 = vector.extract_strided_slice %205 {offsets = [0, 0], sizes = [32, 256], strides = [1, 1]} : vector<32x1024xf32> to vector<32x256xf32>
    %207 = math.tanh %206 : vector<32x256xf32>
    %cst_66 = arith.constant 5.000000e-01 : f32
    %208 = vector.broadcast %cst_66 : f32 to vector<32x256xf32>
    %209 = arith.mulf %208, %207 : vector<32x256xf32>
    %cst_67 = arith.constant 5.000000e-01 : f32
    %210 = vector.broadcast %cst_67 : f32 to vector<32x256xf32>
    %211 = arith.addf %209, %210 : vector<32x256xf32>
    %212 = vector.extract_strided_slice %205 {offsets = [0, 256], sizes = [32, 256], strides = [1, 1]} : vector<32x1024xf32> to vector<32x256xf32>
    %213 = math.tanh %212 : vector<32x256xf32>
    %cst_68 = arith.constant 5.000000e-01 : f32
    %214 = vector.broadcast %cst_68 : f32 to vector<32x256xf32>
    %215 = arith.mulf %214, %213 : vector<32x256xf32>
    %cst_69 = arith.constant 5.000000e-01 : f32
    %216 = vector.broadcast %cst_69 : f32 to vector<32x256xf32>
    %217 = arith.addf %215, %216 : vector<32x256xf32>
    %218 = vector.extract_strided_slice %205 {offsets = [0, 512], sizes = [32, 256], strides = [1, 1]} : vector<32x1024xf32> to vector<32x256xf32>
    %219 = math.tanh %218 : vector<32x256xf32>
    %220 = vector.extract_strided_slice %205 {offsets = [0, 768], sizes = [32, 256], strides = [1, 1]} : vector<32x1024xf32> to vector<32x256xf32>
    %221 = math.tanh %220 : vector<32x256xf32>
    %cst_70 = arith.constant 5.000000e-01 : f32
    %222 = vector.broadcast %cst_70 : f32 to vector<32x256xf32>
    %223 = arith.mulf %222, %221 : vector<32x256xf32>
    %cst_71 = arith.constant 5.000000e-01 : f32
    %224 = vector.broadcast %cst_71 : f32 to vector<32x256xf32>
    %225 = arith.addf %223, %224 : vector<32x256xf32>
    %226 = arith.mulf %217, %164 : vector<32x256xf32>
    %227 = arith.mulf %211, %219 : vector<32x256xf32>
    %228 = arith.addf %226, %227 : vector<32x256xf32>
    %229 = math.tanh %228 : vector<32x256xf32>
    %230 = arith.mulf %225, %229 : vector<32x256xf32>
    %231 = arith.truncf %230 : vector<32x256xf32> to vector<32x256xbf16>
    %232 = tpu.concatenate %231, %197 in 1 : vector<32x256xbf16>, vector<32x128xbf16> -> vector<32x384xbf16>
    %cst_72 = arith.constant dense<0.000000e+00> : vector<32x512xf32>
    %233 = tpu.matmul %232, %3, %cst_72 {dimension_numbers = #tpu.dot_dimension_numbers<[1], [0], [0], [1], [0, 0, 1, 1], [], []>} : vector<32x384xbf16>, vector<384x512xbf16>, vector<32x512xf32> -> vector<32x512xf32>
    %234 = vector.broadcast %4 : vector<1x512xf32> to vector<32x512xf32>
    %235 = arith.addf %233, %234 : vector<32x512xf32>
    %236 = vector.extract_strided_slice %235 {offsets = [0, 0], sizes = [32, 128], strides = [1, 1]} : vector<32x512xf32> to vector<32x128xf32>
    %237 = math.tanh %236 : vector<32x128xf32>
    %cst_73 = arith.constant 5.000000e-01 : f32
    %238 = vector.broadcast %cst_73 : f32 to vector<32x128xf32>
    %239 = arith.mulf %238, %237 : vector<32x128xf32>
    %cst_74 = arith.constant 5.000000e-01 : f32
    %240 = vector.broadcast %cst_74 : f32 to vector<32x128xf32>
    %241 = arith.addf %239, %240 : vector<32x128xf32>
    %242 = vector.extract_strided_slice %235 {offsets = [0, 128], sizes = [32, 128], strides = [1, 1]} : vector<32x512xf32> to vector<32x128xf32>
    %243 = math.tanh %242 : vector<32x128xf32>
    %cst_75 = arith.constant 5.000000e-01 : f32
    %244 = vector.broadcast %cst_75 : f32 to vector<32x128xf32>
    %245 = arith.mulf %244, %243 : vector<32x128xf32>
    %cst_76 = arith.constant 5.000000e-01 : f32
    %246 = vector.broadcast %cst_76 : f32 to vector<32x128xf32>
    %247 = arith.addf %245, %246 : vector<32x128xf32>
    %248 = vector.extract_strided_slice %235 {offsets = [0, 256], sizes = [32, 128], strides = [1, 1]} : vector<32x512xf32> to vector<32x128xf32>
    %249 = math.tanh %248 : vector<32x128xf32>
    %250 = vector.extract_strided_slice %235 {offsets = [0, 384], sizes = [32, 128], strides = [1, 1]} : vector<32x512xf32> to vector<32x128xf32>
    %251 = math.tanh %250 : vector<32x128xf32>
    %cst_77 = arith.constant 5.000000e-01 : f32
    %252 = vector.broadcast %cst_77 : f32 to vector<32x128xf32>
    %253 = arith.mulf %252, %251 : vector<32x128xf32>
    %cst_78 = arith.constant 5.000000e-01 : f32
    %254 = vector.broadcast %cst_78 : f32 to vector<32x128xf32>
    %255 = arith.addf %253, %254 : vector<32x128xf32>
    %256 = arith.mulf %247, %194 : vector<32x128xf32>
    %257 = arith.mulf %241, %249 : vector<32x128xf32>
    %258 = arith.addf %256, %257 : vector<32x128xf32>
    %259 = math.tanh %258 : vector<32x128xf32>
    %260 = arith.mulf %255, %259 : vector<32x128xf32>
    %261 = arith.truncf %260 : vector<32x128xf32> to vector<32x128xbf16>
    %c4 = arith.constant 4 : index
    %c0_79 = arith.constant 0 : index
    %c0_80 = arith.constant 0 : index
    %262 = vector.load %arg1[%c4, %c0_79, %c0_80] : memref<5x32x11xf32, #tpu.memory_space<vmem>>, vector<1x32x11xf32>
    %263 = vector.shape_cast %262 : vector<1x32x11xf32> to vector<32x11xf32>
    %264 = arith.truncf %263 : vector<32x11xf32> to vector<32x11xbf16>
    %cst_81 = arith.constant dense<0.000000e+00> : vector<32x1024xf32>
    %265 = tpu.matmul %264, %0, %cst_81 {dimension_numbers = #tpu.dot_dimension_numbers<[1], [0], [0], [1], [0, 0, 1, 1], [], []>} : vector<32x11xbf16>, vector<11x1024xbf16>, vector<32x1024xf32> -> vector<32x1024xf32>
    %266 = vector.broadcast %2 : vector<1x1024xf32> to vector<32x1024xf32>
    %267 = arith.addf %265, %266 : vector<32x1024xf32>
    %cst_82 = arith.constant dense<0.000000e+00> : vector<32x1024xf32>
    %268 = tpu.matmul %231, %1, %cst_82 {dimension_numbers = #tpu.dot_dimension_numbers<[1], [0], [0], [1], [0, 0, 1, 1], [], []>} : vector<32x256xbf16>, vector<256x1024xbf16>, vector<32x1024xf32> -> vector<32x1024xf32>
    %269 = arith.addf %267, %268 : vector<32x1024xf32>
    %270 = vector.extract_strided_slice %269 {offsets = [0, 0], sizes = [32, 256], strides = [1, 1]} : vector<32x1024xf32> to vector<32x256xf32>
    %271 = math.tanh %270 : vector<32x256xf32>
    %cst_83 = arith.constant 5.000000e-01 : f32
    %272 = vector.broadcast %cst_83 : f32 to vector<32x256xf32>
    %273 = arith.mulf %272, %271 : vector<32x256xf32>
    %cst_84 = arith.constant 5.000000e-01 : f32
    %274 = vector.broadcast %cst_84 : f32 to vector<32x256xf32>
    %275 = arith.addf %273, %274 : vector<32x256xf32>
    %276 = vector.extract_strided_slice %269 {offsets = [0, 256], sizes = [32, 256], strides = [1, 1]} : vector<32x1024xf32> to vector<32x256xf32>
    %277 = math.tanh %276 : vector<32x256xf32>
    %cst_85 = arith.constant 5.000000e-01 : f32
    %278 = vector.broadcast %cst_85 : f32 to vector<32x256xf32>
    %279 = arith.mulf %278, %277 : vector<32x256xf32>
    %cst_86 = arith.constant 5.000000e-01 : f32
    %280 = vector.broadcast %cst_86 : f32 to vector<32x256xf32>
    %281 = arith.addf %279, %280 : vector<32x256xf32>
    %282 = vector.extract_strided_slice %269 {offsets = [0, 512], sizes = [32, 256], strides = [1, 1]} : vector<32x1024xf32> to vector<32x256xf32>
    %283 = math.tanh %282 : vector<32x256xf32>
    %284 = vector.extract_strided_slice %269 {offsets = [0, 768], sizes = [32, 256], strides = [1, 1]} : vector<32x1024xf32> to vector<32x256xf32>
    %285 = math.tanh %284 : vector<32x256xf32>
    %cst_87 = arith.constant 5.000000e-01 : f32
    %286 = vector.broadcast %cst_87 : f32 to vector<32x256xf32>
    %287 = arith.mulf %286, %285 : vector<32x256xf32>
    %cst_88 = arith.constant 5.000000e-01 : f32
    %288 = vector.broadcast %cst_88 : f32 to vector<32x256xf32>
    %289 = arith.addf %287, %288 : vector<32x256xf32>
    %290 = arith.mulf %281, %228 : vector<32x256xf32>
    %291 = arith.mulf %275, %283 : vector<32x256xf32>
    %292 = arith.addf %290, %291 : vector<32x256xf32>
    %293 = math.tanh %292 : vector<32x256xf32>
    %294 = arith.mulf %289, %293 : vector<32x256xf32>
    %295 = arith.truncf %294 : vector<32x256xf32> to vector<32x256xbf16>
    %296 = tpu.concatenate %295, %261 in 1 : vector<32x256xbf16>, vector<32x128xbf16> -> vector<32x384xbf16>
    %cst_89 = arith.constant dense<0.000000e+00> : vector<32x512xf32>
    %297 = tpu.matmul %296, %3, %cst_89 {dimension_numbers = #tpu.dot_dimension_numbers<[1], [0], [0], [1], [0, 0, 1, 1], [], []>} : vector<32x384xbf16>, vector<384x512xbf16>, vector<32x512xf32> -> vector<32x512xf32>
    %298 = vector.broadcast %4 : vector<1x512xf32> to vector<32x512xf32>
    %299 = arith.addf %297, %298 : vector<32x512xf32>
    %300 = vector.extract_strided_slice %299 {offsets = [0, 0], sizes = [32, 128], strides = [1, 1]} : vector<32x512xf32> to vector<32x128xf32>
    %301 = math.tanh %300 : vector<32x128xf32>
    %cst_90 = arith.constant 5.000000e-01 : f32
    %302 = vector.broadcast %cst_90 : f32 to vector<32x128xf32>
    %303 = arith.mulf %302, %301 : vector<32x128xf32>
    %cst_91 = arith.constant 5.000000e-01 : f32
    %304 = vector.broadcast %cst_91 : f32 to vector<32x128xf32>
    %305 = arith.addf %303, %304 : vector<32x128xf32>
    %306 = vector.extract_strided_slice %299 {offsets = [0, 128], sizes = [32, 128], strides = [1, 1]} : vector<32x512xf32> to vector<32x128xf32>
    %307 = math.tanh %306 : vector<32x128xf32>
    %cst_92 = arith.constant 5.000000e-01 : f32
    %308 = vector.broadcast %cst_92 : f32 to vector<32x128xf32>
    %309 = arith.mulf %308, %307 : vector<32x128xf32>
    %cst_93 = arith.constant 5.000000e-01 : f32
    %310 = vector.broadcast %cst_93 : f32 to vector<32x128xf32>
    %311 = arith.addf %309, %310 : vector<32x128xf32>
    %312 = vector.extract_strided_slice %299 {offsets = [0, 256], sizes = [32, 128], strides = [1, 1]} : vector<32x512xf32> to vector<32x128xf32>
    %313 = math.tanh %312 : vector<32x128xf32>
    %314 = vector.extract_strided_slice %299 {offsets = [0, 384], sizes = [32, 128], strides = [1, 1]} : vector<32x512xf32> to vector<32x128xf32>
    %315 = math.tanh %314 : vector<32x128xf32>
    %cst_94 = arith.constant 5.000000e-01 : f32
    %316 = vector.broadcast %cst_94 : f32 to vector<32x128xf32>
    %317 = arith.mulf %316, %315 : vector<32x128xf32>
    %cst_95 = arith.constant 5.000000e-01 : f32
    %318 = vector.broadcast %cst_95 : f32 to vector<32x128xf32>
    %319 = arith.addf %317, %318 : vector<32x128xf32>
    %320 = arith.mulf %311, %258 : vector<32x128xf32>
    %321 = arith.mulf %305, %313 : vector<32x128xf32>
    %322 = arith.addf %320, %321 : vector<32x128xf32>
    %323 = math.tanh %322 : vector<32x128xf32>
    %324 = arith.mulf %319, %323 : vector<32x128xf32>
    %c0_96 = arith.constant 0 : index
    %c0_97 = arith.constant 0 : index
    %325 = vector.load %arg7[%c0_96, %c0_97] : memref<32x128xf32, #tpu.memory_space<vmem>>, vector<32x128xf32>
    tpu.vector_store %arg7[%c0_96, %c0_97], %324 {strides = array<i32>} : memref<32x128xf32, #tpu.memory_space<vmem>>, vector<32x128xf32>,
    return
  }
  func.func @transform_0(%arg0: i32) -> (i32, i32, i32) {
    %c0_i32 = arith.constant 0 : i32
    %c0_i32_0 = arith.constant 0 : i32
    %c0_i32_1 = arith.constant 0 : i32
    return %c0_i32, %arg0, %c0_i32_0 : i32, i32, i32
  }
  func.func @transform_1(%arg0: i32) -> (i32, i32) {
    %c0_i32 = arith.constant 0 : i32
    %c0_i32_0 = arith.constant 0 : i32
    %c0_i32_1 = arith.constant 0 : i32
    return %c0_i32, %c0_i32_0 : i32, i32
  }
  func.func @transform_2(%arg0: i32) -> (i32, i32) {
    %c0_i32 = arith.constant 0 : i32
    %c0_i32_0 = arith.constant 0 : i32
    %c0_i32_1 = arith.constant 0 : i32
    return %c0_i32, %c0_i32_0 : i32, i32
  }
  func.func @transform_3(%arg0: i32) -> (i32, i32) {
    %c0_i32 = arith.constant 0 : i32
    %c0_i32_0 = arith.constant 0 : i32
    %c0_i32_1 = arith.constant 0 : i32
    return %c0_i32, %c0_i32_0 : i32, i32
  }
  func.func @transform_4(%arg0: i32) -> (i32, i32) {
    %c0_i32 = arith.constant 0 : i32
    %c0_i32_0 = arith.constant 0 : i32
    %c0_i32_1 = arith.constant 0 : i32
    return %c0_i32, %c0_i32_0 : i32, i32
  }
  func.func @transform_5(%arg0: i32) -> (i32, i32) {
    %c0_i32 = arith.constant 0 : i32
    %c0_i32_0 = arith.constant 0 : i32
    %c0_i32_1 = arith.constant 0 : i32
    return %c0_i32, %c0_i32_0 : i32, i32
  }
  func.func @transform_6(%arg0: i32) -> (i32, i32) {
    %c0_i32 = arith.constant 0 : i32
    %c0_i32_0 = arith.constant 0 : i32
    return %arg0, %c0_i32 : i32, i32
  }
}

</mosaic_0001>

<llo_original>
// kernel: tpu_custom_call.1
$region0: #{tpu_custom_call.1}
  #allocation0 [shape = 'u32[]', space=smem, size = 0x4, offset = 0x4, fixed_abs, tag = 'smem constant byte address 0x4 - core index']
  #allocation1 [shape = 'u32[144,128]{1,0:T(1,128)}', space=vmem, size = 0x12000, scoped, tag = 'internal scratch']
  %s0 = inlined_call_operand.vmem [shape: f32[5,64,11], index: 0, kind: input, shape index: {}]
  %s1 = inlined_call_operand.vmem [shape: bf16[11,1024], index: 1, kind: input, shape index: {}]
  %s2 = inlined_call_operand.hbm [shape: bf16[256,1024], index: 2, kind: input, shape index: {}]
  %s3 = inlined_call_operand.vmem [shape: f32[1,1024], index: 3, kind: input, shape index: {}]
  %s4 = inlined_call_operand.hbm [shape: bf16[384,512], index: 4, kind: input, shape index: {}]
  %s5 = inlined_call_operand.vmem [shape: f32[1,512], index: 5, kind: input, shape index: {}]
  %s6 = inlined_call_operand.hbm [shape: f32[64,128], index: 6, kind: output, shape index: {}]
  %s7 = sld [smem:[#allocation0]]
  $region103: #{tpu_custom_call.1} parent=0
    _
  %s9 = ssub.s32 1, %s7
  %s10 = scalar_select 0, %s9, %s7
  $region1: #{tpu_custom_call.1} parent=0
    #allocation2 [shape = 'u8[163840]{0}', space=vmem, size = 0x28000, scoped, tag = 'input window, operand 0']
    #allocation3 [shape = 'u8[524288]{0}', space=vmem, size = 0x80000, scoped, tag = 'input window, operand 2, single buffered']
    #allocation4 [shape = 's32[2]{0}', space=sflag, size = 0x8, scoped, tag = 'scoped memory for tpu_custom_call.1']
    #allocation5 [shape = 's32[2]{0}', space=sflag, size = 0x8, scoped, tag = 'scoped memory for tpu_custom_call.1']
    #allocation6 [shape = 'u8[393216]{0}', space=vmem, size = 0x60000, scoped, tag = 'input window, operand 4, single buffered']
    #allocation7 [shape = 's32[1]{0}', space=sflag, size = 0x4, scoped, tag = 'scoped memory for tpu_custom_call.1']
    #allocation8 [shape = 'u8[32768]{0}', space=vmem, size = 0x8000, scoped, tag = 'output window, operand 0']
    %11 = vsyncpa [#allocation4], 0
    %12 = vsyncpa [#allocation7], 0
    %13 = vsyncpa [#allocation5], 0
    %s14 = scalar_lea.sflag [#allocation5], 1
    %15 = vsyncpa %s14, 0
    loop: start=0, step=1, limit=4
    $region2: #{tpu_custom_call.1} parent=1 // loop_pre_header
      _
    $region3: #{tpu_custom_call.1} parent=1 // loop_header
      %s17 = sphi 0, %s21
      %p18 = scmp.ge.s32.totalorder %s17, 4
      %s27 = sphi 0, %s29
      %s30 = sphi 0, %s27
      %s31 = sphi 0, %s30
      %s47 = sphi 0, %s31
      %s51 = sphi 0, %s51
      %s53 = sphi 0, %s51
      %s54 = sphi 0, %s53
      %s68 = sphi 0, %s54
      %s72 = sphi 0, %s72
      %s74 = sphi 0, %s72
      %s75 = sphi 0, %s74
      %s89 = sphi 0, %s75
      %s93 = sphi 0, %s93
      %s95 = sphi 0, %s93
      %s96 = sphi 0, %s95
      %s110 = sphi 0, %s96
      %s114 = sphi 0, %s114
      %s116 = sphi 0, %s114
      %s117 = sphi 0, %s116
      %s131 = sphi 0, %s117
      %s135 = sphi 0, %s135
      %s137 = sphi 0, %s135
      %s138 = sphi 0, %s137
      %s152 = sphi 0, %s138
      %s158 = sphi 0, %s160
      %s161 = sphi 0, %s158
      %s162 = sphi 0, %s161
      %s178 = sphi 0, %s162
    $region4: #{tpu_custom_call.1} parent=1 // loop_header_branch
      %20 = sbr.rel (%p18) target = $region8
    $region5: #{tpu_custom_call.1} parent=1 // loop_body
      %s22 = ssub.s32 %s17, 1
      %s23 = ssub.s32 %s17, 2
      %s24 = sadd.s32 %s17, 1
      %s25 = ssub.s32 %s17, %s24
      %p26 = scmp.eq.s32.totalorder %s25, 0
      %s28 = sadd.s32 %s27, 1
      %s29 = scalar_select %p26, %s27, %s28
      %p32 = pneg %p26
      %p33 = scmp.eq.s32.totalorder %s17, 1
      %p34 = por %p32, %p33
      %p35 = scmp.ne.s32.totalorder %s27, %s30
      %p36 = scmp.eq.s32.totalorder %s17, 0
      %p37 = por %p35, %p36
      %p38 = scmp.ne.s32.totalorder %s27, %s30
      %p39 = scmp.eq.s32.totalorder %s22, 1
      %p40 = por %p38, %p39
      %p41 = scmp.ne.s32.totalorder %s30, %s31
      %p42 = scmp.eq.s32.totalorder %s22, 0
      %p43 = por %p41, %p42
      %p44 = scmp.ne.s32.totalorder %s30, %s31
      %p45 = scmp.eq.s32.totalorder %s23, 1
      %p46 = por %p44, %p45
      %p48 = scmp.ne.s32.totalorder %s31, %s47
      %p49 = scmp.eq.s32.totalorder %s23, 0
      %p50 = por %p48, %p49
      %s52 = sadd.s32 %s51, 1
      %p55 = scmp.eq.s32.totalorder %s17, 1
      %p56 = scmp.ne.s32.totalorder %s51, %s53
      %p57 = scmp.eq.s32.totalorder %s17, 0
      %p58 = por %p56, %p57
      %p59 = scmp.ne.s32.totalorder %s51, %s53
      %p60 = scmp.eq.s32.totalorder %s22, 1
      %p61 = por %p59, %p60
      %p62 = scmp.ne.s32.totalorder %s53, %s54
      %p63 = scmp.eq.s32.totalorder %s22, 0
      %p64 = por %p62, %p63
      %p65 = scmp.ne.s32.totalorder %s53, %s54
      %p66 = scmp.eq.s32.totalorder %s23, 1
      %p67 = por %p65, %p66
      %p69 = scmp.ne.s32.totalorder %s54, %s68
      %p70 = scmp.eq.s32.totalorder %s23, 0
      %p71 = por %p69, %p70
      %s73 = sadd.s32 %s72, 1
      %p76 = scmp.eq.s32.totalorder %s17, 1
      %p77 = scmp.ne.s32.totalorder %s72, %s74
      %p78 = scmp.eq.s32.totalorder %s17, 0
      %p79 = por %p77, %p78
      %p80 = scmp.ne.s32.totalorder %s72, %s74
      %p81 = scmp.eq.s32.totalorder %s22, 1
      %p82 = por %p80, %p81
      %p83 = scmp.ne.s32.totalorder %s74, %s75
      %p84 = scmp.eq.s32.totalorder %s22, 0
      %p85 = por %p83, %p84
      %p86 = scmp.ne.s32.totalorder %s74, %s75
      %p87 = scmp.eq.s32.totalorder %s23, 1
      %p88 = por %p86, %p87
      %p90 = scmp.ne.s32.totalorder %s75, %s89
      %p91 = scmp.eq.s32.totalorder %s23, 0
      %p92 = por %p90, %p91
      %s94 = sadd.s32 %s93, 1
      %p97 = scmp.eq.s32.totalorder %s17, 1
      %p98 = scmp.ne.s32.totalorder %s93, %s95
      %p99 = scmp.eq.s32.totalorder %s17, 0
      %p100 = por %p98, %p99
      %p101 = scmp.ne.s32.totalorder %s93, %s95
      %p102 = scmp.eq.s32.totalorder %s22, 1
      %p103 = por %p101, %p102
      %p104 = scmp.ne.s32.totalorder %s95, %s96
      %p105 = scmp.eq.s32.totalorder %s22, 0
      %p106 = por %p104, %p105
      %p107 = scmp.ne.s32.totalorder %s95, %s96
      %p108 = scmp.eq.s32.totalorder %s23, 1
      %p109 = por %p107, %p108
      %p111 = scmp.ne.s32.totalorder %s96, %s110
      %p112 = scmp.eq.s32.totalorder %s23, 0
      %p113 = por %p111, %p112
      %s115 = sadd.s32 %s114, 1
      %p118 = scmp.eq.s32.totalorder %s17, 1
      %p119 = scmp.ne.s32.totalorder %s114, %s116
      %p120 = scmp.eq.s32.totalorder %s17, 0
      %p121 = por %p119, %p120
      %p122 = scmp.ne.s32.totalorder %s114, %s116
      %p123 = scmp.eq.s32.totalorder %s22, 1
      %p124 = por %p122, %p123
      %p125 = scmp.ne.s32.totalorder %s116, %s117
      %p126 = scmp.eq.s32.totalorder %s22, 0
      %p127 = por %p125, %p126
      %p128 = scmp.ne.s32.totalorder %s116, %s117
      %p129 = scmp.eq.s32.totalorder %s23, 1
      %p130 = por %p128, %p129
      %p132 = scmp.ne.s32.totalorder %s117, %s131
      %p133 = scmp.eq.s32.totalorder %s23, 0
      %p134 = por %p132, %p133
      %s136 = sadd.s32 %s135, 1
      %p139 = scmp.eq.s32.totalorder %s17, 1
      %p140 = scmp.ne.s32.totalorder %s135, %s137
      %p141 = scmp.eq.s32.totalorder %s17, 0
      %p142 = por %p140, %p141
      %p143 = scmp.ne.s32.totalorder %s135, %s137
      %p144 = scmp.eq.s32.totalorder %s22, 1
      %p145 = por %p143, %p144
      %p146 = scmp.ne.s32.totalorder %s137, %s138
      %p147 = scmp.eq.s32.totalorder %s22, 0
      %p148 = por %p146, %p147
      %p149 = scmp.ne.s32.totalorder %s137, %s138
      %p150 = scmp.eq.s32.totalorder %s23, 1
      %p151 = por %p149, %p150
      %p153 = scmp.ne.s32.totalorder %s138, %s152
      %p154 = scmp.eq.s32.totalorder %s23, 0
      %p155 = por %p153, %p154
      %s156 = ssub.s32 %s17, %s24
      %p157 = scmp.eq.s32.totalorder %s156, 0
      %s159 = sadd.s32 %s158, 1
      %s160 = scalar_select %p157, %s158, %s159
      %p163 = pneg %p157
      %p164 = scmp.eq.s32.totalorder %s17, 1
      %p165 = por %p163, %p164
      %p166 = scmp.ne.s32.totalorder %s158, %s161
      %p167 = scmp.eq.s32.totalorder %s17, 0
      %p168 = por %p166, %p167
      %p169 = scmp.ne.s32.totalorder %s158, %s161
      %p170 = scmp.eq.s32.totalorder %s22, 1
      %p171 = por %p169, %p170
      %p172 = scmp.ne.s32.totalorder %s161, %s162
      %p173 = scmp.eq.s32.totalorder %s22, 0
      %p174 = por %p172, %p173
      %p175 = scmp.ne.s32.totalorder %s161, %s162
      %p176 = scmp.eq.s32.totalorder %s23, 1
      %p177 = por %p175, %p176
      %p179 = scmp.ne.s32.totalorder %s162, %s178
      %p180 = scmp.eq.s32.totalorder %s23, 0
      %p181 = por %p179, %p180
      %p182 = scmp.le.s32.totalorder 1, %s17
      %p183 = scmp.lt.s32.totalorder %s17, 3
      %p184 = pnand %p182, %p183
      %p185 = pneg %p184
      // Predicated region
      $region9: #{tpu_custom_call.1} parent=5 // pred_check
        _
      $region10: #{tpu_custom_call.1} parent=5 // pred_check_branch
        %187 = sbr.rel (%p184) target = $region12
      $region11: #{tpu_custom_call.1} parent=5 // pred_region
        %s188 = ssub.s32 %s17, 1
        // Predicated region
        $region13: #{tpu_custom_call.1} parent=11 // pred_check
          %p189 = pneg %p64
        $region14: #{tpu_custom_call.1} parent=11 // pred_check_branch
          %191 = sbr.rel (%p189) target = $region16
        $region15: #{tpu_custom_call.1} parent=11 // pred_region
          _
        $region16: #{tpu_custom_call.1} parent=11 // pred_fallthru
          _
        // Predicated region
        $region17: #{tpu_custom_call.1} parent=11 // pred_check
          %p192 = pneg %p85
        $region18: #{tpu_custom_call.1} parent=11 // pred_check_branch
          %194 = sbr.rel (%p192) target = $region20
        $region19: #{tpu_custom_call.1} parent=11 // pred_region
          %s196 = ssub.s32 16384, 16384
          %197 = vsyncadd [#allocation4], %s196
          %s198 = sshll.u32 [#allocation3], 4
          %s199 = int_to_ptr.vmem [resolvable:$true] %s198
          %204 = dma.hbm_to_vmem [thread:$0]  %s2, 16384, %s199, [#allocation4], 512, 512, 32
        $region20: #{tpu_custom_call.1} parent=11 // pred_fallthru
          _
        // Predicated region
        $region21: #{tpu_custom_call.1} parent=11 // pred_check
          %p205 = pneg %p106
        $region22: #{tpu_custom_call.1} parent=11 // pred_check_branch
          %207 = sbr.rel (%p205) target = $region24
        $region23: #{tpu_custom_call.1} parent=11 // pred_region
          _
        $region24: #{tpu_custom_call.1} parent=11 // pred_fallthru
          _
        // Predicated region
        $region25: #{tpu_custom_call.1} parent=11 // pred_check
          %p208 = pneg %p127
        $region26: #{tpu_custom_call.1} parent=11 // pred_check_branch
          %210 = sbr.rel (%p208) target = $region28
        $region27: #{tpu_custom_call.1} parent=11 // pred_region
          %s212 = ssub.s32 12288, 12288
          %213 = vsyncadd [#allocation7], %s212
          %s214 = sshll.u32 [#allocation6], 4
          %s215 = int_to_ptr.vmem [resolvable:$true] %s214
          %220 = dma.hbm_to_vmem [thread:$0]  %s4, 12288, %s215, [#allocation7], 256, 256, 16
        $region28: #{tpu_custom_call.1} parent=11 // pred_fallthru
          _
        // Predicated region
        $region29: #{tpu_custom_call.1} parent=11 // pred_check
          %p221 = pneg %p148
        $region30: #{tpu_custom_call.1} parent=11 // pred_check_branch
          %223 = sbr.rel (%p221) target = $region32
        $region31: #{tpu_custom_call.1} parent=11 // pred_region
          _
        $region32: #{tpu_custom_call.1} parent=11 // pred_fallthru
          _
      $region12: #{tpu_custom_call.1} parent=5 // pred_fallthru
        _
      %p224 = scmp.lt.s32.totalorder %s17, 2
      // Predicated region
      $region33: #{tpu_custom_call.1} parent=5 // pred_check
        %p225 = pneg %p224
      $region34: #{tpu_custom_call.1} parent=5 // pred_check_branch
        %227 = sbr.rel (%p225) target = $region36
      $region35: #{tpu_custom_call.1} parent=5 // pred_region
        // Predicated region
        $region37: #{tpu_custom_call.1} parent=35 // pred_check
          %p228 = pneg %p37
        $region38: #{tpu_custom_call.1} parent=35 // pred_check_branch
          %230 = sbr.rel (%p228) target = $region40
        $region39: #{tpu_custom_call.1} parent=35 // pred_region
          %s231 = sand.u32 %s27, 1
          %s232 = sand.u32 %s27, 1
          %s233 = smul.addr %s232, 160
          %s234 = scalar_lea.vmem [#allocation2], %s233
          %s235 = smul.u32 4, %s17
          %s236 = smul.addr %s235, 8
          %s237 = scalar_lea.vmem %s0, %s236
          // Predicated region
          $region41: #{tpu_custom_call.1} parent=39 // pred_check
            _
          $region42: #{tpu_custom_call.1} parent=39 // pred_check_branch
            %239 = sbr.rel (0) target = $region44
          $region43: #{tpu_custom_call.1} parent=39 // pred_region
            // Predicated region
            $region45: #{tpu_custom_call.1} parent=43 // pred_check
              _
            $region46: #{tpu_custom_call.1} parent=43 // pred_check_branch
              %241 = sbr.rel (0) target = $region48
            $region47: #{tpu_custom_call.1} parent=43 // pred_region
              // Predicated region
              $region60: #{tpu_custom_call.1} parent=47 // pred_check
                _
              $region61: #{tpu_custom_call.1} parent=47 // pred_check_branch
                %295 = sbr.rel (0) target = $region63
              $region62: #{tpu_custom_call.1} parent=47 // pred_region
                loop: start=0, step=1, limit=1
                $region64: #{tpu_custom_call.1} parent=62 // loop_pre_header
                  _
                $region65: #{tpu_custom_call.1} parent=62 // loop_header
                  %s297 = sphi 0, %s301
                  %p298 = scmp.ge.s32.totalorder %s297, 1
                  %s302 = sphi %s237, %s237
                  %s303 = sphi %s234, %s234
                $region66: #{tpu_custom_call.1} parent=62 // loop_header_branch
                  %300 = sbr.rel (%p298) target = $region70
                $region67: #{tpu_custom_call.1} parent=62 // loop_body
                  %v304 = vld [vmem:[%s302] sm:$0xff]
                  %305 = vst [vmem:[%s303] sm:$0xff] %v304
                  %v306 = vld [vmem:[%s302 + $0x8] sm:$0xff]
                  %307 = vst [vmem:[%s303 + $0x8] sm:$0xff] %v306
                  %v308 = vld [vmem:[%s302 + $0x10] sm:$0xff]
                  %309 = vst [vmem:[%s303 + $0x10] sm:$0xff] %v308
                  %v310 = vld [vmem:[%s302 + $0x18] sm:$0xff]
                  %311 = vst [vmem:[%s303 + $0x18] sm:$0xff] %v310
                  %v312 = vld [vmem:[%s302 + $0x40] sm:$0xff]
                  %313 = vst [vmem:[%s303 + $0x20] sm:$0xff] %v312
                  %v314 = vld [vmem:[%s302 + $0x48] sm:$0xff]
                  %315 = vst [vmem:[%s303 + $0x28] sm:$0xff] %v314
                  %v316 = vld [vmem:[%s302 + $0x50] sm:$0xff]
                  %317 = vst [vmem:[%s303 + $0x30] sm:$0xff] %v316
                  %v318 = vld [vmem:[%s302 + $0x58] sm:$0xff]
                  %319 = vst [vmem:[%s303 + $0x38] sm:$0xff] %v318
                  %v320 = vld [vmem:[%s302 + $0x80] sm:$0xff]
                  %321 = vst [vmem:[%s303 + $0x40] sm:$0xff] %v320
                  %v322 = vld [vmem:[%s302 + $0x88] sm:$0xff]
                  %323 = vst [vmem:[%s303 + $0x48] sm:$0xff] %v322
                  %v324 = vld [vmem:[%s302 + $0x90] sm:$0xff]
                  %325 = vst [vmem:[%s303 + $0x50] sm:$0xff] %v324
                  %v326 = vld [vmem:[%s302 + $0x98] sm:$0xff]
                  %327 = vst [vmem:[%s303 + $0x58] sm:$0xff] %v326
                  %v328 = vld [vmem:[%s302 + $0xc0] sm:$0xff]
                  %329 = vst [vmem:[%s303 + $0x60] sm:$0xff] %v328
                  %v330 = vld [vmem:[%s302 + $0xc8] sm:$0xff]
                  %331 = vst [vmem:[%s303 + $0x68] sm:$0xff] %v330
                  %v332 = vld [vmem:[%s302 + $0xd0] sm:$0xff]
                  %333 = vst [vmem:[%s303 + $0x70] sm:$0xff] %v332
                  %v334 = vld [vmem:[%s302 + $0xd8] sm:$0xff]
                  %335 = vst [vmem:[%s303 + $0x78] sm:$0xff] %v334
                  %v336 = vld [vmem:[%s302 + $0x100] sm:$0xff]
                  %337 = vst [vmem:[%s303 + $0x80] sm:$0xff] %v336
                  %v338 = vld [vmem:[%s302 + $0x108] sm:$0xff]
                  %339 = vst [vmem:[%s303 + $0x88] sm:$0xff] %v338
                  %v340 = vld [vmem:[%s302 + $0x110] sm:$0xff]
                  %341 = vst [vmem:[%s303 + $0x90] sm:$0xff] %v340
                  %v342 = vld [vmem:[%s302 + $0x118] sm:$0xff]
                  %343 = vst [vmem:[%s303 + $0x98] sm:$0xff] %v342
                $region68: #{tpu_custom_call.1} parent=62 // loop_footer
                  %s301 = sadd.s32 1, %s297
                $region69: #{tpu_custom_call.1} parent=62 // loop_footer_branch
                  %296 = sbr.rel target = $region65
                $region70: #{tpu_custom_call.1} parent=62 // loop_exit
                  _
              $region63: #{tpu_custom_call.1} parent=47 // pred_fallthru
                _
              // Predicated region
              $region71: #{tpu_custom_call.1} parent=47 // pred_check
                _
              $region72: #{tpu_custom_call.1} parent=47 // pred_check_branch
                %345 = sbr.rel target = $region74
              $region73: #{tpu_custom_call.1} parent=47 // pred_region
                _
              $region74: #{tpu_custom_call.1} parent=47 // pred_fallthru
                _
            $region48: #{tpu_custom_call.1} parent=43 // pred_fallthru
              _
            // Predicated region
            $region49: #{tpu_custom_call.1} parent=43 // pred_check
              _
            $region50: #{tpu_custom_call.1} parent=43 // pred_check_branch
              %243 = sbr.rel target = $region52
            $region51: #{tpu_custom_call.1} parent=43 // pred_region
              %s245 = ssub.s32 256, 1
              loop: start=0, step=1, limit=1
              $region53: #{tpu_custom_call.1} parent=51 // loop_pre_header
                _
              $region54: #{tpu_custom_call.1} parent=51 // loop_header
                %s247 = sphi 0, %s251
                %p248 = scmp.ge.s32.totalorder %s247, 1
                %s252 = sphi %s237, %s237
                %s253 = sphi %s234, %s234
              $region55: #{tpu_custom_call.1} parent=51 // loop_header_branch
                %250 = sbr.rel (%p248) target = $region59
              $region56: #{tpu_custom_call.1} parent=51 // loop_body
                %v254 = vld [vmem:[%s252] sm:%s245]
                %255 = vst [vmem:[%s253] sm:%s245] %v254
                %v256 = vld [vmem:[%s252 + $0x8] sm:%s245]
                %257 = vst [vmem:[%s253 + $0x8] sm:%s245] %v256
                %v258 = vld [vmem:[%s252 + $0x10] sm:%s245]
                %259 = vst [vmem:[%s253 + $0x10] sm:%s245] %v258
                %v260 = vld [vmem:[%s252 + $0x18] sm:%s245]
                %261 = vst [vmem:[%s253 + $0x18] sm:%s245] %v260
                %v262 = vld [vmem:[%s252 + $0x40] sm:%s245]
                %263 = vst [vmem:[%s253 + $0x20] sm:%s245] %v262
                %v264 = vld [vmem:[%s252 + $0x48] sm:%s245]
                %265 = vst [vmem:[%s253 + $0x28] sm:%s245] %v264
                %v266 = vld [vmem:[%s252 + $0x50] sm:%s245]
                %267 = vst [vmem:[%s253 + $0x30] sm:%s245] %v266
                %v268 = vld [vmem:[%s252 + $0x58] sm:%s245]
                %269 = vst [vmem:[%s253 + $0x38] sm:%s245] %v268
                %v270 = vld [vmem:[%s252 + $0x80] sm:%s245]
                %271 = vst [vmem:[%s253 + $0x40] sm:%s245] %v270
                %v272 = vld [vmem:[%s252 + $0x88] sm:%s245]
                %273 = vst [vmem:[%s253 + $0x48] sm:%s245] %v272
                %v274 = vld [vmem:[%s252 + $0x90] sm:%s245]
                %275 = vst [vmem:[%s253 + $0x50] sm:%s245] %v274
                %v276 = vld [vmem:[%s252 + $0x98] sm:%s245]
                %277 = vst [vmem:[%s253 + $0x58] sm:%s245] %v276
                %v278 = vld [vmem:[%s252 + $0xc0] sm:%s245]
                %279 = vst [vmem:[%s253 + $0x60] sm:%s245] %v278
                %v280 = vld [vmem:[%s252 + $0xc8] sm:%s245]
                %281 = vst [vmem:[%s253 + $0x68] sm:%s245] %v280
                %v282 = vld [vmem:[%s252 + $0xd0] sm:%s245]
                %283 = vst [vmem:[%s253 + $0x70] sm:%s245] %v282
                %v284 = vld [vmem:[%s252 + $0xd8] sm:%s245]
                %285 = vst [vmem:[%s253 + $0x78] sm:%s245] %v284
                %v286 = vld [vmem:[%s252 + $0x100] sm:%s245]
                %287 = vst [vmem:[%s253 + $0x80] sm:%s245] %v286
                %v288 = vld [vmem:[%s252 + $0x108] sm:%s245]
                %289 = vst [vmem:[%s253 + $0x88] sm:%s245] %v288
                %v290 = vld [vmem:[%s252 + $0x110] sm:%s245]
                %291 = vst [vmem:[%s253 + $0x90] sm:%s245] %v290
                %v292 = vld [vmem:[%s252 + $0x118] sm:%s245]
                %293 = vst [vmem:[%s253 + $0x98] sm:%s245] %v292
              $region57: #{tpu_custom_call.1} parent=51 // loop_footer
                %s251 = sadd.s32 1, %s247
              $region58: #{tpu_custom_call.1} parent=51 // loop_footer_branch
                %246 = sbr.rel target = $region54
              $region59: #{tpu_custom_call.1} parent=51 // loop_exit
                _
            $region52: #{tpu_custom_call.1} parent=43 // pred_fallthru
              _
          $region44: #{tpu_custom_call.1} parent=39 // pred_fallthru
            _
          %346 = vnop
        $region40: #{tpu_custom_call.1} parent=35 // pred_fallthru
          _
      $region36: #{tpu_custom_call.1} parent=5 // pred_fallthru
        _
      %p347 = scmp.le.s32.totalorder 1, %s17
      %p348 = scmp.lt.s32.totalorder %s17, 3
      %p349 = pnand %p347, %p348
      %p350 = pneg %p349
      // Predicated region
      $region75: #{tpu_custom_call.1} parent=5 // pred_check
        _
      $region76: #{tpu_custom_call.1} parent=5 // pred_check_branch
        %352 = sbr.rel (%p349) target = $region78
      $region77: #{tpu_custom_call.1} parent=5 // pred_region
        %s353 = ssub.s32 %s17, 1
        %s354 = sand.u32 %s30, 1
        %s355 = sand.u32 %s30, 1
        %s356 = smul.addr %s355, 160
        %s357 = scalar_lea.vmem [#allocation2], %s356
        // Predicated region
        $region79: #{tpu_custom_call.1} parent=77 // pred_check
          %p358 = pneg %p43
        $region80: #{tpu_custom_call.1} parent=77 // pred_check_branch
          %360 = sbr.rel (%p358) target = $region82
        $region81: #{tpu_custom_call.1} parent=77 // pred_region
          _
        $region82: #{tpu_custom_call.1} parent=77 // pred_fallthru
          _
        // Predicated region
        $region83: #{tpu_custom_call.1} parent=77 // pred_check
          %p361 = pneg %p85
        $region84: #{tpu_custom_call.1} parent=77 // pred_check_branch
          %363 = sbr.rel (%p361) target = $region86
        $region85: #{tpu_custom_call.1} parent=77 // pred_region
          %364 = dma.done [#allocation4], 16384
        $region86: #{tpu_custom_call.1} parent=77 // pred_fallthru
          _
        // Predicated region
        $region87: #{tpu_custom_call.1} parent=77 // pred_check
          %p365 = pneg %p127
        $region88: #{tpu_custom_call.1} parent=77 // pred_check_branch
          %367 = sbr.rel (%p365) target = $region90
        $region89: #{tpu_custom_call.1} parent=77 // pred_region
          %368 = dma.done [#allocation7], 12288
        $region90: #{tpu_custom_call.1} parent=77 // pred_fallthru
          _
        %s369 = sand.u32 %s30, 1
        %s370 = sand.u32 %s30, 1
        %s371 = smul.addr %s370, 160
        %s372 = scalar_lea.vmem [#allocation2], %s371
        %p373 = pneg %p43
        %p374 = pneg %p40
        %p375 = pneg %p64
        %p376 = pneg %p61
        %p377 = pneg %p85
        %p378 = pneg %p82
        %p379 = pneg %p106
        %p380 = pneg %p103
        %p381 = pneg %p127
        %p382 = pneg %p124
        %p383 = pneg %p148
        %p384 = pneg %p145
        %p385 = pneg %p174
        %p386 = pneg %p171
        %s387 = sand.u32 %s161, 1
        %s388 = scalar_lea.sflag [#allocation5], %s387
        %s389 = sand.u32 %s161, 1
        %s390 = smul.addr %s389, 32
        %s391 = scalar_lea.vmem [#allocation8], %s390
        %s392 = smul.u32 4, %s22
        %s393 = smul.u32 4, %s22
        %v395 = vld [vmem:[%s1] sm:$0xff]
        %v396 = vld [vmem:[%s1 + $0x8] sm:$0xff]
        %v397 = vld [vmem:[%s1 + $0x10] sm:$0xff]
        %v398 = vld [vmem:[%s1 + $0x18] sm:$0xff]
        %v399 = vld [vmem:[%s1 + $0x20] sm:$0x33]
        %v400 = vld [vmem:[%s1 + $0x28] sm:$0x33]
        %v401 = vld [vmem:[%s1 + $0x30] sm:$0x33]
        %v402 = vld [vmem:[%s1 + $0x38] sm:$0x33]
        %v403 = vld [vmem:[#allocation3] sm:$0xff]
        %v404 = vld [vmem:[#allocation3 + $0x8] sm:$0xff]
        %v405 = vld [vmem:[#allocation3 + $0x10] sm:$0xff]
        %v406 = vld [vmem:[#allocation3 + $0x18] sm:$0xff]
        %v407 = vld [vmem:[#allocation3 + $0x20] sm:$0xff]
        %v408 = vld [vmem:[#allocation3 + $0x28] sm:$0xff]
        %v409 = vld [vmem:[#allocation3 + $0x30] sm:$0xff]
        %v410 = vld [vmem:[#allocation3 + $0x38] sm:$0xff]
        %v411 = vld [vmem:[#allocation3 + $0x40] sm:$0xff]
        %v412 = vld [vmem:[#allocation3 + $0x48] sm:$0xff]
        %v413 = vld [vmem:[#allocation3 + $0x50] sm:$0xff]
        %v414 = vld [vmem:[#allocation3 + $0x58] sm:$0xff]
        %v415 = vld [vmem:[#allocation3 + $0x60] sm:$0xff]
        %v416 = vld [vmem:[#allocation3 + $0x68] sm:$0xff]
        %v417 = vld [vmem:[#allocation3 + $0x70] sm:$0xff]
        %v418 = vld [vmem:[#allocation3 + $0x78] sm:$0xff]
        %v419 = vld [vmem:[#allocation3 + $0x80] sm:$0xff]
        %v420 = vld [vmem:[#allocation3 + $0x88] sm:$0xff]
        %v421 = vld [vmem:[#allocation3 + $0x90] sm:$0xff]
        %v422 = vld [vmem:[#allocation3 + $0x98] sm:$0xff]
        %v423 = vld [vmem:[#allocation3 + $0xa0] sm:$0xff]
        %v424 = vld [vmem:[#allocation3 + $0xa8] sm:$0xff]
        %v425 = vld [vmem:[#allocation3 + $0xb0] sm:$0xff]
        %v426 = vld [vmem:[#allocation3 + $0xb8] sm:$0xff]
        %v427 = vld [vmem:[#allocation3 + $0xc0] sm:$0xff]
        %v428 = vld [vmem:[#allocation3 + $0xc8] sm:$0xff]
        %v429 = vld [vmem:[#allocation3 + $0xd0] sm:$0xff]
        %v430 = vld [vmem:[#allocation3 + $0xd8] sm:$0xff]
        %v431 = vld [vmem:[#allocation3 + $0xe0] sm:$0xff]
        %v432 = vld [vmem:[#allocation3 + $0xe8] sm:$0xff]
        %v433 = vld [vmem:[#allocation3 + $0xf0] sm:$0xff]
        %v434 = vld [vmem:[#allocation3 + $0xf8] sm:$0xff]
        %v435 = vld [vmem:[#allocation3 + $0x100] sm:$0xff]
        %v436 = vld [vmem:[#allocation3 + $0x108] sm:$0xff]
        %v437 = vld [vmem:[#allocation3 + $0x110] sm:$0xff]
        %v438 = vld [vmem:[#allocation3 + $0x118] sm:$0xff]
        %v439 = vld [vmem:[#allocation3 + $0x120] sm:$0xff]
        %v440 = vld [vmem:[#allocation3 + $0x128] sm:$0xff]
        %v441 = vld [vmem:[#allocation3 + $0x130] sm:$0xff]
        %v442 = vld [vmem:[#allocation3 + $0x138] sm:$0xff]
        %v443 = vld [vmem:[#allocation3 + $0x140] sm:$0xff]
        %v444 = vld [vmem:[#allocation3 + $0x148] sm:$0xff]
        %v445 = vld [vmem:[#allocation3 + $0x150] sm:$0xff]
        %v446 = vld [vmem:[#allocation3 + $0x158] sm:$0xff]
        %v447 = vld [vmem:[#allocation3 + $0x160] sm:$0xff]
        %v448 = vld [vmem:[#allocation3 + $0x168] sm:$0xff]
        %v449 = vld [vmem:[#allocation3 + $0x170] sm:$0xff]
        %v450 = vld [vmem:[#allocation3 + $0x178] sm:$0xff]
        %v451 = vld [vmem:[#allocation3 + $0x180] sm:$0xff]
        %v452 = vld [vmem:[#allocation3 + $0x188] sm:$0xff]
        %v453 = vld [vmem:[#allocation3 + $0x190] sm:$0xff]
        %v454 = vld [vmem:[#allocation3 + $0x198] sm:$0xff]
        %v455 = vld [vmem:[#allocation3 + $0x1a0] sm:$0xff]
        %v456 = vld [vmem:[#allocation3 + $0x1a8] sm:$0xff]
        %v457 = vld [vmem:[#allocation3 + $0x1b0] sm:$0xff]
        %v458 = vld [vmem:[#allocation3 + $0x1b8] sm:$0xff]
        %v459 = vld [vmem:[#allocation3 + $0x1c0] sm:$0xff]
        %v460 = vld [vmem:[#allocation3 + $0x1c8] sm:$0xff]
        %v461 = vld [vmem:[#allocation3 + $0x1d0] sm:$0xff]
        %v462 = vld [vmem:[#allocation3 + $0x1d8] sm:$0xff]
        %v463 = vld [vmem:[#allocation3 + $0x1e0] sm:$0xff]
        %v464 = vld [vmem:[#allocation3 + $0x1e8] sm:$0xff]
        %v465 = vld [vmem:[#allocation3 + $0x1f0] sm:$0xff]
        %v466 = vld [vmem:[#allocation3 + $0x1f8] sm:$0xff]
        %v467 = vld [vmem:[#allocation3 + $0x200] sm:$0xff]
        %v468 = vld [vmem:[#allocation3 + $0x208] sm:$0xff]
        %v469 = vld [vmem:[#allocation3 + $0x210] sm:$0xff]
        %v470 = vld [vmem:[#allocation3 + $0x218] sm:$0xff]
        %v471 = vld [vmem:[#allocation3 + $0x220] sm:$0xff]
        %v472 = vld [vmem:[#allocation3 + $0x228] sm:$0xff]
        %v473 = vld [vmem:[#allocation3 + $0x230] sm:$0xff]
        %v474 = vld [vmem:[#allocation3 + $0x238] sm:$0xff]
        %v475 = vld [vmem:[#allocation3 + $0x240] sm:$0xff]
        %v476 = vld [vmem:[#allocation3 + $0x248] sm:$0xff]
        %v477 = vld [vmem:[#allocation3 + $0x250] sm:$0xff]
        %v478 = vld [vmem:[#allocation3 + $0x258] sm:$0xff]
        %v479 = vld [vmem:[#allocation3 + $0x260] sm:$0xff]
        %v480 = vld [vmem:[#allocation3 + $0x268] sm:$0xff]
        %v481 = vld [vmem:[#allocation3 + $0x270] sm:$0xff]
        %v482 = vld [vmem:[#allocation3 + $0x278] sm:$0xff]
        %v483 = vld [vmem:[#allocation3 + $0x280] sm:$0xff]
        %v484 = vld [vmem:[#allocation3 + $0x288] sm:$0xff]
        %v485 = vld [vmem:[#allocation3 + $0x290] sm:$0xff]
        %v486 = vld [vmem:[#allocation3 + $0x298] sm:$0xff]
        %v487 = vld [vmem:[#allocation3 + $0x2a0] sm:$0xff]
        %v488 = vld [vmem:[#allocation3 + $0x2a8] sm:$0xff]
        %v489 = vld [vmem:[#allocation3 + $0x2b0] sm:$0xff]
        %v490 = vld [vmem:[#allocation3 + $0x2b8] sm:$0xff]
        %v491 = vld [vmem:[#allocation3 + $0x2c0] sm:$0xff]
        %v492 = vld [vmem:[#allocation3 + $0x2c8] sm:$0xff]
        %v493 = vld [vmem:[#allocation3 + $0x2d0] sm:$0xff]
        %v494 = vld [vmem:[#allocation3 + $0x2d8] sm:$0xff]
        %v495 = vld [vmem:[#allocation3 + $0x2e0] sm:$0xff]
        %v496 = vld [vmem:[#allocation3 + $0x2e8] sm:$0xff]
        %v497 = vld [vmem:[#allocation3 + $0x2f0] sm:$0xff]
        %v498 = vld [vmem:[#allocation3 + $0x2f8] sm:$0xff]
        %v499 = vld [vmem:[#allocation3 + $0x300] sm:$0xff]
        %v500 = vld [vmem:[#allocation3 + $0x308] sm:$0xff]
        %v501 = vld [vmem:[#allocation3 + $0x310] sm:$0xff]
        %v502 = vld [vmem:[#allocation3 + $0x318] sm:$0xff]
        %v503 = vld [vmem:[#allocation3 + $0x320] sm:$0xff]
        %v504 = vld [vmem:[#allocation3 + $0x328] sm:$0xff]
        %v505 = vld [vmem:[#allocation3 + $0x330] sm:$0xff]
        %v506 = vld [vmem:[#allocation3 + $0x338] sm:$0xff]
        %v507 = vld [vmem:[#allocation3 + $0x340] sm:$0xff]
        %v508 = vld [vmem:[#allocation3 + $0x348] sm:$0xff]
        %v509 = vld [vmem:[#allocation3 + $0x350] sm:$0xff]
        %v510 = vld [vmem:[#allocation3 + $0x358] sm:$0xff]
        %v511 = vld [vmem:[#allocation3 + $0x360] sm:$0xff]
        %v512 = vld [vmem:[#allocation3 + $0x368] sm:$0xff]
        %v513 = vld [vmem:[#allocation3 + $0x370] sm:$0xff]
        %v514 = vld [vmem:[#allocation3 + $0x378] sm:$0xff]
        %v515 = vld [vmem:[#allocation3 + $0x380] sm:$0xff]
        %v516 = vld [vmem:[#allocation3 + $0x388] sm:$0xff]
        %v517 = vld [vmem:[#allocation3 + $0x390] sm:$0xff]
        %v518 = vld [vmem:[#allocation3 + $0x398] sm:$0xff]
        %v519 = vld [vmem:[#allocation3 + $0x3a0] sm:$0xff]
        %v520 = vld [vmem:[#allocation3 + $0x3a8] sm:$0xff]
        %v521 = vld [vmem:[#allocation3 + $0x3b0] sm:$0xff]
        %v522 = vld [vmem:[#allocation3 + $0x3b8] sm:$0xff]
        %v523 = vld [vmem:[#allocation3 + $0x3c0] sm:$0xff]
        %v524 = vld [vmem:[#allocation3 + $0x3c8] sm:$0xff]
        %v525 = vld [vmem:[#allocation3 + $0x3d0] sm:$0xff]
        %v526 = vld [vmem:[#allocation3 + $0x3d8] sm:$0xff]
        %v527 = vld [vmem:[#allocation3 + $0x3e0] sm:$0xff]
        %v528 = vld [vmem:[#allocation3 + $0x3e8] sm:$0xff]
        %v529 = vld [vmem:[#allocation3 + $0x3f0] sm:$0xff]
        %v530 = vld [vmem:[#allocation3 + $0x3f8] sm:$0xff]
        %v531 = vld [vmem:[%s3] sm:$0xff]
        %v532 = vld [vmem:[#allocation6] sm:$0xff]
        %v533 = vld [vmem:[#allocation6 + $0x8] sm:$0xff]
        %v534 = vld [vmem:[#allocation6 + $0x10] sm:$0xff]
        %v535 = vld [vmem:[#allocation6 + $0x18] sm:$0xff]
        %v536 = vld [vmem:[#allocation6 + $0x20] sm:$0xff]
        %v537 = vld [vmem:[#allocation6 + $0x28] sm:$0xff]
        %v538 = vld [vmem:[#allocation6 + $0x30] sm:$0xff]
        %v539 = vld [vmem:[#allocation6 + $0x38] sm:$0xff]
        %v540 = vld [vmem:[#allocation6 + $0x40] sm:$0xff]
        %v541 = vld [vmem:[#allocation6 + $0x48] sm:$0xff]
        %v542 = vld [vmem:[#allocation6 + $0x50] sm:$0xff]
        %v543 = vld [vmem:[#allocation6 + $0x58] sm:$0xff]
        %v544 = vld [vmem:[#allocation6 + $0x60] sm:$0xff]
        %v545 = vld [vmem:[#allocation6 + $0x68] sm:$0xff]
        %v546 = vld [vmem:[#allocation6 + $0x70] sm:$0xff]
        %v547 = vld [vmem:[#allocation6 + $0x78] sm:$0xff]
        %v548 = vld [vmem:[#allocation6 + $0x80] sm:$0xff]
        %v549 = vld [vmem:[#allocation6 + $0x88] sm:$0xff]
        %v550 = vld [vmem:[#allocation6 + $0x90] sm:$0xff]
        %v551 = vld [vmem:[#allocation6 + $0x98] sm:$0xff]
        %v552 = vld [vmem:[#allocation6 + $0xa0] sm:$0xff]
        %v553 = vld [vmem:[#allocation6 + $0xa8] sm:$0xff]
        %v554 = vld [vmem:[#allocation6 + $0xb0] sm:$0xff]
        %v555 = vld [vmem:[#allocation6 + $0xb8] sm:$0xff]
        %v556 = vld [vmem:[#allocation6 + $0xc0] sm:$0xff]
        %v557 = vld [vmem:[#allocation6 + $0xc8] sm:$0xff]
        %v558 = vld [vmem:[#allocation6 + $0xd0] sm:$0xff]
        %v559 = vld [vmem:[#allocation6 + $0xd8] sm:$0xff]
        %v560 = vld [vmem:[#allocation6 + $0xe0] sm:$0xff]
        %v561 = vld [vmem:[#allocation6 + $0xe8] sm:$0xff]
        %v562 = vld [vmem:[#allocation6 + $0xf0] sm:$0xff]
        %v563 = vld [vmem:[#allocation6 + $0xf8] sm:$0xff]
        %v564 = vld [vmem:[#allocation6 + $0x100] sm:$0xff]
        %v565 = vld [vmem:[#allocation6 + $0x108] sm:$0xff]
        %v566 = vld [vmem:[#allocation6 + $0x110] sm:$0xff]
        %v567 = vld [vmem:[#allocation6 + $0x118] sm:$0xff]
        %v568 = vld [vmem:[#allocation6 + $0x120] sm:$0xff]
        %v569 = vld [vmem:[#allocation6 + $0x128] sm:$0xff]
        %v570 = vld [vmem:[#allocation6 + $0x130] sm:$0xff]
        %v571 = vld [vmem:[#allocation6 + $0x138] sm:$0xff]
        %v572 = vld [vmem:[#allocation6 + $0x140] sm:$0xff]
        %v573 = vld [vmem:[#allocation6 + $0x148] sm:$0xff]
        %v574 = vld [vmem:[#allocation6 + $0x150] sm:$0xff]
        %v575 = vld [vmem:[#allocation6 + $0x158] sm:$0xff]
        %v576 = vld [vmem:[#allocation6 + $0x160] sm:$0xff]
        %v577 = vld [vmem:[#allocation6 + $0x168] sm:$0xff]
        %v578 = vld [vmem:[#allocation6 + $0x170] sm:$0xff]
        %v579 = vld [vmem:[#allocation6 + $0x178] sm:$0xff]
        %v580 = vld [vmem:[#allocation6 + $0x180] sm:$0xff]
        %v581 = vld [vmem:[#allocation6 + $0x188] sm:$0xff]
        %v582 = vld [vmem:[#allocation6 + $0x190] sm:$0xff]
        %v583 = vld [vmem:[#allocation6 + $0x198] sm:$0xff]
        %v584 = vld [vmem:[#allocation6 + $0x1a0] sm:$0xff]
        %v585 = vld [vmem:[#allocation6 + $0x1a8] sm:$0xff]
        %v586 = vld [vmem:[#allocation6 + $0x1b0] sm:$0xff]
        %v587 = vld [vmem:[#allocation6 + $0x1b8] sm:$0xff]
        %v588 = vld [vmem:[#allocation6 + $0x1c0] sm:$0xff]
        %v589 = vld [vmem:[#allocation6 + $0x1c8] sm:$0xff]
        %v590 = vld [vmem:[#allocation6 + $0x1d0] sm:$0xff]
        %v591 = vld [vmem:[#allocation6 + $0x1d8] sm:$0xff]
        %v592 = vld [vmem:[#allocation6 + $0x1e0] sm:$0xff]
        %v593 = vld [vmem:[#allocation6 + $0x1e8] sm:$0xff]
        %v594 = vld [vmem:[#allocation6 + $0x1f0] sm:$0xff]
        %v595 = vld [vmem:[#allocation6 + $0x1f8] sm:$0xff]
        %v596 = vld [vmem:[#allocation6 + $0x200] sm:$0xff]
        %v597 = vld [vmem:[#allocation6 + $0x208] sm:$0xff]
        %v598 = vld [vmem:[#allocation6 + $0x210] sm:$0xff]
        %v599 = vld [vmem:[#allocation6 + $0x218] sm:$0xff]
        %v600 = vld [vmem:[#allocation6 + $0x220] sm:$0xff]
        %v601 = vld [vmem:[#allocation6 + $0x228] sm:$0xff]
        %v602 = vld [vmem:[#allocation6 + $0x230] sm:$0xff]
        %v603 = vld [vmem:[#allocation6 + $0x238] sm:$0xff]
        %v604 = vld [vmem:[#allocation6 + $0x240] sm:$0xff]
        %v605 = vld [vmem:[#allocation6 + $0x248] sm:$0xff]
        %v606 = vld [vmem:[#allocation6 + $0x250] sm:$0xff]
        %v607 = vld [vmem:[#allocation6 + $0x258] sm:$0xff]
        %v608 = vld [vmem:[#allocation6 + $0x260] sm:$0xff]
        %v609 = vld [vmem:[#allocation6 + $0x268] sm:$0xff]
        %v610 = vld [vmem:[#allocation6 + $0x270] sm:$0xff]
        %v611 = vld [vmem:[#allocation6 + $0x278] sm:$0xff]
        %v612 = vld [vmem:[#allocation6 + $0x280] sm:$0xff]
        %v613 = vld [vmem:[#allocation6 + $0x288] sm:$0xff]
        %v614 = vld [vmem:[#allocation6 + $0x290] sm:$0xff]
        %v615 = vld [vmem:[#allocation6 + $0x298] sm:$0xff]
        %v616 = vld [vmem:[#allocation6 + $0x2a0] sm:$0xff]
        %v617 = vld [vmem:[#allocation6 + $0x2a8] sm:$0xff]
        %v618 = vld [vmem:[#allocation6 + $0x2b0] sm:$0xff]
        %v619 = vld [vmem:[#allocation6 + $0x2b8] sm:$0xff]
        %v620 = vld [vmem:[#allocation6 + $0x2c0] sm:$0xff]
        %v621 = vld [vmem:[#allocation6 + $0x2c8] sm:$0xff]
        %v622 = vld [vmem:[#allocation6 + $0x2d0] sm:$0xff]
        %v623 = vld [vmem:[#allocation6 + $0x2d8] sm:$0xff]
        %v624 = vld [vmem:[#allocation6 + $0x2e0] sm:$0xff]
        %v625 = vld [vmem:[#allocation6 + $0x2e8] sm:$0xff]
        %v626 = vld [vmem:[#allocation6 + $0x2f0] sm:$0xff]
        %v627 = vld [vmem:[#allocation6 + $0x2f8] sm:$0xff]
        %v628 = vld [vmem:[%s5] sm:$0xf]
        %v629 = vld [vmem:[%s357] sm:$0xff]
        %v630 = vld [vmem:[%s357 + $0x8] sm:$0xff]
        %v631 = vld [vmem:[%s357 + $0x10] sm:$0xff]
        %v632 = vld [vmem:[%s357 + $0x18] sm:$0xff]
        %v633 = vpack.c.bf16 %v630, %v629
        %v634 = vpack.c.bf16 %v632, %v631
        %v636 = vlaneseq
        %v637 = vshrl.u32 %v636, 7
        %v638 = vsub.s32 0, %v637
        %v639 = vrot.slane %v531, %v638
        %v640 = vlaneseq
        %v641 = vshrl.u32 %v640, 7
        %v642 = vsub.s32 1, %v641
        %v643 = vrot.slane %v531, %v642
        %v644 = vlaneseq
        %v645 = vshrl.u32 %v644, 7
        %v646 = vsub.s32 2, %v645
        %v647 = vrot.slane %v531, %v646
        %v648 = vlaneseq
        %v649 = vshrl.u32 %v648, 7
        %v650 = vsub.s32 3, %v649
        %v651 = vrot.slane %v531, %v650
        %v652 = vlaneseq
        %v653 = vshrl.u32 %v652, 7
        %v654 = vsub.s32 4, %v653
        %v655 = vrot.slane %v531, %v654
        %v656 = vlaneseq
        %v657 = vshrl.u32 %v656, 7
        %v658 = vsub.s32 5, %v657
        %v659 = vrot.slane %v531, %v658
        %v660 = vlaneseq
        %v661 = vshrl.u32 %v660, 7
        %v662 = vsub.s32 6, %v661
        %v663 = vrot.slane %v531, %v662
        %v664 = vlaneseq
        %v665 = vshrl.u32 %v664, 7
        %v666 = vsub.s32 7, %v665
        %v667 = vrot.slane %v531, %v666
        %v684 = vunpack.c.l.b16 %v395
        %v685 = vunpack.c.h.b16 %v395
        %v686 = vunpack.c.l.b16 %v396
        %v687 = vunpack.c.h.b16 %v396
        %v688 = vunpack.c.l.b16 %v397
        %v689 = vunpack.c.h.b16 %v397
        %v690 = vunpack.c.l.b16 %v398
        %v691 = vunpack.c.h.b16 %v398
        %v692 = vunpack.c.l.b16 %v399
        %v693 = vunpack.c.h.b16 %v399
        %v694 = vunpack.c.l.b16 %v400
        %v695 = vunpack.c.h.b16 %v400
        %v696 = vunpack.c.l.b16 %v401
        %v697 = vunpack.c.h.b16 %v401
        %v698 = vunpack.c.l.b16 %v402
        %v699 = vunpack.c.h.b16 %v402
        %v700 = vpack.c.b16 %v692, %v684
        %v701 = vpack.c.b16 %v693, %v685
        %v702 = vpack.c.b16 %v694, %v686
        %v703 = vpack.c.b16 %v695, %v687
        %v704 = vpack.c.b16 %v696, %v688
        %v705 = vpack.c.b16 %v697, %v689
        %v706 = vpack.c.b16 %v698, %v690
        %v707 = vpack.c.b16 %v699, %v691
        %vm708 = vcmask 89088
        %v710 = vsel %vm708, %v633, 0
        %v713 = vsel %vm708, %v634, 0
        %vm715 = vcmask 1044480
        %vm716 = vcmask 1045504
        %v717 = vsel %vm715, 4294967295, 65535
        %v718 = vsel %vm716, %v717, 0
        %v720 = vand.u32 %v700, %v718
        %v723 = vand.u32 %v701, %v718
        %v726 = vand.u32 %v702, %v718
        %v729 = vand.u32 %v703, %v718
        %v732 = vand.u32 %v704, %v718
        %v735 = vand.u32 %v705, %v718
        %v738 = vand.u32 %v706, %v718
        %v741 = vand.u32 %v707, %v718
        %743 = vmatprep.subr.bf16.mxu0 0
        %744 = vmatpush1.bf16.msra.mxu0 0
        %745 = vmatprep.subr.bf16.mxu0 0
        %746 = vmatpush1.bf16.msra.mxu0 0
        %747 = vmatprep.subr.bf16.mxu0 0
        %748 = vmatpush1.bf16.msra.mxu0 0
        %749 = vmatprep.subr.bf16.mxu0 0
        %750 = vmatpush1.bf16.msra.mxu0 0
        %751 = vmatprep.subr.bf16.mxu0 0
        %752 = vmatpush1.bf16.msra.mxu0 0
        %753 = vmatprep.subr.bf16.mxu0 0
        %754 = vmatpush1.bf16.msra.mxu0 0
        %755 = vmatprep.subr.bf16.mxu0 0
        %756 = vmatpush1.bf16.msra.mxu0 0
        %757 = vmatprep.subr.bf16.mxu0 %v723
        %758 = vmatpush1.bf16.msra.mxu0 %v720
        %759 = vmatprep.subr.bf16.mxu0 0
        %760 = vmatpush2.bf16.msra.mxu0 0
        %761 = vmatprep.subr.bf16.mxu0 0
        %762 = vmatpush2.bf16.msra.mxu0 0
        %763 = vmatprep.subr.bf16.mxu0 0
        %764 = vmatpush2.bf16.msra.mxu0 0
        %765 = vmatprep.subr.bf16.mxu0 0
        %766 = vmatpush2.bf16.msra.mxu0 0
        %767 = vmatprep.subr.bf16.mxu0 0
        %768 = vmatpush2.bf16.msra.mxu0 0
        %769 = vmatprep.subr.bf16.mxu0 0
        %770 = vmatpush2.bf16.msra.mxu0 0
        %771 = vmatprep.subr.bf16.mxu0 0
        %772 = vmatpush2.bf16.msra.mxu0 0
        %773 = vmatprep.subr.bf16.mxu0 0
        %774 = vmatpush2.bf16.msra.mxu0 0
        %775 = vmatprep.mubr.bf16.mxu0 0
        %776 = vmatmul.mubr.bf16.gmra.mxu0 %v710
        %v777 = vpop.f32.mrf.mxu0
        %v778 = vadd.f32 %v639, %v777
        %v779 = vpop.f32.mrf.mxu0
        %v780 = vadd.f32 %v643, %v779
        %v781 = vpop.f32.mrf.mxu0
        %v782 = vadd.f32 %v639, %v781
        %v783 = vpop.f32.mrf.mxu0
        %v784 = vadd.f32 %v643, %v783
        %785 = vmatprep.mubr.bf16.mxu0 0
        %786 = vmatmul.mubr.bf16.gmra.mxu0 %v713
        %v787 = vpop.f32.mrf.mxu0
        %v788 = vadd.f32 %v639, %v787
        %v789 = vpop.f32.mrf.mxu0
        %v790 = vadd.f32 %v643, %v789
        %v791 = vpop.f32.mrf.mxu0
        %v792 = vadd.f32 %v639, %v791
        %v793 = vpop.f32.mrf.mxu0
        %v794 = vadd.f32 %v643, %v793
        %795 = vdwg.mxu0
        %796 = vmatprep.subr.bf16.mxu0 0
        %797 = vmatpush1.bf16.msra.mxu0 0
        %798 = vmatprep.subr.bf16.mxu0 0
        %799 = vmatpush1.bf16.msra.mxu0 0
        %800 = vmatprep.subr.bf16.mxu0 0
        %801 = vmatpush1.bf16.msra.mxu0 0
        %802 = vmatprep.subr.bf16.mxu0 0
        %803 = vmatpush1.bf16.msra.mxu0 0
        %804 = vmatprep.subr.bf16.mxu0 0
        %805 = vmatpush1.bf16.msra.mxu0 0
        %806 = vmatprep.subr.bf16.mxu0 0
        %807 = vmatpush1.bf16.msra.mxu0 0
        %808 = vmatprep.subr.bf16.mxu0 0
        %809 = vmatpush1.bf16.msra.mxu0 0
        %810 = vmatprep.subr.bf16.mxu0 %v729
        %811 = vmatpush1.bf16.msra.mxu0 %v726
        %812 = vmatprep.subr.bf16.mxu0 0
        %813 = vmatpush2.bf16.msra.mxu0 0
        %814 = vmatprep.subr.bf16.mxu0 0
        %815 = vmatpush2.bf16.msra.mxu0 0
        %816 = vmatprep.subr.bf16.mxu0 0
        %817 = vmatpush2.bf16.msra.mxu0 0
        %818 = vmatprep.subr.bf16.mxu0 0
        %819 = vmatpush2.bf16.msra.mxu0 0
        %820 = vmatprep.subr.bf16.mxu0 0
        %821 = vmatpush2.bf16.msra.mxu0 0
        %822 = vmatprep.subr.bf16.mxu0 0
        %823 = vmatpush2.bf16.msra.mxu0 0
        %824 = vmatprep.subr.bf16.mxu0 0
        %825 = vmatpush2.bf16.msra.mxu0 0
        %826 = vmatprep.subr.bf16.mxu0 0
        %827 = vmatpush2.bf16.msra.mxu0 0
        %828 = vmatprep.mubr.bf16.mxu0 0
        %829 = vmatmul.mubr.bf16.gmra.mxu0 %v710
        %v830 = vpop.f32.mrf.mxu0
        %v831 = vadd.f32 %v647, %v830
        %v832 = vpop.f32.mrf.mxu0
        %v833 = vadd.f32 %v651, %v832
        %v834 = vpop.f32.mrf.mxu0
        %v835 = vadd.f32 %v647, %v834
        %v836 = vpop.f32.mrf.mxu0
        %v837 = vadd.f32 %v651, %v836
        %838 = vmatprep.mubr.bf16.mxu0 0
        %839 = vmatmul.mubr.bf16.gmra.mxu0 %v713
        %v840 = vpop.f32.mrf.mxu0
        %v841 = vadd.f32 %v647, %v840
        %v842 = vpop.f32.mrf.mxu0
        %v843 = vadd.f32 %v651, %v842
        %v844 = vpop.f32.mrf.mxu0
        %v845 = vadd.f32 %v647, %v844
        %v846 = vpop.f32.mrf.mxu0
        %v847 = vadd.f32 %v651, %v846
        %848 = vdwg.mxu0
        %849 = vmatprep.subr.bf16.mxu0 0
        %850 = vmatpush1.bf16.msra.mxu0 0
        %851 = vmatprep.subr.bf16.mxu0 0
        %852 = vmatpush1.bf16.msra.mxu0 0
        %853 = vmatprep.subr.bf16.mxu0 0
        %854 = vmatpush1.bf16.msra.mxu0 0
        %855 = vmatprep.subr.bf16.mxu0 0
        %856 = vmatpush1.bf16.msra.mxu0 0
        %857 = vmatprep.subr.bf16.mxu0 0
        %858 = vmatpush1.bf16.msra.mxu0 0
        %859 = vmatprep.subr.bf16.mxu0 0
        %860 = vmatpush1.bf16.msra.mxu0 0
        %861 = vmatprep.subr.bf16.mxu0 0
        %862 = vmatpush1.bf16.msra.mxu0 0
        %863 = vmatprep.subr.bf16.mxu0 %v735
        %864 = vmatpush1.bf16.msra.mxu0 %v732
        %865 = vmatprep.subr.bf16.mxu0 0
        %866 = vmatpush2.bf16.msra.mxu0 0
        %867 = vmatprep.subr.bf16.mxu0 0
        %868 = vmatpush2.bf16.msra.mxu0 0
        %869 = vmatprep.subr.bf16.mxu0 0
        %870 = vmatpush2.bf16.msra.mxu0 0
        %871 = vmatprep.subr.bf16.mxu0 0
        %872 = vmatpush2.bf16.msra.mxu0 0
        %873 = vmatprep.subr.bf16.mxu0 0
        %874 = vmatpush2.bf16.msra.mxu0 0
        %875 = vmatprep.subr.bf16.mxu0 0
        %876 = vmatpush2.bf16.msra.mxu0 0
        %877 = vmatprep.subr.bf16.mxu0 0
        %878 = vmatpush2.bf16.msra.mxu0 0
        %879 = vmatprep.subr.bf16.mxu0 0
        %880 = vmatpush2.bf16.msra.mxu0 0
        %881 = vmatprep.mubr.bf16.mxu0 0
        %882 = vmatmul.mubr.bf16.gmra.mxu0 %v710
        %v883 = vpop.f32.mrf.mxu0
        %v884 = vadd.f32 %v655, %v883
        %v885 = vpop.f32.mrf.mxu0
        %v886 = vadd.f32 %v659, %v885
        %v887 = vpop.f32.mrf.mxu0
        %v888 = vadd.f32 %v655, %v887
        %v889 = vpop.f32.mrf.mxu0
        %v890 = vadd.f32 %v659, %v889
        %891 = vmatprep.mubr.bf16.mxu0 0
        %892 = vmatmul.mubr.bf16.gmra.mxu0 %v713
        %v893 = vpop.f32.mrf.mxu0
        %v894 = vadd.f32 %v655, %v893
        %v895 = vpop.f32.mrf.mxu0
        %v896 = vadd.f32 %v659, %v895
        %v897 = vpop.f32.mrf.mxu0
        %v898 = vadd.f32 %v655, %v897
        %v899 = vpop.f32.mrf.mxu0
        %v900 = vadd.f32 %v659, %v899
        %901 = vdwg.mxu0
        %902 = vmatprep.subr.bf16.mxu0 0
        %903 = vmatpush1.bf16.msra.mxu0 0
        %904 = vmatprep.subr.bf16.mxu0 0
        %905 = vmatpush1.bf16.msra.mxu0 0
        %906 = vmatprep.subr.bf16.mxu0 0
        %907 = vmatpush1.bf16.msra.mxu0 0
        %908 = vmatprep.subr.bf16.mxu0 0
        %909 = vmatpush1.bf16.msra.mxu0 0
        %910 = vmatprep.subr.bf16.mxu0 0
        %911 = vmatpush1.bf16.msra.mxu0 0
        %912 = vmatprep.subr.bf16.mxu0 0
        %913 = vmatpush1.bf16.msra.mxu0 0
        %914 = vmatprep.subr.bf16.mxu0 0
        %915 = vmatpush1.bf16.msra.mxu0 0
        %916 = vmatprep.subr.bf16.mxu0 %v741
        %917 = vmatpush1.bf16.msra.mxu0 %v738
        %918 = vmatprep.subr.bf16.mxu0 0
        %919 = vmatpush2.bf16.msra.mxu0 0
        %920 = vmatprep.subr.bf16.mxu0 0
        %921 = vmatpush2.bf16.msra.mxu0 0
        %922 = vmatprep.subr.bf16.mxu0 0
        %923 = vmatpush2.bf16.msra.mxu0 0
        %924 = vmatprep.subr.bf16.mxu0 0
        %925 = vmatpush2.bf16.msra.mxu0 0
        %926 = vmatprep.subr.bf16.mxu0 0
        %927 = vmatpush2.bf16.msra.mxu0 0
        %928 = vmatprep.subr.bf16.mxu0 0
        %929 = vmatpush2.bf16.msra.mxu0 0
        %930 = vmatprep.subr.bf16.mxu0 0
        %931 = vmatpush2.bf16.msra.mxu0 0
        %932 = vmatprep.subr.bf16.mxu0 0
        %933 = vmatpush2.bf16.msra.mxu0 0
        %934 = vmatprep.mubr.bf16.mxu0 0
        %935 = vmatmul.mubr.bf16.gmra.mxu0 %v710
        %v936 = vpop.f32.mrf.mxu0
        %v937 = vadd.f32 %v663, %v936
        %v938 = vpop.f32.mrf.mxu0
        %v939 = vadd.f32 %v667, %v938
        %v940 = vpop.f32.mrf.mxu0
        %v941 = vadd.f32 %v663, %v940
        %v942 = vpop.f32.mrf.mxu0
        %v943 = vadd.f32 %v667, %v942
        %944 = vmatprep.mubr.bf16.mxu0 0
        %945 = vmatmul.mubr.bf16.gmra.mxu0 %v713
        %v946 = vpop.f32.mrf.mxu0
        %v947 = vadd.f32 %v663, %v946
        %v948 = vpop.f32.mrf.mxu0
        %v949 = vadd.f32 %v667, %v948
        %v950 = vpop.f32.mrf.mxu0
        %v951 = vadd.f32 %v663, %v950
        %v952 = vpop.f32.mrf.mxu0
        %v953 = vadd.f32 %v667, %v952
        %954 = vdwg.mxu0
        %v955 = vtanh.pop %v778
        %v956 = vtanh.pop %v780
        %v957 = vtanh.pop %v782
        %v958 = vtanh.pop %v784
        %v959 = vtanh.pop %v788
        %v960 = vtanh.pop %v790
        %v961 = vtanh.pop %v792
        %v962 = vtanh.pop %v794
        %v963 = vmul.f32 %v955, 0.5
        %v964 = vmul.f32 %v956, 0.5
        %v965 = vmul.f32 %v957, 0.5
        %v966 = vmul.f32 %v958, 0.5
        %v967 = vmul.f32 %v959, 0.5
        %v968 = vmul.f32 %v960, 0.5
        %v969 = vmul.f32 %v961, 0.5
        %v970 = vmul.f32 %v962, 0.5
        %v971 = vadd.f32 %v963, 0.5
        %v972 = vadd.f32 %v964, 0.5
        %v973 = vadd.f32 %v965, 0.5
        %v974 = vadd.f32 %v966, 0.5
        %v975 = vadd.f32 %v967, 0.5
        %v976 = vadd.f32 %v968, 0.5
        %v977 = vadd.f32 %v969, 0.5
        %v978 = vadd.f32 %v970, 0.5
        %v979 = vtanh.pop %v831
        %v980 = vtanh.pop %v833
        %v981 = vtanh.pop %v835
        %v982 = vtanh.pop %v837
        %v983 = vtanh.pop %v841
        %v984 = vtanh.pop %v843
        %v985 = vtanh.pop %v845
        %v986 = vtanh.pop %v847
        %v987 = vmul.f32 %v979, 0.5
        %v988 = vmul.f32 %v980, 0.5
        %v989 = vmul.f32 %v981, 0.5
        %v990 = vmul.f32 %v982, 0.5
        %v991 = vmul.f32 %v983, 0.5
        %v992 = vmul.f32 %v984, 0.5
        %v993 = vmul.f32 %v985, 0.5
        %v994 = vmul.f32 %v986, 0.5
        %v995 = vadd.f32 %v987, 0.5
        %v996 = vadd.f32 %v988, 0.5
        %v997 = vadd.f32 %v989, 0.5
        %v998 = vadd.f32 %v990, 0.5
        %v999 = vadd.f32 %v991, 0.5
        %v1000 = vadd.f32 %v992, 0.5
        %v1001 = vadd.f32 %v993, 0.5
        %v1002 = vadd.f32 %v994, 0.5
        %v1003 = vtanh.pop %v884
        %v1004 = vtanh.pop %v886
        %v1005 = vtanh.pop %v888
        %v1006 = vtanh.pop %v890
        %v1007 = vtanh.pop %v894
        %v1008 = vtanh.pop %v896
        %v1009 = vtanh.pop %v898
        %v1010 = vtanh.pop %v900
        %v1011 = vtanh.pop %v937
        %v1012 = vtanh.pop %v939
        %v1013 = vtanh.pop %v941
        %v1014 = vtanh.pop %v943
        %v1015 = vtanh.pop %v947
        %v1016 = vtanh.pop %v949
        %v1017 = vtanh.pop %v951
        %v1018 = vtanh.pop %v953
        %v1019 = vmul.f32 %v1011, 0.5
        %v1020 = vmul.f32 %v1012, 0.5
        %v1021 = vmul.f32 %v1013, 0.5
        %v1022 = vmul.f32 %v1014, 0.5
        %v1023 = vmul.f32 %v1015, 0.5
        %v1024 = vmul.f32 %v1016, 0.5
        %v1025 = vmul.f32 %v1017, 0.5
        %v1026 = vmul.f32 %v1018, 0.5
        %v1027 = vadd.f32 %v1019, 0.5
        %v1028 = vadd.f32 %v1020, 0.5
        %v1029 = vadd.f32 %v1021, 0.5
        %v1030 = vadd.f32 %v1022, 0.5
        %v1031 = vadd.f32 %v1023, 0.5
        %v1032 = vadd.f32 %v1024, 0.5
        %v1033 = vadd.f32 %v1025, 0.5
        %v1034 = vadd.f32 %v1026, 0.5
        %v1035 = vmul.f32 %v995, 0.0
        %v1036 = vmul.f32 %v996, 0.0
        %v1037 = vmul.f32 %v997, 0.0
        %v1038 = vmul.f32 %v998, 0.0
        %v1039 = vmul.f32 %v999, 0.0
        %v1040 = vmul.f32 %v1000, 0.0
        %v1041 = vmul.f32 %v1001, 0.0
        %v1042 = vmul.f32 %v1002, 0.0
        %v1043 = vmul.f32 %v971, %v1003
        %v1044 = vmul.f32 %v972, %v1004
        %v1045 = vmul.f32 %v973, %v1005
        %v1046 = vmul.f32 %v974, %v1006
        %v1047 = vmul.f32 %v975, %v1007
        %v1048 = vmul.f32 %v976, %v1008
        %v1049 = vmul.f32 %v977, %v1009
        %v1050 = vmul.f32 %v978, %v1010
        %v1051 = vadd.f32 %v1035, %v1043
        %v1052 = vadd.f32 %v1036, %v1044
        %v1053 = vadd.f32 %v1037, %v1045
        %v1054 = vadd.f32 %v1038, %v1046
        %v1055 = vadd.f32 %v1039, %v1047
        %v1056 = vadd.f32 %v1040, %v1048
        %v1057 = vadd.f32 %v1041, %v1049
        %v1058 = vadd.f32 %v1042, %v1050
        %v1059 = vtanh.pop %v1051
        %v1060 = vtanh.pop %v1052
        %v1061 = vtanh.pop %v1053
        %v1062 = vtanh.pop %v1054
        %v1063 = vtanh.pop %v1055
        %v1064 = vtanh.pop %v1056
        %v1065 = vtanh.pop %v1057
        %v1066 = vtanh.pop %v1058
        %v1067 = vmul.f32 %v1027, %v1059
        %v1068 = vmul.f32 %v1028, %v1060
        %v1069 = vmul.f32 %v1029, %v1061
        %v1070 = vmul.f32 %v1030, %v1062
        %v1071 = vmul.f32 %v1031, %v1063
        %v1072 = vmul.f32 %v1032, %v1064
        %v1073 = vmul.f32 %v1033, %v1065
        %v1074 = vmul.f32 %v1034, %v1066
        %v1075 = vpack.c.bf16 %v1069, %v1067
        %v1076 = vpack.c.bf16 %v1070, %v1068
        %v1077 = vpack.c.bf16 %v1073, %v1071
        %v1078 = vpack.c.bf16 %v1074, %v1072
        %v1080 = vlaneseq
        %v1081 = vshrl.u32 %v1080, 7
        %v1082 = vsub.s32 0, %v1081
        %v1083 = vrot.slane %v628, %v1082
        %v1084 = vlaneseq
        %v1085 = vshrl.u32 %v1084, 7
        %v1086 = vsub.s32 1, %v1085
        %v1087 = vrot.slane %v628, %v1086
        %v1088 = vlaneseq
        %v1089 = vshrl.u32 %v1088, 7
        %v1090 = vsub.s32 2, %v1089
        %v1091 = vrot.slane %v628, %v1090
        %v1092 = vlaneseq
        %v1093 = vshrl.u32 %v1092, 7
        %v1094 = vsub.s32 3, %v1093
        %v1095 = vrot.slane %v628, %v1094
        %v1196 = vunpack.c.l.b16 %v532
        %v1197 = vunpack.c.h.b16 %v532
        %v1198 = vunpack.c.l.b16 %v533
        %v1199 = vunpack.c.h.b16 %v533
        %v1200 = vunpack.c.l.b16 %v534
        %v1201 = vunpack.c.h.b16 %v534
        %v1202 = vunpack.c.l.b16 %v535
        %v1203 = vunpack.c.h.b16 %v535
        %v1204 = vunpack.c.l.b16 %v536
        %v1205 = vunpack.c.h.b16 %v536
        %v1206 = vunpack.c.l.b16 %v537
        %v1207 = vunpack.c.h.b16 %v537
        %v1208 = vunpack.c.l.b16 %v538
        %v1209 = vunpack.c.h.b16 %v538
        %v1210 = vunpack.c.l.b16 %v539
        %v1211 = vunpack.c.h.b16 %v539
        %v1212 = vunpack.c.l.b16 %v540
        %v1213 = vunpack.c.h.b16 %v540
        %v1214 = vunpack.c.l.b16 %v541
        %v1215 = vunpack.c.h.b16 %v541
        %v1216 = vunpack.c.l.b16 %v542
        %v1217 = vunpack.c.h.b16 %v542
        %v1218 = vunpack.c.l.b16 %v543
        %v1219 = vunpack.c.h.b16 %v543
        %v1220 = vunpack.c.l.b16 %v544
        %v1221 = vunpack.c.h.b16 %v544
        %v1222 = vunpack.c.l.b16 %v545
        %v1223 = vunpack.c.h.b16 %v545
        %v1224 = vunpack.c.l.b16 %v546
        %v1225 = vunpack.c.h.b16 %v546
        %v1226 = vunpack.c.l.b16 %v547
        %v1227 = vunpack.c.h.b16 %v547
        %v1228 = vunpack.c.l.b16 %v548
        %v1229 = vunpack.c.h.b16 %v548
        %v1230 = vunpack.c.l.b16 %v549
        %v1231 = vunpack.c.h.b16 %v549
        %v1232 = vunpack.c.l.b16 %v550
        %v1233 = vunpack.c.h.b16 %v550
        %v1234 = vunpack.c.l.b16 %v551
        %v1235 = vunpack.c.h.b16 %v551
        %v1236 = vunpack.c.l.b16 %v552
        %v1237 = vunpack.c.h.b16 %v552
        %v1238 = vunpack.c.l.b16 %v553
        %v1239 = vunpack.c.h.b16 %v553
        %v1240 = vunpack.c.l.b16 %v554
        %v1241 = vunpack.c.h.b16 %v554
        %v1242 = vunpack.c.l.b16 %v555
        %v1243 = vunpack.c.h.b16 %v555
        %v1244 = vunpack.c.l.b16 %v556
        %v1245 = vunpack.c.h.b16 %v556
        %v1246 = vunpack.c.l.b16 %v557
        %v1247 = vunpack.c.h.b16 %v557
        %v1248 = vunpack.c.l.b16 %v558
        %v1249 = vunpack.c.h.b16 %v558
        %v1250 = vunpack.c.l.b16 %v559
        %v1251 = vunpack.c.h.b16 %v559
        %v1252 = vunpack.c.l.b16 %v560
        %v1253 = vunpack.c.h.b16 %v560
        %v1254 = vunpack.c.l.b16 %v561
        %v1255 = vunpack.c.h.b16 %v561
        %v1256 = vunpack.c.l.b16 %v562
        %v1257 = vunpack.c.h.b16 %v562
        %v1258 = vunpack.c.l.b16 %v563
        %v1259 = vunpack.c.h.b16 %v563
        %v1260 = vunpack.c.l.b16 %v564
        %v1261 = vunpack.c.h.b16 %v564
        %v1262 = vunpack.c.l.b16 %v565
        %v1263 = vunpack.c.h.b16 %v565
        %v1264 = vunpack.c.l.b16 %v566
        %v1265 = vunpack.c.h.b16 %v566
        %v1266 = vunpack.c.l.b16 %v567
        %v1267 = vunpack.c.h.b16 %v567
        %v1268 = vunpack.c.l.b16 %v568
        %v1269 = vunpack.c.h.b16 %v568
        %v1270 = vunpack.c.l.b16 %v569
        %v1271 = vunpack.c.h.b16 %v569
        %v1272 = vunpack.c.l.b16 %v570
        %v1273 = vunpack.c.h.b16 %v570
        %v1274 = vunpack.c.l.b16 %v571
        %v1275 = vunpack.c.h.b16 %v571
        %v1276 = vunpack.c.l.b16 %v572
        %v1277 = vunpack.c.h.b16 %v572
        %v1278 = vunpack.c.l.b16 %v573
        %v1279 = vunpack.c.h.b16 %v573
        %v1280 = vunpack.c.l.b16 %v574
        %v1281 = vunpack.c.h.b16 %v574
        %v1282 = vunpack.c.l.b16 %v575
        %v1283 = vunpack.c.h.b16 %v575
        %v1284 = vunpack.c.l.b16 %v576
        %v1285 = vunpack.c.h.b16 %v576
        %v1286 = vunpack.c.l.b16 %v577
        %v1287 = vunpack.c.h.b16 %v577
        %v1288 = vunpack.c.l.b16 %v578
        %v1289 = vunpack.c.h.b16 %v578
        %v1290 = vunpack.c.l.b16 %v579
        %v1291 = vunpack.c.h.b16 %v579
        %v1292 = vunpack.c.l.b16 %v580
        %v1293 = vunpack.c.h.b16 %v580
        %v1294 = vunpack.c.l.b16 %v581
        %v1295 = vunpack.c.h.b16 %v581
        %v1296 = vunpack.c.l.b16 %v582
        %v1297 = vunpack.c.h.b16 %v582
        %v1298 = vunpack.c.l.b16 %v583
        %v1299 = vunpack.c.h.b16 %v583
        %v1300 = vunpack.c.l.b16 %v584
        %v1301 = vunpack.c.h.b16 %v584
        %v1302 = vunpack.c.l.b16 %v585
        %v1303 = vunpack.c.h.b16 %v585
        %v1304 = vunpack.c.l.b16 %v586
        %v1305 = vunpack.c.h.b16 %v586
        %v1306 = vunpack.c.l.b16 %v587
        %v1307 = vunpack.c.h.b16 %v587
        %v1308 = vunpack.c.l.b16 %v588
        %v1309 = vunpack.c.h.b16 %v588
        %v1310 = vunpack.c.l.b16 %v589
        %v1311 = vunpack.c.h.b16 %v589
        %v1312 = vunpack.c.l.b16 %v590
        %v1313 = vunpack.c.h.b16 %v590
        %v1314 = vunpack.c.l.b16 %v591
        %v1315 = vunpack.c.h.b16 %v591
        %v1316 = vunpack.c.l.b16 %v592
        %v1317 = vunpack.c.h.b16 %v592
        %v1318 = vunpack.c.l.b16 %v593
        %v1319 = vunpack.c.h.b16 %v593
        %v1320 = vunpack.c.l.b16 %v594
        %v1321 = vunpack.c.h.b16 %v594
        %v1322 = vunpack.c.l.b16 %v595
        %v1323 = vunpack.c.h.b16 %v595
        %v1324 = vunpack.c.l.b16 %v596
        %v1325 = vunpack.c.h.b16 %v596
        %v1326 = vunpack.c.l.b16 %v597
        %v1327 = vunpack.c.h.b16 %v597
        %v1328 = vunpack.c.l.b16 %v598
        %v1329 = vunpack.c.h.b16 %v598
        %v1330 = vunpack.c.l.b16 %v599
        %v1331 = vunpack.c.h.b16 %v599
        %v1332 = vunpack.c.l.b16 %v600
        %v1333 = vunpack.c.h.b16 %v600
        %v1334 = vunpack.c.l.b16 %v601
        %v1335 = vunpack.c.h.b16 %v601
        %v1336 = vunpack.c.l.b16 %v602
        %v1337 = vunpack.c.h.b16 %v602
        %v1338 = vunpack.c.l.b16 %v603
        %v1339 = vunpack.c.h.b16 %v603
        %v1340 = vunpack.c.l.b16 %v604
        %v1341 = vunpack.c.h.b16 %v604
        %v1342 = vunpack.c.l.b16 %v605
        %v1343 = vunpack.c.h.b16 %v605
        %v1344 = vunpack.c.l.b16 %v606
        %v1345 = vunpack.c.h.b16 %v606
        %v1346 = vunpack.c.l.b16 %v607
        %v1347 = vunpack.c.h.b16 %v607
        %v1348 = vunpack.c.l.b16 %v608
        %v1349 = vunpack.c.h.b16 %v608
        %v1350 = vunpack.c.l.b16 %v609
        %v1351 = vunpack.c.h.b16 %v609
        %v1352 = vunpack.c.l.b16 %v610
        %v1353 = vunpack.c.h.b16 %v610
        %v1354 = vunpack.c.l.b16 %v611
        %v1355 = vunpack.c.h.b16 %v611
        %v1356 = vunpack.c.l.b16 %v612
        %v1357 = vunpack.c.h.b16 %v612
        %v1358 = vunpack.c.l.b16 %v613
        %v1359 = vunpack.c.h.b16 %v613
        %v1360 = vunpack.c.l.b16 %v614
        %v1361 = vunpack.c.h.b16 %v614
        %v1362 = vunpack.c.l.b16 %v615
        %v1363 = vunpack.c.h.b16 %v615
        %v1364 = vunpack.c.l.b16 %v616
        %v1365 = vunpack.c.h.b16 %v616
        %v1366 = vunpack.c.l.b16 %v617
        %v1367 = vunpack.c.h.b16 %v617
        %v1368 = vunpack.c.l.b16 %v618
        %v1369 = vunpack.c.h.b16 %v618
        %v1370 = vunpack.c.l.b16 %v619
        %v1371 = vunpack.c.h.b16 %v619
        %v1372 = vunpack.c.l.b16 %v620
        %v1373 = vunpack.c.h.b16 %v620
        %v1374 = vunpack.c.l.b16 %v621
        %v1375 = vunpack.c.h.b16 %v621
        %v1376 = vunpack.c.l.b16 %v622
        %v1377 = vunpack.c.h.b16 %v622
        %v1378 = vunpack.c.l.b16 %v623
        %v1379 = vunpack.c.h.b16 %v623
        %v1380 = vunpack.c.l.b16 %v624
        %v1381 = vunpack.c.h.b16 %v624
        %v1382 = vunpack.c.l.b16 %v625
        %v1383 = vunpack.c.h.b16 %v625
        %v1384 = vunpack.c.l.b16 %v626
        %v1385 = vunpack.c.h.b16 %v626
        %v1386 = vunpack.c.l.b16 %v627
        %v1387 = vunpack.c.h.b16 %v627
        %v1388 = vpack.c.b16 %v1200, %v1196
        %v1389 = vpack.c.b16 %v1201, %v1197
        %v1390 = vpack.c.b16 %v1202, %v1198
        %v1391 = vpack.c.b16 %v1203, %v1199
        %v1392 = vpack.c.b16 %v1208, %v1204
        %v1393 = vpack.c.b16 %v1209, %v1205
        %v1394 = vpack.c.b16 %v1210, %v1206
        %v1395 = vpack.c.b16 %v1211, %v1207
        %v1396 = vpack.c.b16 %v1216, %v1212
        %v1397 = vpack.c.b16 %v1217, %v1213
        %v1398 = vpack.c.b16 %v1218, %v1214
        %v1399 = vpack.c.b16 %v1219, %v1215
        %v1400 = vpack.c.b16 %v1224, %v1220
        %v1401 = vpack.c.b16 %v1225, %v1221
        %v1402 = vpack.c.b16 %v1226, %v1222
        %v1403 = vpack.c.b16 %v1227, %v1223
        %v1404 = vpack.c.b16 %v1232, %v1228
        %v1405 = vpack.c.b16 %v1233, %v1229
        %v1406 = vpack.c.b16 %v1234, %v1230
        %v1407 = vpack.c.b16 %v1235, %v1231
        %v1408 = vpack.c.b16 %v1240, %v1236
        %v1409 = vpack.c.b16 %v1241, %v1237
        %v1410 = vpack.c.b16 %v1242, %v1238
        %v1411 = vpack.c.b16 %v1243, %v1239
        %v1412 = vpack.c.b16 %v1248, %v1244
        %v1413 = vpack.c.b16 %v1249, %v1245
        %v1414 = vpack.c.b16 %v1250, %v1246
        %v1415 = vpack.c.b16 %v1251, %v1247
        %v1416 = vpack.c.b16 %v1256, %v1252
        %v1417 = vpack.c.b16 %v1257, %v1253
        %v1418 = vpack.c.b16 %v1258, %v1254
        %v1419 = vpack.c.b16 %v1259, %v1255
        %v1420 = vpack.c.b16 %v1264, %v1260
        %v1421 = vpack.c.b16 %v1265, %v1261
        %v1422 = vpack.c.b16 %v1266, %v1262
        %v1423 = vpack.c.b16 %v1267, %v1263
        %v1424 = vpack.c.b16 %v1272, %v1268
        %v1425 = vpack.c.b16 %v1273, %v1269
        %v1426 = vpack.c.b16 %v1274, %v1270
        %v1427 = vpack.c.b16 %v1275, %v1271
        %v1428 = vpack.c.b16 %v1280, %v1276
        %v1429 = vpack.c.b16 %v1281, %v1277
        %v1430 = vpack.c.b16 %v1282, %v1278
        %v1431 = vpack.c.b16 %v1283, %v1279
        %v1432 = vpack.c.b16 %v1288, %v1284
        %v1433 = vpack.c.b16 %v1289, %v1285
        %v1434 = vpack.c.b16 %v1290, %v1286
        %v1435 = vpack.c.b16 %v1291, %v1287
        %v1436 = vpack.c.b16 %v1296, %v1292
        %v1437 = vpack.c.b16 %v1297, %v1293
        %v1438 = vpack.c.b16 %v1298, %v1294
        %v1439 = vpack.c.b16 %v1299, %v1295
        %v1440 = vpack.c.b16 %v1304, %v1300
        %v1441 = vpack.c.b16 %v1305, %v1301
        %v1442 = vpack.c.b16 %v1306, %v1302
        %v1443 = vpack.c.b16 %v1307, %v1303
        %v1444 = vpack.c.b16 %v1312, %v1308
        %v1445 = vpack.c.b16 %v1313, %v1309
        %v1446 = vpack.c.b16 %v1314, %v1310
        %v1447 = vpack.c.b16 %v1315, %v1311
        %v1448 = vpack.c.b16 %v1320, %v1316
        %v1449 = vpack.c.b16 %v1321, %v1317
        %v1450 = vpack.c.b16 %v1322, %v1318
        %v1451 = vpack.c.b16 %v1323, %v1319
        %v1452 = vpack.c.b16 %v1328, %v1324
        %v1453 = vpack.c.b16 %v1329, %v1325
        %v1454 = vpack.c.b16 %v1330, %v1326
        %v1455 = vpack.c.b16 %v1331, %v1327
        %v1456 = vpack.c.b16 %v1336, %v1332
        %v1457 = vpack.c.b16 %v1337, %v1333
        %v1458 = vpack.c.b16 %v1338, %v1334
        %v1459 = vpack.c.b16 %v1339, %v1335
        %v1460 = vpack.c.b16 %v1344, %v1340
        %v1461 = vpack.c.b16 %v1345, %v1341
        %v1462 = vpack.c.b16 %v1346, %v1342
        %v1463 = vpack.c.b16 %v1347, %v1343
        %v1464 = vpack.c.b16 %v1352, %v1348
        %v1465 = vpack.c.b16 %v1353, %v1349
        %v1466 = vpack.c.b16 %v1354, %v1350
        %v1467 = vpack.c.b16 %v1355, %v1351
        %v1468 = vpack.c.b16 %v1360, %v1356
        %v1469 = vpack.c.b16 %v1361, %v1357
        %v1470 = vpack.c.b16 %v1362, %v1358
        %v1471 = vpack.c.b16 %v1363, %v1359
        %v1472 = vpack.c.b16 %v1368, %v1364
        %v1473 = vpack.c.b16 %v1369, %v1365
        %v1474 = vpack.c.b16 %v1370, %v1366
        %v1475 = vpack.c.b16 %v1371, %v1367
        %v1476 = vpack.c.b16 %v1376, %v1372
        %v1477 = vpack.c.b16 %v1377, %v1373
        %v1478 = vpack.c.b16 %v1378, %v1374
        %v1479 = vpack.c.b16 %v1379, %v1375
        %v1480 = vpack.c.b16 %v1384, %v1380
        %v1481 = vpack.c.b16 %v1385, %v1381
        %v1482 = vpack.c.b16 %v1386, %v1382
        %v1483 = vpack.c.b16 %v1387, %v1383
        %1580 = vmatprep.subr.bf16.mxu0 %v1417
        %1581 = vmatpush1.bf16.msra.mxu0 %v1416
        %1582 = vmatprep.subr.bf16.mxu0 %v1413
        %1583 = vmatpush1.bf16.msra.mxu0 %v1412
        %1584 = vmatprep.subr.bf16.mxu0 %v1409
        %1585 = vmatpush1.bf16.msra.mxu0 %v1408
        %1586 = vmatprep.subr.bf16.mxu0 %v1405
        %1587 = vmatpush1.bf16.msra.mxu0 %v1404
        %1588 = vmatprep.subr.bf16.mxu0 %v1401
        %1589 = vmatpush1.bf16.msra.mxu0 %v1400
        %1590 = vmatprep.subr.bf16.mxu0 %v1397
        %1591 = vmatpush1.bf16.msra.mxu0 %v1396
        %1592 = vmatprep.subr.bf16.mxu0 %v1393
        %1593 = vmatpush1.bf16.msra.mxu0 %v1392
        %1594 = vmatprep.subr.bf16.mxu0 %v1389
        %1595 = vmatpush1.bf16.msra.mxu0 %v1388
        %1596 = vmatprep.subr.bf16.mxu0 %v1449
        %1597 = vmatpush2.bf16.msra.mxu0 %v1448
        %1598 = vmatprep.subr.bf16.mxu0 %v1445
        %1599 = vmatpush2.bf16.msra.mxu0 %v1444
        %1600 = vmatprep.subr.bf16.mxu0 %v1441
        %1601 = vmatpush2.bf16.msra.mxu0 %v1440
        %1602 = vmatprep.subr.bf16.mxu0 %v1437
        %1603 = vmatpush2.bf16.msra.mxu0 %v1436
        %1604 = vmatprep.subr.bf16.mxu0 %v1433
        %1605 = vmatpush2.bf16.msra.mxu0 %v1432
        %1606 = vmatprep.subr.bf16.mxu0 %v1429
        %1607 = vmatpush2.bf16.msra.mxu0 %v1428
        %1608 = vmatprep.subr.bf16.mxu0 %v1425
        %1609 = vmatpush2.bf16.msra.mxu0 %v1424
        %1610 = vmatprep.subr.bf16.mxu0 %v1421
        %1611 = vmatpush2.bf16.msra.mxu0 %v1420
        %1612 = vmatprep.mubr.bf16.mxu0 %v1076
        %1613 = vmatmul.mubr.bf16.gmra.mxu0 %v1075
        %v1614 = vpop.f32.mrf.mxu0
        %v1615 = vadd.f32 %v1083, %v1614
        %v1616 = vpop.f32.mrf.mxu0
        %v1617 = vadd.f32 %v1087, %v1616
        %v1618 = vpop.f32.mrf.mxu0
        %v1619 = vadd.f32 %v1083, %v1618
        %v1620 = vpop.f32.mrf.mxu0
        %v1621 = vadd.f32 %v1087, %v1620
        %1622 = vmatprep.mubr.bf16.mxu0 %v1078
        %1623 = vmatmul.mubr.bf16.gmra.mxu0 %v1077
        %v1624 = vpop.f32.mrf.mxu0
        %v1625 = vadd.f32 %v1083, %v1624
        %v1626 = vpop.f32.mrf.mxu0
        %v1627 = vadd.f32 %v1087, %v1626
        %v1628 = vpop.f32.mrf.mxu0
        %v1629 = vadd.f32 %v1083, %v1628
        %v1630 = vpop.f32.mrf.mxu0
        %v1631 = vadd.f32 %v1087, %v1630
        %1632 = vdwg.mxu0
        %1633 = vmatprep.subr.bf16.mxu0 %v1481
        %1634 = vmatpush1.bf16.msra.mxu0 %v1480
        %1635 = vmatprep.subr.bf16.mxu0 %v1477
        %1636 = vmatpush1.bf16.msra.mxu0 %v1476
        %1637 = vmatprep.subr.bf16.mxu0 %v1473
        %1638 = vmatpush1.bf16.msra.mxu0 %v1472
        %1639 = vmatprep.subr.bf16.mxu0 %v1469
        %1640 = vmatpush1.bf16.msra.mxu0 %v1468
        %1641 = vmatprep.subr.bf16.mxu0 %v1465
        %1642 = vmatpush1.bf16.msra.mxu0 %v1464
        %1643 = vmatprep.subr.bf16.mxu0 %v1461
        %1644 = vmatpush1.bf16.msra.mxu0 %v1460
        %1645 = vmatprep.subr.bf16.mxu0 %v1457
        %1646 = vmatpush1.bf16.msra.mxu0 %v1456
        %1647 = vmatprep.subr.bf16.mxu0 %v1453
        %1648 = vmatpush1.bf16.msra.mxu0 %v1452
        %1649 = vmatprep.subr.bf16.mxu0 0
        %1650 = vmatpush2.bf16.msra.mxu0 0
        %1651 = vmatprep.subr.bf16.mxu0 0
        %1652 = vmatpush2.bf16.msra.mxu0 0
        %1653 = vmatprep.subr.bf16.mxu0 0
        %1654 = vmatpush2.bf16.msra.mxu0 0
        %1655 = vmatprep.subr.bf16.mxu0 0
        %1656 = vmatpush2.bf16.msra.mxu0 0
        %1657 = vmatprep.subr.bf16.mxu0 0
        %1658 = vmatpush2.bf16.msra.mxu0 0
        %1659 = vmatprep.subr.bf16.mxu0 0
        %1660 = vmatpush2.bf16.msra.mxu0 0
        %1661 = vmatprep.subr.bf16.mxu0 0
        %1662 = vmatpush2.bf16.msra.mxu0 0
        %1663 = vmatprep.subr.bf16.mxu0 0
        %1664 = vmatpush2.bf16.msra.mxu0 0
        %1665 = vmatprep.mubr.bf16.mxu0 0
        %1666 = vmatmul.mubr.bf16.gmra.mxu0 0
        %v1667 = vpop.f32.mrf.mxu0
        %v1668 = vadd.f32 %v1615, %v1667
        %v1669 = vpop.f32.mrf.mxu0
        %v1670 = vadd.f32 %v1617, %v1669
        %v1671 = vpop.f32.mrf.mxu0
        %v1672 = vadd.f32 %v1619, %v1671
        %v1673 = vpop.f32.mrf.mxu0
        %v1674 = vadd.f32 %v1621, %v1673
        %1675 = vmatprep.mubr.bf16.mxu0 0
        %1676 = vmatmul.mubr.bf16.gmra.mxu0 0
        %v1677 = vpop.f32.mrf.mxu0
        %v1678 = vadd.f32 %v1625, %v1677
        %v1679 = vpop.f32.mrf.mxu0
        %v1680 = vadd.f32 %v1627, %v1679
        %v1681 = vpop.f32.mrf.mxu0
        %v1682 = vadd.f32 %v1629, %v1681
        %v1683 = vpop.f32.mrf.mxu0
        %v1684 = vadd.f32 %v1631, %v1683
        %1685 = vdwg.mxu0
        %1686 = vmatprep.subr.bf16.mxu0 %v1419
        %1687 = vmatpush1.bf16.msra.mxu0 %v1418
        %1688 = vmatprep.subr.bf16.mxu0 %v1415
        %1689 = vmatpush1.bf16.msra.mxu0 %v1414
        %1690 = vmatprep.subr.bf16.mxu0 %v1411
        %1691 = vmatpush1.bf16.msra.mxu0 %v1410
        %1692 = vmatprep.subr.bf16.mxu0 %v1407
        %1693 = vmatpush1.bf16.msra.mxu0 %v1406
        %1694 = vmatprep.subr.bf16.mxu0 %v1403
        %1695 = vmatpush1.bf16.msra.mxu0 %v1402
        %1696 = vmatprep.subr.bf16.mxu0 %v1399
        %1697 = vmatpush1.bf16.msra.mxu0 %v1398
        %1698 = vmatprep.subr.bf16.mxu0 %v1395
        %1699 = vmatpush1.bf16.msra.mxu0 %v1394
        %1700 = vmatprep.subr.bf16.mxu0 %v1391
        %1701 = vmatpush1.bf16.msra.mxu0 %v1390
        %1702 = vmatprep.subr.bf16.mxu0 %v1451
        %1703 = vmatpush2.bf16.msra.mxu0 %v1450
        %1704 = vmatprep.subr.bf16.mxu0 %v1447
        %1705 = vmatpush2.bf16.msra.mxu0 %v1446
        %1706 = vmatprep.subr.bf16.mxu0 %v1443
        %1707 = vmatpush2.bf16.msra.mxu0 %v1442
        %1708 = vmatprep.subr.bf16.mxu0 %v1439
        %1709 = vmatpush2.bf16.msra.mxu0 %v1438
        %1710 = vmatprep.subr.bf16.mxu0 %v1435
        %1711 = vmatpush2.bf16.msra.mxu0 %v1434
        %1712 = vmatprep.subr.bf16.mxu0 %v1431
        %1713 = vmatpush2.bf16.msra.mxu0 %v1430
        %1714 = vmatprep.subr.bf16.mxu0 %v1427
        %1715 = vmatpush2.bf16.msra.mxu0 %v1426
        %1716 = vmatprep.subr.bf16.mxu0 %v1423
        %1717 = vmatpush2.bf16.msra.mxu0 %v1422
        %1718 = vmatprep.mubr.bf16.mxu0 %v1076
        %1719 = vmatmul.mubr.bf16.gmra.mxu0 %v1075
        %v1720 = vpop.f32.mrf.mxu0
        %v1721 = vadd.f32 %v1091, %v1720
        %v1722 = vpop.f32.mrf.mxu0
        %v1723 = vadd.f32 %v1095, %v1722
        %v1724 = vpop.f32.mrf.mxu0
        %v1725 = vadd.f32 %v1091, %v1724
        %v1726 = vpop.f32.mrf.mxu0
        %v1727 = vadd.f32 %v1095, %v1726
        %1728 = vmatprep.mubr.bf16.mxu0 %v1078
        %1729 = vmatmul.mubr.bf16.gmra.mxu0 %v1077
        %v1730 = vpop.f32.mrf.mxu0
        %v1731 = vadd.f32 %v1091, %v1730
        %v1732 = vpop.f32.mrf.mxu0
        %v1733 = vadd.f32 %v1095, %v1732
        %v1734 = vpop.f32.mrf.mxu0
        %v1735 = vadd.f32 %v1091, %v1734
        %v1736 = vpop.f32.mrf.mxu0
        %v1737 = vadd.f32 %v1095, %v1736
        %1738 = vdwg.mxu0
        %1739 = vmatprep.subr.bf16.mxu0 %v1483
        %1740 = vmatpush1.bf16.msra.mxu0 %v1482
        %1741 = vmatprep.subr.bf16.mxu0 %v1479
        %1742 = vmatpush1.bf16.msra.mxu0 %v1478
        %1743 = vmatprep.subr.bf16.mxu0 %v1475
        %1744 = vmatpush1.bf16.msra.mxu0 %v1474
        %1745 = vmatprep.subr.bf16.mxu0 %v1471
        %1746 = vmatpush1.bf16.msra.mxu0 %v1470
        %1747 = vmatprep.subr.bf16.mxu0 %v1467
        %1748 = vmatpush1.bf16.msra.mxu0 %v1466
        %1749 = vmatprep.subr.bf16.mxu0 %v1463
        %1750 = vmatpush1.bf16.msra.mxu0 %v1462
        %1751 = vmatprep.subr.bf16.mxu0 %v1459
        %1752 = vmatpush1.bf16.msra.mxu0 %v1458
        %1753 = vmatprep.subr.bf16.mxu0 %v1455
        %1754 = vmatpush1.bf16.msra.mxu0 %v1454
        %1755 = vmatprep.subr.bf16.mxu0 0
        %1756 = vmatpush2.bf16.msra.mxu0 0
        %1757 = vmatprep.subr.bf16.mxu0 0
        %1758 = vmatpush2.bf16.msra.mxu0 0
        %1759 = vmatprep.subr.bf16.mxu0 0
        %1760 = vmatpush2.bf16.msra.mxu0 0
        %1761 = vmatprep.subr.bf16.mxu0 0
        %1762 = vmatpush2.bf16.msra.mxu0 0
        %1763 = vmatprep.subr.bf16.mxu0 0
        %1764 = vmatpush2.bf16.msra.mxu0 0
        %1765 = vmatprep.subr.bf16.mxu0 0
        %1766 = vmatpush2.bf16.msra.mxu0 0
        %1767 = vmatprep.subr.bf16.mxu0 0
        %1768 = vmatpush2.bf16.msra.mxu0 0
        %1769 = vmatprep.subr.bf16.mxu0 0
        %1770 = vmatpush2.bf16.msra.mxu0 0
        %1771 = vmatprep.mubr.bf16.mxu0 0
        %1772 = vmatmul.mubr.bf16.gmra.mxu0 0
        %v1773 = vpop.f32.mrf.mxu0
        %v1774 = vadd.f32 %v1721, %v1773
        %v1775 = vpop.f32.mrf.mxu0
        %v1776 = vadd.f32 %v1723, %v1775
        %v1777 = vpop.f32.mrf.mxu0
        %v1778 = vadd.f32 %v1725, %v1777
        %v1779 = vpop.f32.mrf.mxu0
        %v1780 = vadd.f32 %v1727, %v1779
        %1781 = vmatprep.mubr.bf16.mxu0 0
        %1782 = vmatmul.mubr.bf16.gmra.mxu0 0
        %v1783 = vpop.f32.mrf.mxu0
        %v1784 = vadd.f32 %v1731, %v1783
        %v1785 = vpop.f32.mrf.mxu0
        %v1786 = vadd.f32 %v1733, %v1785
        %v1787 = vpop.f32.mrf.mxu0
        %v1788 = vadd.f32 %v1735, %v1787
        %v1789 = vpop.f32.mrf.mxu0
        %v1790 = vadd.f32 %v1737, %v1789
        %1791 = vdwg.mxu0
        %v1792 = vtanh.pop %v1668
        %v1793 = vtanh.pop %v1672
        %v1794 = vtanh.pop %v1678
        %v1795 = vtanh.pop %v1682
        %v1796 = vmul.f32 %v1792, 0.5
        %v1797 = vmul.f32 %v1793, 0.5
        %v1798 = vmul.f32 %v1794, 0.5
        %v1799 = vmul.f32 %v1795, 0.5
        %v1800 = vadd.f32 %v1796, 0.5
        %v1801 = vadd.f32 %v1797, 0.5
        %v1802 = vadd.f32 %v1798, 0.5
        %v1803 = vadd.f32 %v1799, 0.5
        %v1804 = vtanh.pop %v1670
        %v1805 = vtanh.pop %v1674
        %v1806 = vtanh.pop %v1680
        %v1807 = vtanh.pop %v1684
        %v1808 = vmul.f32 %v1804, 0.5
        %v1809 = vmul.f32 %v1805, 0.5
        %v1810 = vmul.f32 %v1806, 0.5
        %v1811 = vmul.f32 %v1807, 0.5
        %v1812 = vadd.f32 %v1808, 0.5
        %v1813 = vadd.f32 %v1809, 0.5
        %v1814 = vadd.f32 %v1810, 0.5
        %v1815 = vadd.f32 %v1811, 0.5
        %v1816 = vtanh.pop %v1774
        %v1817 = vtanh.pop %v1778
        %v1818 = vtanh.pop %v1784
        %v1819 = vtanh.pop %v1788
        %v1820 = vtanh.pop %v1776
        %v1821 = vtanh.pop %v1780
        %v1822 = vtanh.pop %v1786
        %v1823 = vtanh.pop %v1790
        %v1824 = vmul.f32 %v1820, 0.5
        %v1825 = vmul.f32 %v1821, 0.5
        %v1826 = vmul.f32 %v1822, 0.5
        %v1827 = vmul.f32 %v1823, 0.5
        %v1828 = vadd.f32 %v1824, 0.5
        %v1829 = vadd.f32 %v1825, 0.5
        %v1830 = vadd.f32 %v1826, 0.5
        %v1831 = vadd.f32 %v1827, 0.5
        %v1832 = vmul.f32 %v1812, 0.0
        %v1833 = vmul.f32 %v1813, 0.0
        %v1834 = vmul.f32 %v1814, 0.0
        %v1835 = vmul.f32 %v1815, 0.0
        %v1836 = vmul.f32 %v1800, %v1816
        %v1837 = vmul.f32 %v1801, %v1817
        %v1838 = vmul.f32 %v1802, %v1818
        %v1839 = vmul.f32 %v1803, %v1819
        %v1840 = vadd.f32 %v1832, %v1836
        %v1841 = vadd.f32 %v1833, %v1837
        %v1842 = vadd.f32 %v1834, %v1838
        %v1843 = vadd.f32 %v1835, %v1839
        %v1844 = vtanh.pop %v1840
        %v1845 = vtanh.pop %v1841
        %v1846 = vtanh.pop %v1842
        %v1847 = vtanh.pop %v1843
        %v1848 = vmul.f32 %v1828, %v1844
        %v1849 = vmul.f32 %v1829, %v1845
        %v1850 = vmul.f32 %v1830, %v1846
        %v1851 = vmul.f32 %v1831, %v1847
        %v1852 = vpack.c.bf16 %v1849, %v1848
        %v1853 = vpack.c.bf16 %v1851, %v1850
        %s1854 = scalar_lea.vmem %s357, 32 [#allocation2]
        %v1855 = vld [vmem:[%s1854] sm:$0xff]
        %v1856 = vld [vmem:[%s1854 + $0x8] sm:$0xff]
        %v1857 = vld [vmem:[%s1854 + $0x10] sm:$0xff]
        %v1858 = vld [vmem:[%s1854 + $0x18] sm:$0xff]
        %v1859 = vpack.c.bf16 %v1856, %v1855
        %v1860 = vpack.c.bf16 %v1858, %v1857
        %v1862 = vsel %vm708, %v1859, 0
        %v1865 = vsel %vm708, %v1860, 0
        %1867 = vmatprep.subr.bf16.mxu0 0
        %1868 = vmatpush1.bf16.msra.mxu0 0
        %1869 = vmatprep.subr.bf16.mxu0 0
        %1870 = vmatpush1.bf16.msra.mxu0 0
        %1871 = vmatprep.subr.bf16.mxu0 0
        %1872 = vmatpush1.bf16.msra.mxu0 0
        %1873 = vmatprep.subr.bf16.mxu0 0
        %1874 = vmatpush1.bf16.msra.mxu0 0
        %1875 = vmatprep.subr.bf16.mxu0 0
        %1876 = vmatpush1.bf16.msra.mxu0 0
        %1877 = vmatprep.subr.bf16.mxu0 0
        %1878 = vmatpush1.bf16.msra.mxu0 0
        %1879 = vmatprep.subr.bf16.mxu0 0
        %1880 = vmatpush1.bf16.msra.mxu0 0
        %1881 = vmatprep.subr.bf16.mxu0 %v723
        %1882 = vmatpush1.bf16.msra.mxu0 %v720
        %1883 = vmatprep.subr.bf16.mxu0 0
        %1884 = vmatpush2.bf16.msra.mxu0 0
        %1885 = vmatprep.subr.bf16.mxu0 0
        %1886 = vmatpush2.bf16.msra.mxu0 0
        %1887 = vmatprep.subr.bf16.mxu0 0
        %1888 = vmatpush2.bf16.msra.mxu0 0
        %1889 = vmatprep.subr.bf16.mxu0 0
        %1890 = vmatpush2.bf16.msra.mxu0 0
        %1891 = vmatprep.subr.bf16.mxu0 0
        %1892 = vmatpush2.bf16.msra.mxu0 0
        %1893 = vmatprep.subr.bf16.mxu0 0
        %1894 = vmatpush2.bf16.msra.mxu0 0
        %1895 = vmatprep.subr.bf16.mxu0 0
        %1896 = vmatpush2.bf16.msra.mxu0 0
        %1897 = vmatprep.subr.bf16.mxu0 0
        %1898 = vmatpush2.bf16.msra.mxu0 0
        %1899 = vmatprep.mubr.bf16.mxu0 0
        %1900 = vmatmul.mubr.bf16.gmra.mxu0 %v1862
        %v1901 = vpop.f32.mrf.mxu0
        %v1902 = vadd.f32 %v639, %v1901
        %v1903 = vpop.f32.mrf.mxu0
        %v1904 = vadd.f32 %v643, %v1903
        %v1905 = vpop.f32.mrf.mxu0
        %v1906 = vadd.f32 %v639, %v1905
        %v1907 = vpop.f32.mrf.mxu0
        %v1908 = vadd.f32 %v643, %v1907
        %1909 = vmatprep.mubr.bf16.mxu0 0
        %1910 = vmatmul.mubr.bf16.gmra.mxu0 %v1865
        %v1911 = vpop.f32.mrf.mxu0
        %v1912 = vadd.f32 %v639, %v1911
        %v1913 = vpop.f32.mrf.mxu0
        %v1914 = vadd.f32 %v643, %v1913
        %v1915 = vpop.f32.mrf.mxu0
        %v1916 = vadd.f32 %v639, %v1915
        %v1917 = vpop.f32.mrf.mxu0
        %v1918 = vadd.f32 %v643, %v1917
        %1919 = vdwg.mxu0
        %1920 = vmatprep.subr.bf16.mxu0 0
        %1921 = vmatpush1.bf16.msra.mxu0 0
        %1922 = vmatprep.subr.bf16.mxu0 0
        %1923 = vmatpush1.bf16.msra.mxu0 0
        %1924 = vmatprep.subr.bf16.mxu0 0
        %1925 = vmatpush1.bf16.msra.mxu0 0
        %1926 = vmatprep.subr.bf16.mxu0 0
        %1927 = vmatpush1.bf16.msra.mxu0 0
        %1928 = vmatprep.subr.bf16.mxu0 0
        %1929 = vmatpush1.bf16.msra.mxu0 0
        %1930 = vmatprep.subr.bf16.mxu0 0
        %1931 = vmatpush1.bf16.msra.mxu0 0
        %1932 = vmatprep.subr.bf16.mxu0 0
        %1933 = vmatpush1.bf16.msra.mxu0 0
        %1934 = vmatprep.subr.bf16.mxu0 %v729
        %1935 = vmatpush1.bf16.msra.mxu0 %v726
        %1936 = vmatprep.subr.bf16.mxu0 0
        %1937 = vmatpush2.bf16.msra.mxu0 0
        %1938 = vmatprep.subr.bf16.mxu0 0
        %1939 = vmatpush2.bf16.msra.mxu0 0
        %1940 = vmatprep.subr.bf16.mxu0 0
        %1941 = vmatpush2.bf16.msra.mxu0 0
        %1942 = vmatprep.subr.bf16.mxu0 0
        %1943 = vmatpush2.bf16.msra.mxu0 0
        %1944 = vmatprep.subr.bf16.mxu0 0
        %1945 = vmatpush2.bf16.msra.mxu0 0
        %1946 = vmatprep.subr.bf16.mxu0 0
        %1947 = vmatpush2.bf16.msra.mxu0 0
        %1948 = vmatprep.subr.bf16.mxu0 0
        %1949 = vmatpush2.bf16.msra.mxu0 0
        %1950 = vmatprep.subr.bf16.mxu0 0
        %1951 = vmatpush2.bf16.msra.mxu0 0
        %1952 = vmatprep.mubr.bf16.mxu0 0
        %1953 = vmatmul.mubr.bf16.gmra.mxu0 %v1862
        %v1954 = vpop.f32.mrf.mxu0
        %v1955 = vadd.f32 %v647, %v1954
        %v1956 = vpop.f32.mrf.mxu0
        %v1957 = vadd.f32 %v651, %v1956
        %v1958 = vpop.f32.mrf.mxu0
        %v1959 = vadd.f32 %v647, %v1958
        %v1960 = vpop.f32.mrf.mxu0
        %v1961 = vadd.f32 %v651, %v1960
        %1962 = vmatprep.mubr.bf16.mxu0 0
        %1963 = vmatmul.mubr.bf16.gmra.mxu0 %v1865
        %v1964 = vpop.f32.mrf.mxu0
        %v1965 = vadd.f32 %v647, %v1964
        %v1966 = vpop.f32.mrf.mxu0
        %v1967 = vadd.f32 %v651, %v1966
        %v1968 = vpop.f32.mrf.mxu0
        %v1969 = vadd.f32 %v647, %v1968
        %v1970 = vpop.f32.mrf.mxu0
        %v1971 = vadd.f32 %v651, %v1970
        %1972 = vdwg.mxu0
        %1973 = vmatprep.subr.bf16.mxu0 0
        %1974 = vmatpush1.bf16.msra.mxu0 0
        %1975 = vmatprep.subr.bf16.mxu0 0
        %1976 = vmatpush1.bf16.msra.mxu0 0
        %1977 = vmatprep.subr.bf16.mxu0 0
        %1978 = vmatpush1.bf16.msra.mxu0 0
        %1979 = vmatprep.subr.bf16.mxu0 0
        %1980 = vmatpush1.bf16.msra.mxu0 0
        %1981 = vmatprep.subr.bf16.mxu0 0
        %1982 = vmatpush1.bf16.msra.mxu0 0
        %1983 = vmatprep.subr.bf16.mxu0 0
        %1984 = vmatpush1.bf16.msra.mxu0 0
        %1985 = vmatprep.subr.bf16.mxu0 0
        %1986 = vmatpush1.bf16.msra.mxu0 0
        %1987 = vmatprep.subr.bf16.mxu0 %v735
        %1988 = vmatpush1.bf16.msra.mxu0 %v732
        %1989 = vmatprep.subr.bf16.mxu0 0
        %1990 = vmatpush2.bf16.msra.mxu0 0
        %1991 = vmatprep.subr.bf16.mxu0 0
        %1992 = vmatpush2.bf16.msra.mxu0 0
        %1993 = vmatprep.subr.bf16.mxu0 0
        %1994 = vmatpush2.bf16.msra.mxu0 0
        %1995 = vmatprep.subr.bf16.mxu0 0
        %1996 = vmatpush2.bf16.msra.mxu0 0
        %1997 = vmatprep.subr.bf16.mxu0 0
        %1998 = vmatpush2.bf16.msra.mxu0 0
        %1999 = vmatprep.subr.bf16.mxu0 0
        %2000 = vmatpush2.bf16.msra.mxu0 0
        %2001 = vmatprep.subr.bf16.mxu0 0
        %2002 = vmatpush2.bf16.msra.mxu0 0
        %2003 = vmatprep.subr.bf16.mxu0 0
        %2004 = vmatpush2.bf16.msra.mxu0 0
        %2005 = vmatprep.mubr.bf16.mxu0 0
        %2006 = vmatmul.mubr.bf16.gmra.mxu0 %v1862
        %v2007 = vpop.f32.mrf.mxu0
        %v2008 = vadd.f32 %v655, %v2007
        %v2009 = vpop.f32.mrf.mxu0
        %v2010 = vadd.f32 %v659, %v2009
        %v2011 = vpop.f32.mrf.mxu0
        %v2012 = vadd.f32 %v655, %v2011
        %v2013 = vpop.f32.mrf.mxu0
        %v2014 = vadd.f32 %v659, %v2013
        %2015 = vmatprep.mubr.bf16.mxu0 0
        %2016 = vmatmul.mubr.bf16.gmra.mxu0 %v1865
        %v2017 = vpop.f32.mrf.mxu0
        %v2018 = vadd.f32 %v655, %v2017
        %v2019 = vpop.f32.mrf.mxu0
        %v2020 = vadd.f32 %v659, %v2019
        %v2021 = vpop.f32.mrf.mxu0
        %v2022 = vadd.f32 %v655, %v2021
        %v2023 = vpop.f32.mrf.mxu0
        %v2024 = vadd.f32 %v659, %v2023
        %2025 = vdwg.mxu0
        %2026 = vmatprep.subr.bf16.mxu0 0
        %2027 = vmatpush1.bf16.msra.mxu0 0
        %2028 = vmatprep.subr.bf16.mxu0 0
        %2029 = vmatpush1.bf16.msra.mxu0 0
        %2030 = vmatprep.subr.bf16.mxu0 0
        %2031 = vmatpush1.bf16.msra.mxu0 0
        %2032 = vmatprep.subr.bf16.mxu0 0
        %2033 = vmatpush1.bf16.msra.mxu0 0
        %2034 = vmatprep.subr.bf16.mxu0 0
        %2035 = vmatpush1.bf16.msra.mxu0 0
        %2036 = vmatprep.subr.bf16.mxu0 0
        %2037 = vmatpush1.bf16.msra.mxu0 0
        %2038 = vmatprep.subr.bf16.mxu0 0
        %2039 = vmatpush1.bf16.msra.mxu0 0
        %2040 = vmatprep.subr.bf16.mxu0 %v741
        %2041 = vmatpush1.bf16.msra.mxu0 %v738
        %2042 = vmatprep.subr.bf16.mxu0 0
        %2043 = vmatpush2.bf16.msra.mxu0 0
        %2044 = vmatprep.subr.bf16.mxu0 0
        %2045 = vmatpush2.bf16.msra.mxu0 0
        %2046 = vmatprep.subr.bf16.mxu0 0
        %2047 = vmatpush2.bf16.msra.mxu0 0
        %2048 = vmatprep.subr.bf16.mxu0 0
        %2049 = vmatpush2.bf16.msra.mxu0 0
        %2050 = vmatprep.subr.bf16.mxu0 0
        %2051 = vmatpush2.bf16.msra.mxu0 0
        %2052 = vmatprep.subr.bf16.mxu0 0
        %2053 = vmatpush2.bf16.msra.mxu0 0
        %2054 = vmatprep.subr.bf16.mxu0 0
        %2055 = vmatpush2.bf16.msra.mxu0 0
        %2056 = vmatprep.subr.bf16.mxu0 0
        %2057 = vmatpush2.bf16.msra.mxu0 0
        %2058 = vmatprep.mubr.bf16.mxu0 0
        %2059 = vmatmul.mubr.bf16.gmra.mxu0 %v1862
        %v2060 = vpop.f32.mrf.mxu0
        %v2061 = vadd.f32 %v663, %v2060
        %v2062 = vpop.f32.mrf.mxu0
        %v2063 = vadd.f32 %v667, %v2062
        %v2064 = vpop.f32.mrf.mxu0
        %v2065 = vadd.f32 %v663, %v2064
        %v2066 = vpop.f32.mrf.mxu0
        %v2067 = vadd.f32 %v667, %v2066
        %2068 = vmatprep.mubr.bf16.mxu0 0
        %2069 = vmatmul.mubr.bf16.gmra.mxu0 %v1865
        %v2070 = vpop.f32.mrf.mxu0
        %v2071 = vadd.f32 %v663, %v2070
        %v2072 = vpop.f32.mrf.mxu0
        %v2073 = vadd.f32 %v667, %v2072
        %v2074 = vpop.f32.mrf.mxu0
        %v2075 = vadd.f32 %v663, %v2074
        %v2076 = vpop.f32.mrf.mxu0
        %v2077 = vadd.f32 %v667, %v2076
        %2078 = vdwg.mxu0
        %v2207 = vunpack.c.l.b16 %v403
        %v2208 = vunpack.c.h.b16 %v403
        %v2209 = vunpack.c.l.b16 %v404
        %v2210 = vunpack.c.h.b16 %v404
        %v2211 = vunpack.c.l.b16 %v405
        %v2212 = vunpack.c.h.b16 %v405
        %v2213 = vunpack.c.l.b16 %v406
        %v2214 = vunpack.c.h.b16 %v406
        %v2215 = vunpack.c.l.b16 %v407
        %v2216 = vunpack.c.h.b16 %v407
        %v2217 = vunpack.c.l.b16 %v408
        %v2218 = vunpack.c.h.b16 %v408
        %v2219 = vunpack.c.l.b16 %v409
        %v2220 = vunpack.c.h.b16 %v409
        %v2221 = vunpack.c.l.b16 %v410
        %v2222 = vunpack.c.h.b16 %v410
        %v2223 = vunpack.c.l.b16 %v411
        %v2224 = vunpack.c.h.b16 %v411
        %v2225 = vunpack.c.l.b16 %v412
        %v2226 = vunpack.c.h.b16 %v412
        %v2227 = vunpack.c.l.b16 %v413
        %v2228 = vunpack.c.h.b16 %v413
        %v2229 = vunpack.c.l.b16 %v414
        %v2230 = vunpack.c.h.b16 %v414
        %v2231 = vunpack.c.l.b16 %v415
        %v2232 = vunpack.c.h.b16 %v415
        %v2233 = vunpack.c.l.b16 %v416
        %v2234 = vunpack.c.h.b16 %v416
        %v2235 = vunpack.c.l.b16 %v417
        %v2236 = vunpack.c.h.b16 %v417
        %v2237 = vunpack.c.l.b16 %v418
        %v2238 = vunpack.c.h.b16 %v418
        %v2239 = vunpack.c.l.b16 %v419
        %v2240 = vunpack.c.h.b16 %v419
        %v2241 = vunpack.c.l.b16 %v420
        %v2242 = vunpack.c.h.b16 %v420
        %v2243 = vunpack.c.l.b16 %v421
        %v2244 = vunpack.c.h.b16 %v421
        %v2245 = vunpack.c.l.b16 %v422
        %v2246 = vunpack.c.h.b16 %v422
        %v2247 = vunpack.c.l.b16 %v423
        %v2248 = vunpack.c.h.b16 %v423
        %v2249 = vunpack.c.l.b16 %v424
        %v2250 = vunpack.c.h.b16 %v424
        %v2251 = vunpack.c.l.b16 %v425
        %v2252 = vunpack.c.h.b16 %v425
        %v2253 = vunpack.c.l.b16 %v426
        %v2254 = vunpack.c.h.b16 %v426
        %v2255 = vunpack.c.l.b16 %v427
        %v2256 = vunpack.c.h.b16 %v427
        %v2257 = vunpack.c.l.b16 %v428
        %v2258 = vunpack.c.h.b16 %v428
        %v2259 = vunpack.c.l.b16 %v429
        %v2260 = vunpack.c.h.b16 %v429
        %v2261 = vunpack.c.l.b16 %v430
        %v2262 = vunpack.c.h.b16 %v430
        %v2263 = vunpack.c.l.b16 %v431
        %v2264 = vunpack.c.h.b16 %v431
        %v2265 = vunpack.c.l.b16 %v432
        %v2266 = vunpack.c.h.b16 %v432
        %v2267 = vunpack.c.l.b16 %v433
        %v2268 = vunpack.c.h.b16 %v433
        %v2269 = vunpack.c.l.b16 %v434
        %v2270 = vunpack.c.h.b16 %v434
        %v2271 = vunpack.c.l.b16 %v435
        %v2272 = vunpack.c.h.b16 %v435
        %v2273 = vunpack.c.l.b16 %v436
        %v2274 = vunpack.c.h.b16 %v436
        %v2275 = vunpack.c.l.b16 %v437
        %v2276 = vunpack.c.h.b16 %v437
        %v2277 = vunpack.c.l.b16 %v438
        %v2278 = vunpack.c.h.b16 %v438
        %v2279 = vunpack.c.l.b16 %v439
        %v2280 = vunpack.c.h.b16 %v439
        %v2281 = vunpack.c.l.b16 %v440
        %v2282 = vunpack.c.h.b16 %v440
        %v2283 = vunpack.c.l.b16 %v441
        %v2284 = vunpack.c.h.b16 %v441
        %v2285 = vunpack.c.l.b16 %v442
        %v2286 = vunpack.c.h.b16 %v442
        %v2287 = vunpack.c.l.b16 %v443
        %v2288 = vunpack.c.h.b16 %v443
        %v2289 = vunpack.c.l.b16 %v444
        %v2290 = vunpack.c.h.b16 %v444
        %v2291 = vunpack.c.l.b16 %v445
        %v2292 = vunpack.c.h.b16 %v445
        %v2293 = vunpack.c.l.b16 %v446
        %v2294 = vunpack.c.h.b16 %v446
        %v2295 = vunpack.c.l.b16 %v447
        %v2296 = vunpack.c.h.b16 %v447
        %v2297 = vunpack.c.l.b16 %v448
        %v2298 = vunpack.c.h.b16 %v448
        %v2299 = vunpack.c.l.b16 %v449
        %v2300 = vunpack.c.h.b16 %v449
        %v2301 = vunpack.c.l.b16 %v450
        %v2302 = vunpack.c.h.b16 %v450
        %v2303 = vunpack.c.l.b16 %v451
        %v2304 = vunpack.c.h.b16 %v451
        %v2305 = vunpack.c.l.b16 %v452
        %v2306 = vunpack.c.h.b16 %v452
        %v2307 = vunpack.c.l.b16 %v453
        %v2308 = vunpack.c.h.b16 %v453
        %v2309 = vunpack.c.l.b16 %v454
        %v2310 = vunpack.c.h.b16 %v454
        %v2311 = vunpack.c.l.b16 %v455
        %v2312 = vunpack.c.h.b16 %v455
        %v2313 = vunpack.c.l.b16 %v456
        %v2314 = vunpack.c.h.b16 %v456
        %v2315 = vunpack.c.l.b16 %v457
        %v2316 = vunpack.c.h.b16 %v457
        %v2317 = vunpack.c.l.b16 %v458
        %v2318 = vunpack.c.h.b16 %v458
        %v2319 = vunpack.c.l.b16 %v459
        %v2320 = vunpack.c.h.b16 %v459
        %v2321 = vunpack.c.l.b16 %v460
        %v2322 = vunpack.c.h.b16 %v460
        %v2323 = vunpack.c.l.b16 %v461
        %v2324 = vunpack.c.h.b16 %v461
        %v2325 = vunpack.c.l.b16 %v462
        %v2326 = vunpack.c.h.b16 %v462
        %v2327 = vunpack.c.l.b16 %v463
        %v2328 = vunpack.c.h.b16 %v463
        %v2329 = vunpack.c.l.b16 %v464
        %v2330 = vunpack.c.h.b16 %v464
        %v2331 = vunpack.c.l.b16 %v465
        %v2332 = vunpack.c.h.b16 %v465
        %v2333 = vunpack.c.l.b16 %v466
        %v2334 = vunpack.c.h.b16 %v466
        %v2335 = vunpack.c.l.b16 %v467
        %v2336 = vunpack.c.h.b16 %v467
        %v2337 = vunpack.c.l.b16 %v468
        %v2338 = vunpack.c.h.b16 %v468
        %v2339 = vunpack.c.l.b16 %v469
        %v2340 = vunpack.c.h.b16 %v469
        %v2341 = vunpack.c.l.b16 %v470
        %v2342 = vunpack.c.h.b16 %v470
        %v2343 = vunpack.c.l.b16 %v471
        %v2344 = vunpack.c.h.b16 %v471
        %v2345 = vunpack.c.l.b16 %v472
        %v2346 = vunpack.c.h.b16 %v472
        %v2347 = vunpack.c.l.b16 %v473
        %v2348 = vunpack.c.h.b16 %v473
        %v2349 = vunpack.c.l.b16 %v474
        %v2350 = vunpack.c.h.b16 %v474
        %v2351 = vunpack.c.l.b16 %v475
        %v2352 = vunpack.c.h.b16 %v475
        %v2353 = vunpack.c.l.b16 %v476
        %v2354 = vunpack.c.h.b16 %v476
        %v2355 = vunpack.c.l.b16 %v477
        %v2356 = vunpack.c.h.b16 %v477
        %v2357 = vunpack.c.l.b16 %v478
        %v2358 = vunpack.c.h.b16 %v478
        %v2359 = vunpack.c.l.b16 %v479
        %v2360 = vunpack.c.h.b16 %v479
        %v2361 = vunpack.c.l.b16 %v480
        %v2362 = vunpack.c.h.b16 %v480
        %v2363 = vunpack.c.l.b16 %v481
        %v2364 = vunpack.c.h.b16 %v481
        %v2365 = vunpack.c.l.b16 %v482
        %v2366 = vunpack.c.h.b16 %v482
        %v2367 = vunpack.c.l.b16 %v483
        %v2368 = vunpack.c.h.b16 %v483
        %v2369 = vunpack.c.l.b16 %v484
        %v2370 = vunpack.c.h.b16 %v484
        %v2371 = vunpack.c.l.b16 %v485
        %v2372 = vunpack.c.h.b16 %v485
        %v2373 = vunpack.c.l.b16 %v486
        %v2374 = vunpack.c.h.b16 %v486
        %v2375 = vunpack.c.l.b16 %v487
        %v2376 = vunpack.c.h.b16 %v487
        %v2377 = vunpack.c.l.b16 %v488
        %v2378 = vunpack.c.h.b16 %v488
        %v2379 = vunpack.c.l.b16 %v489
        %v2380 = vunpack.c.h.b16 %v489
        %v2381 = vunpack.c.l.b16 %v490
        %v2382 = vunpack.c.h.b16 %v490
        %v2383 = vunpack.c.l.b16 %v491
        %v2384 = vunpack.c.h.b16 %v491
        %v2385 = vunpack.c.l.b16 %v492
        %v2386 = vunpack.c.h.b16 %v492
        %v2387 = vunpack.c.l.b16 %v493
        %v2388 = vunpack.c.h.b16 %v493
        %v2389 = vunpack.c.l.b16 %v494
        %v2390 = vunpack.c.h.b16 %v494
        %v2391 = vunpack.c.l.b16 %v495
        %v2392 = vunpack.c.h.b16 %v495
        %v2393 = vunpack.c.l.b16 %v496
        %v2394 = vunpack.c.h.b16 %v496
        %v2395 = vunpack.c.l.b16 %v497
        %v2396 = vunpack.c.h.b16 %v497
        %v2397 = vunpack.c.l.b16 %v498
        %v2398 = vunpack.c.h.b16 %v498
        %v2399 = vunpack.c.l.b16 %v499
        %v2400 = vunpack.c.h.b16 %v499
        %v2401 = vunpack.c.l.b16 %v500
        %v2402 = vunpack.c.h.b16 %v500
        %v2403 = vunpack.c.l.b16 %v501
        %v2404 = vunpack.c.h.b16 %v501
        %v2405 = vunpack.c.l.b16 %v502
        %v2406 = vunpack.c.h.b16 %v502
        %v2407 = vunpack.c.l.b16 %v503
        %v2408 = vunpack.c.h.b16 %v503
        %v2409 = vunpack.c.l.b16 %v504
        %v2410 = vunpack.c.h.b16 %v504
        %v2411 = vunpack.c.l.b16 %v505
        %v2412 = vunpack.c.h.b16 %v505
        %v2413 = vunpack.c.l.b16 %v506
        %v2414 = vunpack.c.h.b16 %v506
        %v2415 = vunpack.c.l.b16 %v507
        %v2416 = vunpack.c.h.b16 %v507
        %v2417 = vunpack.c.l.b16 %v508
        %v2418 = vunpack.c.h.b16 %v508
        %v2419 = vunpack.c.l.b16 %v509
        %v2420 = vunpack.c.h.b16 %v509
        %v2421 = vunpack.c.l.b16 %v510
        %v2422 = vunpack.c.h.b16 %v510
        %v2423 = vunpack.c.l.b16 %v511
        %v2424 = vunpack.c.h.b16 %v511
        %v2425 = vunpack.c.l.b16 %v512
        %v2426 = vunpack.c.h.b16 %v512
        %v2427 = vunpack.c.l.b16 %v513
        %v2428 = vunpack.c.h.b16 %v513
        %v2429 = vunpack.c.l.b16 %v514
        %v2430 = vunpack.c.h.b16 %v514
        %v2431 = vunpack.c.l.b16 %v515
        %v2432 = vunpack.c.h.b16 %v515
        %v2433 = vunpack.c.l.b16 %v516
        %v2434 = vunpack.c.h.b16 %v516
        %v2435 = vunpack.c.l.b16 %v517
        %v2436 = vunpack.c.h.b16 %v517
        %v2437 = vunpack.c.l.b16 %v518
        %v2438 = vunpack.c.h.b16 %v518
        %v2439 = vunpack.c.l.b16 %v519
        %v2440 = vunpack.c.h.b16 %v519
        %v2441 = vunpack.c.l.b16 %v520
        %v2442 = vunpack.c.h.b16 %v520
        %v2443 = vunpack.c.l.b16 %v521
        %v2444 = vunpack.c.h.b16 %v521
        %v2445 = vunpack.c.l.b16 %v522
        %v2446 = vunpack.c.h.b16 %v522
        %v2447 = vunpack.c.l.b16 %v523
        %v2448 = vunpack.c.h.b16 %v523
        %v2449 = vunpack.c.l.b16 %v524
        %v2450 = vunpack.c.h.b16 %v524
        %v2451 = vunpack.c.l.b16 %v525
        %v2452 = vunpack.c.h.b16 %v525
        %v2453 = vunpack.c.l.b16 %v526
        %v2454 = vunpack.c.h.b16 %v526
        %v2455 = vunpack.c.l.b16 %v527
        %v2456 = vunpack.c.h.b16 %v527
        %v2457 = vunpack.c.l.b16 %v528
        %v2458 = vunpack.c.h.b16 %v528
        %v2459 = vunpack.c.l.b16 %v529
        %v2460 = vunpack.c.h.b16 %v529
        %v2461 = vunpack.c.l.b16 %v530
        %v2462 = vunpack.c.h.b16 %v530
        %v2463 = vpack.c.b16 %v2215, %v2207
        %v2464 = vpack.c.b16 %v2216, %v2208
        %v2465 = vpack.c.b16 %v2217, %v2209
        %v2466 = vpack.c.b16 %v2218, %v2210
        %v2467 = vpack.c.b16 %v2219, %v2211
        %v2468 = vpack.c.b16 %v2220, %v2212
        %v2469 = vpack.c.b16 %v2221, %v2213
        %v2470 = vpack.c.b16 %v2222, %v2214
        %v2471 = vpack.c.b16 %v2231, %v2223
        %v2472 = vpack.c.b16 %v2232, %v2224
        %v2473 = vpack.c.b16 %v2233, %v2225
        %v2474 = vpack.c.b16 %v2234, %v2226
        %v2475 = vpack.c.b16 %v2235, %v2227
        %v2476 = vpack.c.b16 %v2236, %v2228
        %v2477 = vpack.c.b16 %v2237, %v2229
        %v2478 = vpack.c.b16 %v2238, %v2230
        %v2479 = vpack.c.b16 %v2247, %v2239
        %v2480 = vpack.c.b16 %v2248, %v2240
        %v2481 = vpack.c.b16 %v2249, %v2241
        %v2482 = vpack.c.b16 %v2250, %v2242
        %v2483 = vpack.c.b16 %v2251, %v2243
        %v2484 = vpack.c.b16 %v2252, %v2244
        %v2485 = vpack.c.b16 %v2253, %v2245
        %v2486 = vpack.c.b16 %v2254, %v2246
        %v2487 = vpack.c.b16 %v2263, %v2255
        %v2488 = vpack.c.b16 %v2264, %v2256
        %v2489 = vpack.c.b16 %v2265, %v2257
        %v2490 = vpack.c.b16 %v2266, %v2258
        %v2491 = vpack.c.b16 %v2267, %v2259
        %v2492 = vpack.c.b16 %v2268, %v2260
        %v2493 = vpack.c.b16 %v2269, %v2261
        %v2494 = vpack.c.b16 %v2270, %v2262
        %v2495 = vpack.c.b16 %v2279, %v2271
        %v2496 = vpack.c.b16 %v2280, %v2272
        %v2497 = vpack.c.b16 %v2281, %v2273
        %v2498 = vpack.c.b16 %v2282, %v2274
        %v2499 = vpack.c.b16 %v2283, %v2275
        %v2500 = vpack.c.b16 %v2284, %v2276
        %v2501 = vpack.c.b16 %v2285, %v2277
        %v2502 = vpack.c.b16 %v2286, %v2278
        %v2503 = vpack.c.b16 %v2295, %v2287
        %v2504 = vpack.c.b16 %v2296, %v2288
        %v2505 = vpack.c.b16 %v2297, %v2289
        %v2506 = vpack.c.b16 %v2298, %v2290
        %v2507 = vpack.c.b16 %v2299, %v2291
        %v2508 = vpack.c.b16 %v2300, %v2292
        %v2509 = vpack.c.b16 %v2301, %v2293
        %v2510 = vpack.c.b16 %v2302, %v2294
        %v2511 = vpack.c.b16 %v2311, %v2303
        %v2512 = vpack.c.b16 %v2312, %v2304
        %v2513 = vpack.c.b16 %v2313, %v2305
        %v2514 = vpack.c.b16 %v2314, %v2306
        %v2515 = vpack.c.b16 %v2315, %v2307
        %v2516 = vpack.c.b16 %v2316, %v2308
        %v2517 = vpack.c.b16 %v2317, %v2309
        %v2518 = vpack.c.b16 %v2318, %v2310
        %v2519 = vpack.c.b16 %v2327, %v2319
        %v2520 = vpack.c.b16 %v2328, %v2320
        %v2521 = vpack.c.b16 %v2329, %v2321
        %v2522 = vpack.c.b16 %v2330, %v2322
        %v2523 = vpack.c.b16 %v2331, %v2323
        %v2524 = vpack.c.b16 %v2332, %v2324
        %v2525 = vpack.c.b16 %v2333, %v2325
        %v2526 = vpack.c.b16 %v2334, %v2326
        %v2527 = vpack.c.b16 %v2343, %v2335
        %v2528 = vpack.c.b16 %v2344, %v2336
        %v2529 = vpack.c.b16 %v2345, %v2337
        %v2530 = vpack.c.b16 %v2346, %v2338
        %v2531 = vpack.c.b16 %v2347, %v2339
        %v2532 = vpack.c.b16 %v2348, %v2340
        %v2533 = vpack.c.b16 %v2349, %v2341
        %v2534 = vpack.c.b16 %v2350, %v2342
        %v2535 = vpack.c.b16 %v2359, %v2351
        %v2536 = vpack.c.b16 %v2360, %v2352
        %v2537 = vpack.c.b16 %v2361, %v2353
        %v2538 = vpack.c.b16 %v2362, %v2354
        %v2539 = vpack.c.b16 %v2363, %v2355
        %v2540 = vpack.c.b16 %v2364, %v2356
        %v2541 = vpack.c.b16 %v2365, %v2357
        %v2542 = vpack.c.b16 %v2366, %v2358
        %v2543 = vpack.c.b16 %v2375, %v2367
        %v2544 = vpack.c.b16 %v2376, %v2368
        %v2545 = vpack.c.b16 %v2377, %v2369
        %v2546 = vpack.c.b16 %v2378, %v2370
        %v2547 = vpack.c.b16 %v2379, %v2371
        %v2548 = vpack.c.b16 %v2380, %v2372
        %v2549 = vpack.c.b16 %v2381, %v2373
        %v2550 = vpack.c.b16 %v2382, %v2374
        %v2551 = vpack.c.b16 %v2391, %v2383
        %v2552 = vpack.c.b16 %v2392, %v2384
        %v2553 = vpack.c.b16 %v2393, %v2385
        %v2554 = vpack.c.b16 %v2394, %v2386
        %v2555 = vpack.c.b16 %v2395, %v2387
        %v2556 = vpack.c.b16 %v2396, %v2388
        %v2557 = vpack.c.b16 %v2397, %v2389
        %v2558 = vpack.c.b16 %v2398, %v2390
        %v2559 = vpack.c.b16 %v2407, %v2399
        %v2560 = vpack.c.b16 %v2408, %v2400
        %v2561 = vpack.c.b16 %v2409, %v2401
        %v2562 = vpack.c.b16 %v2410, %v2402
        %v2563 = vpack.c.b16 %v2411, %v2403
        %v2564 = vpack.c.b16 %v2412, %v2404
        %v2565 = vpack.c.b16 %v2413, %v2405
        %v2566 = vpack.c.b16 %v2414, %v2406
        %v2567 = vpack.c.b16 %v2423, %v2415
        %v2568 = vpack.c.b16 %v2424, %v2416
        %v2569 = vpack.c.b16 %v2425, %v2417
        %v2570 = vpack.c.b16 %v2426, %v2418
        %v2571 = vpack.c.b16 %v2427, %v2419
        %v2572 = vpack.c.b16 %v2428, %v2420
        %v2573 = vpack.c.b16 %v2429, %v2421
        %v2574 = vpack.c.b16 %v2430, %v2422
        %v2575 = vpack.c.b16 %v2439, %v2431
        %v2576 = vpack.c.b16 %v2440, %v2432
        %v2577 = vpack.c.b16 %v2441, %v2433
        %v2578 = vpack.c.b16 %v2442, %v2434
        %v2579 = vpack.c.b16 %v2443, %v2435
        %v2580 = vpack.c.b16 %v2444, %v2436
        %v2581 = vpack.c.b16 %v2445, %v2437
        %v2582 = vpack.c.b16 %v2446, %v2438
        %v2583 = vpack.c.b16 %v2455, %v2447
        %v2584 = vpack.c.b16 %v2456, %v2448
        %v2585 = vpack.c.b16 %v2457, %v2449
        %v2586 = vpack.c.b16 %v2458, %v2450
        %v2587 = vpack.c.b16 %v2459, %v2451
        %v2588 = vpack.c.b16 %v2460, %v2452
        %v2589 = vpack.c.b16 %v2461, %v2453
        %v2590 = vpack.c.b16 %v2462, %v2454
        %2719 = vmatprep.subr.bf16.mxu0 %v2520
        %2720 = vmatpush1.bf16.msra.mxu0 %v2519
        %2721 = vmatprep.subr.bf16.mxu0 %v2512
        %2722 = vmatpush1.bf16.msra.mxu0 %v2511
        %2723 = vmatprep.subr.bf16.mxu0 %v2504
        %2724 = vmatpush1.bf16.msra.mxu0 %v2503
        %2725 = vmatprep.subr.bf16.mxu0 %v2496
        %2726 = vmatpush1.bf16.msra.mxu0 %v2495
        %2727 = vmatprep.subr.bf16.mxu0 %v2488
        %2728 = vmatpush1.bf16.msra.mxu0 %v2487
        %2729 = vmatprep.subr.bf16.mxu0 %v2480
        %2730 = vmatpush1.bf16.msra.mxu0 %v2479
        %2731 = vmatprep.subr.bf16.mxu0 %v2472
        %2732 = vmatpush1.bf16.msra.mxu0 %v2471
        %2733 = vmatprep.subr.bf16.mxu0 %v2464
        %2734 = vmatpush1.bf16.msra.mxu0 %v2463
        %2735 = vmatprep.subr.bf16.mxu0 %v2584
        %2736 = vmatpush2.bf16.msra.mxu0 %v2583
        %2737 = vmatprep.subr.bf16.mxu0 %v2576
        %2738 = vmatpush2.bf16.msra.mxu0 %v2575
        %2739 = vmatprep.subr.bf16.mxu0 %v2568
        %2740 = vmatpush2.bf16.msra.mxu0 %v2567
        %2741 = vmatprep.subr.bf16.mxu0 %v2560
        %2742 = vmatpush2.bf16.msra.mxu0 %v2559
        %2743 = vmatprep.subr.bf16.mxu0 %v2552
        %2744 = vmatpush2.bf16.msra.mxu0 %v2551
        %2745 = vmatprep.subr.bf16.mxu0 %v2544
        %2746 = vmatpush2.bf16.msra.mxu0 %v2543
        %2747 = vmatprep.subr.bf16.mxu0 %v2536
        %2748 = vmatpush2.bf16.msra.mxu0 %v2535
        %2749 = vmatprep.subr.bf16.mxu0 %v2528
        %2750 = vmatpush2.bf16.msra.mxu0 %v2527
        %2751 = vmatprep.mubr.bf16.mxu0 %v1076
        %2752 = vmatmul.mubr.bf16.gmra.mxu0 %v1075
        %v2753 = vpop.f32.mrf.mxu0
        %v2754 = vadd.f32 0.0, %v2753
        %v2755 = vpop.f32.mrf.mxu0
        %v2756 = vadd.f32 0.0, %v2755
        %v2757 = vpop.f32.mrf.mxu0
        %v2758 = vadd.f32 0.0, %v2757
        %v2759 = vpop.f32.mrf.mxu0
        %v2760 = vadd.f32 0.0, %v2759
        %2761 = vmatprep.mubr.bf16.mxu0 %v1078
        %2762 = vmatmul.mubr.bf16.gmra.mxu0 %v1077
        %v2763 = vpop.f32.mrf.mxu0
        %v2764 = vadd.f32 0.0, %v2763
        %v2765 = vpop.f32.mrf.mxu0
        %v2766 = vadd.f32 0.0, %v2765
        %v2767 = vpop.f32.mrf.mxu0
        %v2768 = vadd.f32 0.0, %v2767
        %v2769 = vpop.f32.mrf.mxu0
        %v2770 = vadd.f32 0.0, %v2769
        %2771 = vdwg.mxu0
        %2772 = vmatprep.subr.bf16.mxu0 %v2522
        %2773 = vmatpush1.bf16.msra.mxu0 %v2521
        %2774 = vmatprep.subr.bf16.mxu0 %v2514
        %2775 = vmatpush1.bf16.msra.mxu0 %v2513
        %2776 = vmatprep.subr.bf16.mxu0 %v2506
        %2777 = vmatpush1.bf16.msra.mxu0 %v2505
        %2778 = vmatprep.subr.bf16.mxu0 %v2498
        %2779 = vmatpush1.bf16.msra.mxu0 %v2497
        %2780 = vmatprep.subr.bf16.mxu0 %v2490
        %2781 = vmatpush1.bf16.msra.mxu0 %v2489
        %2782 = vmatprep.subr.bf16.mxu0 %v2482
        %2783 = vmatpush1.bf16.msra.mxu0 %v2481
        %2784 = vmatprep.subr.bf16.mxu0 %v2474
        %2785 = vmatpush1.bf16.msra.mxu0 %v2473
        %2786 = vmatprep.subr.bf16.mxu0 %v2466
        %2787 = vmatpush1.bf16.msra.mxu0 %v2465
        %2788 = vmatprep.subr.bf16.mxu0 %v2586
        %2789 = vmatpush2.bf16.msra.mxu0 %v2585
        %2790 = vmatprep.subr.bf16.mxu0 %v2578
        %2791 = vmatpush2.bf16.msra.mxu0 %v2577
        %2792 = vmatprep.subr.bf16.mxu0 %v2570
        %2793 = vmatpush2.bf16.msra.mxu0 %v2569
        %2794 = vmatprep.subr.bf16.mxu0 %v2562
        %2795 = vmatpush2.bf16.msra.mxu0 %v2561
        %2796 = vmatprep.subr.bf16.mxu0 %v2554
        %2797 = vmatpush2.bf16.msra.mxu0 %v2553
        %2798 = vmatprep.subr.bf16.mxu0 %v2546
        %2799 = vmatpush2.bf16.msra.mxu0 %v2545
        %2800 = vmatprep.subr.bf16.mxu0 %v2538
        %2801 = vmatpush2.bf16.msra.mxu0 %v2537
        %2802 = vmatprep.subr.bf16.mxu0 %v2530
        %2803 = vmatpush2.bf16.msra.mxu0 %v2529
        %2804 = vmatprep.mubr.bf16.mxu0 %v1076
        %2805 = vmatmul.mubr.bf16.gmra.mxu0 %v1075
        %v2806 = vpop.f32.mrf.mxu0
        %v2807 = vadd.f32 0.0, %v2806
        %v2808 = vpop.f32.mrf.mxu0
        %v2809 = vadd.f32 0.0, %v2808
        %v2810 = vpop.f32.mrf.mxu0
        %v2811 = vadd.f32 0.0, %v2810
        %v2812 = vpop.f32.mrf.mxu0
        %v2813 = vadd.f32 0.0, %v2812
        %2814 = vmatprep.mubr.bf16.mxu0 %v1078
        %2815 = vmatmul.mubr.bf16.gmra.mxu0 %v1077
        %v2816 = vpop.f32.mrf.mxu0
        %v2817 = vadd.f32 0.0, %v2816
        %v2818 = vpop.f32.mrf.mxu0
        %v2819 = vadd.f32 0.0, %v2818
        %v2820 = vpop.f32.mrf.mxu0
        %v2821 = vadd.f32 0.0, %v2820
        %v2822 = vpop.f32.mrf.mxu0
        %v2823 = vadd.f32 0.0, %v2822
        %2824 = vdwg.mxu0
        %2825 = vmatprep.subr.bf16.mxu0 %v2524
        %2826 = vmatpush1.bf16.msra.mxu0 %v2523
        %2827 = vmatprep.subr.bf16.mxu0 %v2516
        %2828 = vmatpush1.bf16.msra.mxu0 %v2515
        %2829 = vmatprep.subr.bf16.mxu0 %v2508
        %2830 = vmatpush1.bf16.msra.mxu0 %v2507
        %2831 = vmatprep.subr.bf16.mxu0 %v2500
        %2832 = vmatpush1.bf16.msra.mxu0 %v2499
        %2833 = vmatprep.subr.bf16.mxu0 %v2492
        %2834 = vmatpush1.bf16.msra.mxu0 %v2491
        %2835 = vmatprep.subr.bf16.mxu0 %v2484
        %2836 = vmatpush1.bf16.msra.mxu0 %v2483
        %2837 = vmatprep.subr.bf16.mxu0 %v2476
        %2838 = vmatpush1.bf16.msra.mxu0 %v2475
        %2839 = vmatprep.subr.bf16.mxu0 %v2468
        %2840 = vmatpush1.bf16.msra.mxu0 %v2467
        %2841 = vmatprep.subr.bf16.mxu0 %v2588
        %2842 = vmatpush2.bf16.msra.mxu0 %v2587
        %2843 = vmatprep.subr.bf16.mxu0 %v2580
        %2844 = vmatpush2.bf16.msra.mxu0 %v2579
        %2845 = vmatprep.subr.bf16.mxu0 %v2572
        %2846 = vmatpush2.bf16.msra.mxu0 %v2571
        %2847 = vmatprep.subr.bf16.mxu0 %v2564
        %2848 = vmatpush2.bf16.msra.mxu0 %v2563
        %2849 = vmatprep.subr.bf16.mxu0 %v2556
        %2850 = vmatpush2.bf16.msra.mxu0 %v2555
        %2851 = vmatprep.subr.bf16.mxu0 %v2548
        %2852 = vmatpush2.bf16.msra.mxu0 %v2547
        %2853 = vmatprep.subr.bf16.mxu0 %v2540
        %2854 = vmatpush2.bf16.msra.mxu0 %v2539
        %2855 = vmatprep.subr.bf16.mxu0 %v2532
        %2856 = vmatpush2.bf16.msra.mxu0 %v2531
        %2857 = vmatprep.mubr.bf16.mxu0 %v1076
        %2858 = vmatmul.mubr.bf16.gmra.mxu0 %v1075
        %v2859 = vpop.f32.mrf.mxu0
        %v2860 = vadd.f32 0.0, %v2859
        %v2861 = vpop.f32.mrf.mxu0
        %v2862 = vadd.f32 0.0, %v2861
        %v2863 = vpop.f32.mrf.mxu0
        %v2864 = vadd.f32 0.0, %v2863
        %v2865 = vpop.f32.mrf.mxu0
        %v2866 = vadd.f32 0.0, %v2865
        %2867 = vmatprep.mubr.bf16.mxu0 %v1078
        %2868 = vmatmul.mubr.bf16.gmra.mxu0 %v1077
        %v2869 = vpop.f32.mrf.mxu0
        %v2870 = vadd.f32 0.0, %v2869
        %v2871 = vpop.f32.mrf.mxu0
        %v2872 = vadd.f32 0.0, %v2871
        %v2873 = vpop.f32.mrf.mxu0
        %v2874 = vadd.f32 0.0, %v2873
        %v2875 = vpop.f32.mrf.mxu0
        %v2876 = vadd.f32 0.0, %v2875
        %2877 = vdwg.mxu0
        %2878 = vmatprep.subr.bf16.mxu0 %v2526
        %2879 = vmatpush1.bf16.msra.mxu0 %v2525
        %2880 = vmatprep.subr.bf16.mxu0 %v2518
        %2881 = vmatpush1.bf16.msra.mxu0 %v2517
        %2882 = vmatprep.subr.bf16.mxu0 %v2510
        %2883 = vmatpush1.bf16.msra.mxu0 %v2509
        %2884 = vmatprep.subr.bf16.mxu0 %v2502
        %2885 = vmatpush1.bf16.msra.mxu0 %v2501
        %2886 = vmatprep.subr.bf16.mxu0 %v2494
        %2887 = vmatpush1.bf16.msra.mxu0 %v2493
        %2888 = vmatprep.subr.bf16.mxu0 %v2486
        %2889 = vmatpush1.bf16.msra.mxu0 %v2485
        %2890 = vmatprep.subr.bf16.mxu0 %v2478
        %2891 = vmatpush1.bf16.msra.mxu0 %v2477
        %2892 = vmatprep.subr.bf16.mxu0 %v2470
        %2893 = vmatpush1.bf16.msra.mxu0 %v2469
        %2894 = vmatprep.subr.bf16.mxu0 %v2590
        %2895 = vmatpush2.bf16.msra.mxu0 %v2589
        %2896 = vmatprep.subr.bf16.mxu0 %v2582
        %2897 = vmatpush2.bf16.msra.mxu0 %v2581
        %2898 = vmatprep.subr.bf16.mxu0 %v2574
        %2899 = vmatpush2.bf16.msra.mxu0 %v2573
        %2900 = vmatprep.subr.bf16.mxu0 %v2566
        %2901 = vmatpush2.bf16.msra.mxu0 %v2565
        %2902 = vmatprep.subr.bf16.mxu0 %v2558
        %2903 = vmatpush2.bf16.msra.mxu0 %v2557
        %2904 = vmatprep.subr.bf16.mxu0 %v2550
        %2905 = vmatpush2.bf16.msra.mxu0 %v2549
        %2906 = vmatprep.subr.bf16.mxu0 %v2542
        %2907 = vmatpush2.bf16.msra.mxu0 %v2541
        %2908 = vmatprep.subr.bf16.mxu0 %v2534
        %2909 = vmatpush2.bf16.msra.mxu0 %v2533
        %2910 = vmatprep.mubr.bf16.mxu0 %v1076
        %2911 = vmatmul.mubr.bf16.gmra.mxu0 %v1075
        %v2912 = vpop.f32.mrf.mxu0
        %v2913 = vadd.f32 0.0, %v2912
        %v2914 = vpop.f32.mrf.mxu0
        %v2915 = vadd.f32 0.0, %v2914
        %v2916 = vpop.f32.mrf.mxu0
        %v2917 = vadd.f32 0.0, %v2916
        %v2918 = vpop.f32.mrf.mxu0
        %v2919 = vadd.f32 0.0, %v2918
        %2920 = vmatprep.mubr.bf16.mxu0 %v1078
        %2921 = vmatmul.mubr.bf16.gmra.mxu0 %v1077
        %v2922 = vpop.f32.mrf.mxu0
        %v2923 = vadd.f32 0.0, %v2922
        %v2924 = vpop.f32.mrf.mxu0
        %v2925 = vadd.f32 0.0, %v2924
        %v2926 = vpop.f32.mrf.mxu0
        %v2927 = vadd.f32 0.0, %v2926
        %v2928 = vpop.f32.mrf.mxu0
        %v2929 = vadd.f32 0.0, %v2928
        %2930 = vdwg.mxu0
        %v2931 = vadd.f32 %v1902, %v2754
        %v2932 = vadd.f32 %v1904, %v2756
        %v2933 = vadd.f32 %v1955, %v2807
        %v2934 = vadd.f32 %v1957, %v2809
        %v2935 = vadd.f32 %v2008, %v2860
        %v2936 = vadd.f32 %v2010, %v2862
        %v2937 = vadd.f32 %v2061, %v2913
        %v2938 = vadd.f32 %v2063, %v2915
        %v2939 = vadd.f32 %v1906, %v2758
        %v2940 = vadd.f32 %v1908, %v2760
        %v2941 = vadd.f32 %v1959, %v2811
        %v2942 = vadd.f32 %v1961, %v2813
        %v2943 = vadd.f32 %v2012, %v2864
        %v2944 = vadd.f32 %v2014, %v2866
        %v2945 = vadd.f32 %v2065, %v2917
        %v2946 = vadd.f32 %v2067, %v2919
        %v2947 = vadd.f32 %v1912, %v2764
        %v2948 = vadd.f32 %v1914, %v2766
        %v2949 = vadd.f32 %v1965, %v2817
        %v2950 = vadd.f32 %v1967, %v2819
        %v2951 = vadd.f32 %v2018, %v2870
        %v2952 = vadd.f32 %v2020, %v2872
        %v2953 = vadd.f32 %v2071, %v2923
        %v2954 = vadd.f32 %v2073, %v2925
        %v2955 = vadd.f32 %v1916, %v2768
        %v2956 = vadd.f32 %v1918, %v2770
        %v2957 = vadd.f32 %v1969, %v2821
        %v2958 = vadd.f32 %v1971, %v2823
        %v2959 = vadd.f32 %v2022, %v2874
        %v2960 = vadd.f32 %v2024, %v2876
        %v2961 = vadd.f32 %v2075, %v2927
        %v2962 = vadd.f32 %v2077, %v2929
        %v2963 = vtanh.pop %v2931
        %v2964 = vtanh.pop %v2932
        %v2965 = vtanh.pop %v2939
        %v2966 = vtanh.pop %v2940
        %v2967 = vtanh.pop %v2947
        %v2968 = vtanh.pop %v2948
        %v2969 = vtanh.pop %v2955
        %v2970 = vtanh.pop %v2956
        %v2971 = vmul.f32 %v2963, 0.5
        %v2972 = vmul.f32 %v2964, 0.5
        %v2973 = vmul.f32 %v2965, 0.5
        %v2974 = vmul.f32 %v2966, 0.5
        %v2975 = vmul.f32 %v2967, 0.5
        %v2976 = vmul.f32 %v2968, 0.5
        %v2977 = vmul.f32 %v2969, 0.5
        %v2978 = vmul.f32 %v2970, 0.5
        %v2979 = vadd.f32 %v2971, 0.5
        %v2980 = vadd.f32 %v2972, 0.5
        %v2981 = vadd.f32 %v2973, 0.5
        %v2982 = vadd.f32 %v2974, 0.5
        %v2983 = vadd.f32 %v2975, 0.5
        %v2984 = vadd.f32 %v2976, 0.5
        %v2985 = vadd.f32 %v2977, 0.5
        %v2986 = vadd.f32 %v2978, 0.5
        %v2987 = vtanh.pop %v2933
        %v2988 = vtanh.pop %v2934
        %v2989 = vtanh.pop %v2941
        %v2990 = vtanh.pop %v2942
        %v2991 = vtanh.pop %v2949
        %v2992 = vtanh.pop %v2950
        %v2993 = vtanh.pop %v2957
        %v2994 = vtanh.pop %v2958
        %v2995 = vmul.f32 %v2987, 0.5
        %v2996 = vmul.f32 %v2988, 0.5
        %v2997 = vmul.f32 %v2989, 0.5
        %v2998 = vmul.f32 %v2990, 0.5
        %v2999 = vmul.f32 %v2991, 0.5
        %v3000 = vmul.f32 %v2992, 0.5
        %v3001 = vmul.f32 %v2993, 0.5
        %v3002 = vmul.f32 %v2994, 0.5
        %v3003 = vadd.f32 %v2995, 0.5
        %v3004 = vadd.f32 %v2996, 0.5
        %v3005 = vadd.f32 %v2997, 0.5
        %v3006 = vadd.f32 %v2998, 0.5
        %v3007 = vadd.f32 %v2999, 0.5
        %v3008 = vadd.f32 %v3000, 0.5
        %v3009 = vadd.f32 %v3001, 0.5
        %v3010 = vadd.f32 %v3002, 0.5
        %v3011 = vtanh.pop %v2935
        %v3012 = vtanh.pop %v2936
        %v3013 = vtanh.pop %v2943
        %v3014 = vtanh.pop %v2944
        %v3015 = vtanh.pop %v2951
        %v3016 = vtanh.pop %v2952
        %v3017 = vtanh.pop %v2959
        %v3018 = vtanh.pop %v2960
        %v3019 = vtanh.pop %v2937
        %v3020 = vtanh.pop %v2938
        %v3021 = vtanh.pop %v2945
        %v3022 = vtanh.pop %v2946
        %v3023 = vtanh.pop %v2953
        %v3024 = vtanh.pop %v2954
        %v3025 = vtanh.pop %v2961
        %v3026 = vtanh.pop %v2962
        %v3027 = vmul.f32 %v3019, 0.5
        %v3028 = vmul.f32 %v3020, 0.5
        %v3029 = vmul.f32 %v3021, 0.5
        %v3030 = vmul.f32 %v3022, 0.5
        %v3031 = vmul.f32 %v3023, 0.5
        %v3032 = vmul.f32 %v3024, 0.5
        %v3033 = vmul.f32 %v3025, 0.5
        %v3034 = vmul.f32 %v3026, 0.5
        %v3035 = vadd.f32 %v3027, 0.5
        %v3036 = vadd.f32 %v3028, 0.5
        %v3037 = vadd.f32 %v3029, 0.5
        %v3038 = vadd.f32 %v3030, 0.5
        %v3039 = vadd.f32 %v3031, 0.5
        %v3040 = vadd.f32 %v3032, 0.5
        %v3041 = vadd.f32 %v3033, 0.5
        %v3042 = vadd.f32 %v3034, 0.5
        %v3043 = vmul.f32 %v3003, %v1051
        %v3044 = vmul.f32 %v3004, %v1052
        %v3045 = vmul.f32 %v3005, %v1053
        %v3046 = vmul.f32 %v3006, %v1054
        %v3047 = vmul.f32 %v3007, %v1055
        %v3048 = vmul.f32 %v3008, %v1056
        %v3049 = vmul.f32 %v3009, %v1057
        %v3050 = vmul.f32 %v3010, %v1058
        %v3051 = vmul.f32 %v2979, %v3011
        %v3052 = vmul.f32 %v2980, %v3012
        %v3053 = vmul.f32 %v2981, %v3013
        %v3054 = vmul.f32 %v2982, %v3014
        %v3055 = vmul.f32 %v2983, %v3015
        %v3056 = vmul.f32 %v2984, %v3016
        %v3057 = vmul.f32 %v2985, %v3017
        %v3058 = vmul.f32 %v2986, %v3018
        %v3059 = vadd.f32 %v3043, %v3051
        %v3060 = vadd.f32 %v3044, %v3052
        %v3061 = vadd.f32 %v3045, %v3053
        %v3062 = vadd.f32 %v3046, %v3054
        %v3063 = vadd.f32 %v3047, %v3055
        %v3064 = vadd.f32 %v3048, %v3056
        %v3065 = vadd.f32 %v3049, %v3057
        %v3066 = vadd.f32 %v3050, %v3058
        %v3067 = vtanh.pop %v3059
        %v3068 = vtanh.pop %v3060
        %v3069 = vtanh.pop %v3061
        %v3070 = vtanh.pop %v3062
        %v3071 = vtanh.pop %v3063
        %v3072 = vtanh.pop %v3064
        %v3073 = vtanh.pop %v3065
        %v3074 = vtanh.pop %v3066
        %v3075 = vmul.f32 %v3035, %v3067
        %v3076 = vmul.f32 %v3036, %v3068
        %v3077 = vmul.f32 %v3037, %v3069
        %v3078 = vmul.f32 %v3038, %v3070
        %v3079 = vmul.f32 %v3039, %v3071
        %v3080 = vmul.f32 %v3040, %v3072
        %v3081 = vmul.f32 %v3041, %v3073
        %v3082 = vmul.f32 %v3042, %v3074
        %v3083 = vpack.c.bf16 %v3077, %v3075
        %v3084 = vpack.c.bf16 %v3078, %v3076
        %v3085 = vpack.c.bf16 %v3081, %v3079
        %v3086 = vpack.c.bf16 %v3082, %v3080
        %3087 = vmatprep.subr.bf16.mxu0 %v1417
        %3088 = vmatpush1.bf16.msra.mxu0 %v1416
        %3089 = vmatprep.subr.bf16.mxu0 %v1413
        %3090 = vmatpush1.bf16.msra.mxu0 %v1412
        %3091 = vmatprep.subr.bf16.mxu0 %v1409
        %3092 = vmatpush1.bf16.msra.mxu0 %v1408
        %3093 = vmatprep.subr.bf16.mxu0 %v1405
        %3094 = vmatpush1.bf16.msra.mxu0 %v1404
        %3095 = vmatprep.subr.bf16.mxu0 %v1401
        %3096 = vmatpush1.bf16.msra.mxu0 %v1400
        %3097 = vmatprep.subr.bf16.mxu0 %v1397
        %3098 = vmatpush1.bf16.msra.mxu0 %v1396
        %3099 = vmatprep.subr.bf16.mxu0 %v1393
        %3100 = vmatpush1.bf16.msra.mxu0 %v1392
        %3101 = vmatprep.subr.bf16.mxu0 %v1389
        %3102 = vmatpush1.bf16.msra.mxu0 %v1388
        %3103 = vmatprep.subr.bf16.mxu0 %v1449
        %3104 = vmatpush2.bf16.msra.mxu0 %v1448
        %3105 = vmatprep.subr.bf16.mxu0 %v1445
        %3106 = vmatpush2.bf16.msra.mxu0 %v1444
        %3107 = vmatprep.subr.bf16.mxu0 %v1441
        %3108 = vmatpush2.bf16.msra.mxu0 %v1440
        %3109 = vmatprep.subr.bf16.mxu0 %v1437
        %3110 = vmatpush2.bf16.msra.mxu0 %v1436
        %3111 = vmatprep.subr.bf16.mxu0 %v1433
        %3112 = vmatpush2.bf16.msra.mxu0 %v1432
        %3113 = vmatprep.subr.bf16.mxu0 %v1429
        %3114 = vmatpush2.bf16.msra.mxu0 %v1428
        %3115 = vmatprep.subr.bf16.mxu0 %v1425
        %3116 = vmatpush2.bf16.msra.mxu0 %v1424
        %3117 = vmatprep.subr.bf16.mxu0 %v1421
        %3118 = vmatpush2.bf16.msra.mxu0 %v1420
        %3119 = vmatprep.mubr.bf16.mxu0 %v3084
        %3120 = vmatmul.mubr.bf16.gmra.mxu0 %v3083
        %v3121 = vpop.f32.mrf.mxu0
        %v3122 = vadd.f32 %v1083, %v3121
        %v3123 = vpop.f32.mrf.mxu0
        %v3124 = vadd.f32 %v1087, %v3123
        %v3125 = vpop.f32.mrf.mxu0
        %v3126 = vadd.f32 %v1083, %v3125
        %v3127 = vpop.f32.mrf.mxu0
        %v3128 = vadd.f32 %v1087, %v3127
        %3129 = vmatprep.mubr.bf16.mxu0 %v3086
        %3130 = vmatmul.mubr.bf16.gmra.mxu0 %v3085
        %v3131 = vpop.f32.mrf.mxu0
        %v3132 = vadd.f32 %v1083, %v3131
        %v3133 = vpop.f32.mrf.mxu0
        %v3134 = vadd.f32 %v1087, %v3133
        %v3135 = vpop.f32.mrf.mxu0
        %v3136 = vadd.f32 %v1083, %v3135
        %v3137 = vpop.f32.mrf.mxu0
        %v3138 = vadd.f32 %v1087, %v3137
        %3139 = vdwg.mxu0
        %3140 = vmatprep.subr.bf16.mxu0 %v1481
        %3141 = vmatpush1.bf16.msra.mxu0 %v1480
        %3142 = vmatprep.subr.bf16.mxu0 %v1477
        %3143 = vmatpush1.bf16.msra.mxu0 %v1476
        %3144 = vmatprep.subr.bf16.mxu0 %v1473
        %3145 = vmatpush1.bf16.msra.mxu0 %v1472
        %3146 = vmatprep.subr.bf16.mxu0 %v1469
        %3147 = vmatpush1.bf16.msra.mxu0 %v1468
        %3148 = vmatprep.subr.bf16.mxu0 %v1465
        %3149 = vmatpush1.bf16.msra.mxu0 %v1464
        %3150 = vmatprep.subr.bf16.mxu0 %v1461
        %3151 = vmatpush1.bf16.msra.mxu0 %v1460
        %3152 = vmatprep.subr.bf16.mxu0 %v1457
        %3153 = vmatpush1.bf16.msra.mxu0 %v1456
        %3154 = vmatprep.subr.bf16.mxu0 %v1453
        %3155 = vmatpush1.bf16.msra.mxu0 %v1452
        %3156 = vmatprep.subr.bf16.mxu0 0
        %3157 = vmatpush2.bf16.msra.mxu0 0
        %3158 = vmatprep.subr.bf16.mxu0 0
        %3159 = vmatpush2.bf16.msra.mxu0 0
        %3160 = vmatprep.subr.bf16.mxu0 0
        %3161 = vmatpush2.bf16.msra.mxu0 0
        %3162 = vmatprep.subr.bf16.mxu0 0
        %3163 = vmatpush2.bf16.msra.mxu0 0
        %3164 = vmatprep.subr.bf16.mxu0 0
        %3165 = vmatpush2.bf16.msra.mxu0 0
        %3166 = vmatprep.subr.bf16.mxu0 0
        %3167 = vmatpush2.bf16.msra.mxu0 0
        %3168 = vmatprep.subr.bf16.mxu0 0
        %3169 = vmatpush2.bf16.msra.mxu0 0
        %3170 = vmatprep.subr.bf16.mxu0 0
        %3171 = vmatpush2.bf16.msra.mxu0 0
        %3172 = vmatprep.mubr.bf16.mxu0 0
        %3173 = vmatmul.mubr.bf16.gmra.mxu0 %v1852
        %v3174 = vpop.f32.mrf.mxu0
        %v3175 = vadd.f32 %v3122, %v3174
        %v3176 = vpop.f32.mrf.mxu0
        %v3177 = vadd.f32 %v3124, %v3176
        %v3178 = vpop.f32.mrf.mxu0
        %v3179 = vadd.f32 %v3126, %v3178
        %v3180 = vpop.f32.mrf.mxu0
        %v3181 = vadd.f32 %v3128, %v3180
        %3182 = vmatprep.mubr.bf16.mxu0 0
        %3183 = vmatmul.mubr.bf16.gmra.mxu0 %v1853
        %v3184 = vpop.f32.mrf.mxu0
        %v3185 = vadd.f32 %v3132, %v3184
        %v3186 = vpop.f32.mrf.mxu0
        %v3187 = vadd.f32 %v3134, %v3186
        %v3188 = vpop.f32.mrf.mxu0
        %v3189 = vadd.f32 %v3136, %v3188
        %v3190 = vpop.f32.mrf.mxu0
        %v3191 = vadd.f32 %v3138, %v3190
        %3192 = vdwg.mxu0
        %3193 = vmatprep.subr.bf16.mxu0 %v1419
        %3194 = vmatpush1.bf16.msra.mxu0 %v1418
        %3195 = vmatprep.subr.bf16.mxu0 %v1415
        %3196 = vmatpush1.bf16.msra.mxu0 %v1414
        %3197 = vmatprep.subr.bf16.mxu0 %v1411
        %3198 = vmatpush1.bf16.msra.mxu0 %v1410
        %3199 = vmatprep.subr.bf16.mxu0 %v1407
        %3200 = vmatpush1.bf16.msra.mxu0 %v1406
        %3201 = vmatprep.subr.bf16.mxu0 %v1403
        %3202 = vmatpush1.bf16.msra.mxu0 %v1402
        %3203 = vmatprep.subr.bf16.mxu0 %v1399
        %3204 = vmatpush1.bf16.msra.mxu0 %v1398
        %3205 = vmatprep.subr.bf16.mxu0 %v1395
        %3206 = vmatpush1.bf16.msra.mxu0 %v1394
        %3207 = vmatprep.subr.bf16.mxu0 %v1391
        %3208 = vmatpush1.bf16.msra.mxu0 %v1390
        %3209 = vmatprep.subr.bf16.mxu0 %v1451
        %3210 = vmatpush2.bf16.msra.mxu0 %v1450
        %3211 = vmatprep.subr.bf16.mxu0 %v1447
        %3212 = vmatpush2.bf16.msra.mxu0 %v1446
        %3213 = vmatprep.subr.bf16.mxu0 %v1443
        %3214 = vmatpush2.bf16.msra.mxu0 %v1442
        %3215 = vmatprep.subr.bf16.mxu0 %v1439
        %3216 = vmatpush2.bf16.msra.mxu0 %v1438
        %3217 = vmatprep.subr.bf16.mxu0 %v1435
        %3218 = vmatpush2.bf16.msra.mxu0 %v1434
        %3219 = vmatprep.subr.bf16.mxu0 %v1431
        %3220 = vmatpush2.bf16.msra.mxu0 %v1430
        %3221 = vmatprep.subr.bf16.mxu0 %v1427
        %3222 = vmatpush2.bf16.msra.mxu0 %v1426
        %3223 = vmatprep.subr.bf16.mxu0 %v1423
        %3224 = vmatpush2.bf16.msra.mxu0 %v1422
        %3225 = vmatprep.mubr.bf16.mxu0 %v3084
        %3226 = vmatmul.mubr.bf16.gmra.mxu0 %v3083
        %v3227 = vpop.f32.mrf.mxu0
        %v3228 = vadd.f32 %v1091, %v3227
        %v3229 = vpop.f32.mrf.mxu0
        %v3230 = vadd.f32 %v1095, %v3229
        %v3231 = vpop.f32.mrf.mxu0
        %v3232 = vadd.f32 %v1091, %v3231
        %v3233 = vpop.f32.mrf.mxu0
        %v3234 = vadd.f32 %v1095, %v3233
        %3235 = vmatprep.mubr.bf16.mxu0 %v3086
        %3236 = vmatmul.mubr.bf16.gmra.mxu0 %v3085
        %v3237 = vpop.f32.mrf.mxu0
        %v3238 = vadd.f32 %v1091, %v3237
        %v3239 = vpop.f32.mrf.mxu0
        %v3240 = vadd.f32 %v1095, %v3239
        %v3241 = vpop.f32.mrf.mxu0
        %v3242 = vadd.f32 %v1091, %v3241
        %v3243 = vpop.f32.mrf.mxu0
        %v3244 = vadd.f32 %v1095, %v3243
        %3245 = vdwg.mxu0
        %3246 = vmatprep.subr.bf16.mxu0 %v1483
        %3247 = vmatpush1.bf16.msra.mxu0 %v1482
        %3248 = vmatprep.subr.bf16.mxu0 %v1479
        %3249 = vmatpush1.bf16.msra.mxu0 %v1478
        %3250 = vmatprep.subr.bf16.mxu0 %v1475
        %3251 = vmatpush1.bf16.msra.mxu0 %v1474
        %3252 = vmatprep.subr.bf16.mxu0 %v1471
        %3253 = vmatpush1.bf16.msra.mxu0 %v1470
        %3254 = vmatprep.subr.bf16.mxu0 %v1467
        %3255 = vmatpush1.bf16.msra.mxu0 %v1466
        %3256 = vmatprep.subr.bf16.mxu0 %v1463
        %3257 = vmatpush1.bf16.msra.mxu0 %v1462
        %3258 = vmatprep.subr.bf16.mxu0 %v1459
        %3259 = vmatpush1.bf16.msra.mxu0 %v1458
        %3260 = vmatprep.subr.bf16.mxu0 %v1455
        %3261 = vmatpush1.bf16.msra.mxu0 %v1454
        %3262 = vmatprep.subr.bf16.mxu0 0
        %3263 = vmatpush2.bf16.msra.mxu0 0
        %3264 = vmatprep.subr.bf16.mxu0 0
        %3265 = vmatpush2.bf16.msra.mxu0 0
        %3266 = vmatprep.subr.bf16.mxu0 0
        %3267 = vmatpush2.bf16.msra.mxu0 0
        %3268 = vmatprep.subr.bf16.mxu0 0
        %3269 = vmatpush2.bf16.msra.mxu0 0
        %3270 = vmatprep.subr.bf16.mxu0 0
        %3271 = vmatpush2.bf16.msra.mxu0 0
        %3272 = vmatprep.subr.bf16.mxu0 0
        %3273 = vmatpush2.bf16.msra.mxu0 0
        %3274 = vmatprep.subr.bf16.mxu0 0
        %3275 = vmatpush2.bf16.msra.mxu0 0
        %3276 = vmatprep.subr.bf16.mxu0 0
        %3277 = vmatpush2.bf16.msra.mxu0 0
        %3278 = vmatprep.mubr.bf16.mxu0 0
        %3279 = vmatmul.mubr.bf16.gmra.mxu0 %v1852
        %v3280 = vpop.f32.mrf.mxu0
        %v3281 = vadd.f32 %v3228, %v3280
        %v3282 = vpop.f32.mrf.mxu0
        %v3283 = vadd.f32 %v3230, %v3282
        %v3284 = vpop.f32.mrf.mxu0
        %v3285 = vadd.f32 %v3232, %v3284
        %v3286 = vpop.f32.mrf.mxu0
        %v3287 = vadd.f32 %v3234, %v3286
        %3288 = vmatprep.mubr.bf16.mxu0 0
        %3289 = vmatmul.mubr.bf16.gmra.mxu0 %v1853
        %v3290 = vpop.f32.mrf.mxu0
        %v3291 = vadd.f32 %v3238, %v3290
        %v3292 = vpop.f32.mrf.mxu0
        %v3293 = vadd.f32 %v3240, %v3292
        %v3294 = vpop.f32.mrf.mxu0
        %v3295 = vadd.f32 %v3242, %v3294
        %v3296 = vpop.f32.mrf.mxu0
        %v3297 = vadd.f32 %v3244, %v3296
        %3298 = vdwg.mxu0
        %v3299 = vtanh.pop %v3175
        %v3300 = vtanh.pop %v3179
        %v3301 = vtanh.pop %v3185
        %v3302 = vtanh.pop %v3189
        %v3303 = vmul.f32 %v3299, 0.5
        %v3304 = vmul.f32 %v3300, 0.5
        %v3305 = vmul.f32 %v3301, 0.5
        %v3306 = vmul.f32 %v3302, 0.5
        %v3307 = vadd.f32 %v3303, 0.5
        %v3308 = vadd.f32 %v3304, 0.5
        %v3309 = vadd.f32 %v3305, 0.5
        %v3310 = vadd.f32 %v3306, 0.5
        %v3311 = vtanh.pop %v3177
        %v3312 = vtanh.pop %v3181
        %v3313 = vtanh.pop %v3187
        %v3314 = vtanh.pop %v3191
        %v3315 = vmul.f32 %v3311, 0.5
        %v3316 = vmul.f32 %v3312, 0.5
        %v3317 = vmul.f32 %v3313, 0.5
        %v3318 = vmul.f32 %v3314, 0.5
        %v3319 = vadd.f32 %v3315, 0.5
        %v3320 = vadd.f32 %v3316, 0.5
        %v3321 = vadd.f32 %v3317, 0.5
        %v3322 = vadd.f32 %v3318, 0.5
        %v3323 = vtanh.pop %v3281
        %v3324 = vtanh.pop %v3285
        %v3325 = vtanh.pop %v3291
        %v3326 = vtanh.pop %v3295
        %v3327 = vtanh.pop %v3283
        %v3328 = vtanh.pop %v3287
        %v3329 = vtanh.pop %v3293
        %v3330 = vtanh.pop %v3297
        %v3331 = vmul.f32 %v3327, 0.5
        %v3332 = vmul.f32 %v3328, 0.5
        %v3333 = vmul.f32 %v3329, 0.5
        %v3334 = vmul.f32 %v3330, 0.5
        %v3335 = vadd.f32 %v3331, 0.5
        %v3336 = vadd.f32 %v3332, 0.5
        %v3337 = vadd.f32 %v3333, 0.5
        %v3338 = vadd.f32 %v3334, 0.5
        %v3339 = vmul.f32 %v3319, %v1840
        %v3340 = vmul.f32 %v3320, %v1841
        %v3341 = vmul.f32 %v3321, %v1842
        %v3342 = vmul.f32 %v3322, %v1843
        %v3343 = vmul.f32 %v3307, %v3323
        %v3344 = vmul.f32 %v3308, %v3324
        %v3345 = vmul.f32 %v3309, %v3325
        %v3346 = vmul.f32 %v3310, %v3326
        %v3347 = vadd.f32 %v3339, %v3343
        %v3348 = vadd.f32 %v3340, %v3344
        %v3349 = vadd.f32 %v3341, %v3345
        %v3350 = vadd.f32 %v3342, %v3346
        %v3351 = vtanh.pop %v3347
        %v3352 = vtanh.pop %v3348
        %v3353 = vtanh.pop %v3349
        %v3354 = vtanh.pop %v3350
        %v3355 = vmul.f32 %v3335, %v3351
        %v3356 = vmul.f32 %v3336, %v3352
        %v3357 = vmul.f32 %v3337, %v3353
        %v3358 = vmul.f32 %v3338, %v3354
        %v3359 = vpack.c.bf16 %v3356, %v3355
        %v3360 = vpack.c.bf16 %v3358, %v3357
        %s3361 = scalar_lea.vmem %s357, 64 [#allocation2]
        %v3362 = vld [vmem:[%s3361] sm:$0xff]
        %v3363 = vld [vmem:[%s3361 + $0x8] sm:$0xff]
        %v3364 = vld [vmem:[%s3361 + $0x10] sm:$0xff]
        %v3365 = vld [vmem:[%s3361 + $0x18] sm:$0xff]
        %v3366 = vpack.c.bf16 %v3363, %v3362
        %v3367 = vpack.c.bf16 %v3365, %v3364
        %v3369 = vsel %vm708, %v3366, 0
        %v3372 = vsel %vm708, %v3367, 0
        %3374 = vmatprep.subr.bf16.mxu0 0
        %3375 = vmatpush1.bf16.msra.mxu0 0
        %3376 = vmatprep.subr.bf16.mxu0 0
        %3377 = vmatpush1.bf16.msra.mxu0 0
        %3378 = vmatprep.subr.bf16.mxu0 0
        %3379 = vmatpush1.bf16.msra.mxu0 0
        %3380 = vmatprep.subr.bf16.mxu0 0
        %3381 = vmatpush1.bf16.msra.mxu0 0
        %3382 = vmatprep.subr.bf16.mxu0 0
        %3383 = vmatpush1.bf16.msra.mxu0 0
        %3384 = vmatprep.subr.bf16.mxu0 0
        %3385 = vmatpush1.bf16.msra.mxu0 0
        %3386 = vmatprep.subr.bf16.mxu0 0
        %3387 = vmatpush1.bf16.msra.mxu0 0
        %3388 = vmatprep.subr.bf16.mxu0 %v723
        %3389 = vmatpush1.bf16.msra.mxu0 %v720
        %3390 = vmatprep.subr.bf16.mxu0 0
        %3391 = vmatpush2.bf16.msra.mxu0 0
        %3392 = vmatprep.subr.bf16.mxu0 0
        %3393 = vmatpush2.bf16.msra.mxu0 0
        %3394 = vmatprep.subr.bf16.mxu0 0
        %3395 = vmatpush2.bf16.msra.mxu0 0
        %3396 = vmatprep.subr.bf16.mxu0 0
        %3397 = vmatpush2.bf16.msra.mxu0 0
        %3398 = vmatprep.subr.bf16.mxu0 0
        %3399 = vmatpush2.bf16.msra.mxu0 0
        %3400 = vmatprep.subr.bf16.mxu0 0
        %3401 = vmatpush2.bf16.msra.mxu0 0
        %3402 = vmatprep.subr.bf16.mxu0 0
        %3403 = vmatpush2.bf16.msra.mxu0 0
        %3404 = vmatprep.subr.bf16.mxu0 0
        %3405 = vmatpush2.bf16.msra.mxu0 0
        %3406 = vmatprep.mubr.bf16.mxu0 0
        %3407 = vmatmul.mubr.bf16.gmra.mxu0 %v3369
        %v3408 = vpop.f32.mrf.mxu0
        %v3409 = vadd.f32 %v639, %v3408
        %v3410 = vpop.f32.mrf.mxu0
        %v3411 = vadd.f32 %v643, %v3410
        %v3412 = vpop.f32.mrf.mxu0
        %v3413 = vadd.f32 %v639, %v3412
        %v3414 = vpop.f32.mrf.mxu0
        %v3415 = vadd.f32 %v643, %v3414
        %3416 = vmatprep.mubr.bf16.mxu0 0
        %3417 = vmatmul.mubr.bf16.gmra.mxu0 %v3372
        %v3418 = vpop.f32.mrf.mxu0
        %v3419 = vadd.f32 %v639, %v3418
        %v3420 = vpop.f32.mrf.mxu0
        %v3421 = vadd.f32 %v643, %v3420
        %v3422 = vpop.f32.mrf.mxu0
        %v3423 = vadd.f32 %v639, %v3422
        %v3424 = vpop.f32.mrf.mxu0
        %v3425 = vadd.f32 %v643, %v3424
        %3426 = vdwg.mxu0
        %3427 = vmatprep.subr.bf16.mxu0 0
        %3428 = vmatpush1.bf16.msra.mxu0 0
        %3429 = vmatprep.subr.bf16.mxu0 0
        %3430 = vmatpush1.bf16.msra.mxu0 0
        %3431 = vmatprep.subr.bf16.mxu0 0
        %3432 = vmatpush1.bf16.msra.mxu0 0
        %3433 = vmatprep.subr.bf16.mxu0 0
        %3434 = vmatpush1.bf16.msra.mxu0 0
        %3435 = vmatprep.subr.bf16.mxu0 0
        %3436 = vmatpush1.bf16.msra.mxu0 0
        %3437 = vmatprep.subr.bf16.mxu0 0
        %3438 = vmatpush1.bf16.msra.mxu0 0
        %3439 = vmatprep.subr.bf16.mxu0 0
        %3440 = vmatpush1.bf16.msra.mxu0 0
        %3441 = vmatprep.subr.bf16.mxu0 %v729
        %3442 = vmatpush1.bf16.msra.mxu0 %v726
        %3443 = vmatprep.subr.bf16.mxu0 0
        %3444 = vmatpush2.bf16.msra.mxu0 0
        %3445 = vmatprep.subr.bf16.mxu0 0
        %3446 = vmatpush2.bf16.msra.mxu0 0
        %3447 = vmatprep.subr.bf16.mxu0 0
        %3448 = vmatpush2.bf16.msra.mxu0 0
        %3449 = vmatprep.subr.bf16.mxu0 0
        %3450 = vmatpush2.bf16.msra.mxu0 0
        %3451 = vmatprep.subr.bf16.mxu0 0
        %3452 = vmatpush2.bf16.msra.mxu0 0
        %3453 = vmatprep.subr.bf16.mxu0 0
        %3454 = vmatpush2.bf16.msra.mxu0 0
        %3455 = vmatprep.subr.bf16.mxu0 0
        %3456 = vmatpush2.bf16.msra.mxu0 0
        %3457 = vmatprep.subr.bf16.mxu0 0
        %3458 = vmatpush2.bf16.msra.mxu0 0
        %3459 = vmatprep.mubr.bf16.mxu0 0
        %3460 = vmatmul.mubr.bf16.gmra.mxu0 %v3369
        %v3461 = vpop.f32.mrf.mxu0
        %v3462 = vadd.f32 %v647, %v3461
        %v3463 = vpop.f32.mrf.mxu0
        %v3464 = vadd.f32 %v651, %v3463
        %v3465 = vpop.f32.mrf.mxu0
        %v3466 = vadd.f32 %v647, %v3465
        %v3467 = vpop.f32.mrf.mxu0
        %v3468 = vadd.f32 %v651, %v3467
        %3469 = vmatprep.mubr.bf16.mxu0 0
        %3470 = vmatmul.mubr.bf16.gmra.mxu0 %v3372
        %v3471 = vpop.f32.mrf.mxu0
        %v3472 = vadd.f32 %v647, %v3471
        %v3473 = vpop.f32.mrf.mxu0
        %v3474 = vadd.f32 %v651, %v3473
        %v3475 = vpop.f32.mrf.mxu0
        %v3476 = vadd.f32 %v647, %v3475
        %v3477 = vpop.f32.mrf.mxu0
        %v3478 = vadd.f32 %v651, %v3477
        %3479 = vdwg.mxu0
        %3480 = vmatprep.subr.bf16.mxu0 0
        %3481 = vmatpush1.bf16.msra.mxu0 0
        %3482 = vmatprep.subr.bf16.mxu0 0
        %3483 = vmatpush1.bf16.msra.mxu0 0
        %3484 = vmatprep.subr.bf16.mxu0 0
        %3485 = vmatpush1.bf16.msra.mxu0 0
        %3486 = vmatprep.subr.bf16.mxu0 0
        %3487 = vmatpush1.bf16.msra.mxu0 0
        %3488 = vmatprep.subr.bf16.mxu0 0
        %3489 = vmatpush1.bf16.msra.mxu0 0
        %3490 = vmatprep.subr.bf16.mxu0 0
        %3491 = vmatpush1.bf16.msra.mxu0 0
        %3492 = vmatprep.subr.bf16.mxu0 0
        %3493 = vmatpush1.bf16.msra.mxu0 0
        %3494 = vmatprep.subr.bf16.mxu0 %v735
        %3495 = vmatpush1.bf16.msra.mxu0 %v732
        %3496 = vmatprep.subr.bf16.mxu0 0
        %3497 = vmatpush2.bf16.msra.mxu0 0
        %3498 = vmatprep.subr.bf16.mxu0 0
        %3499 = vmatpush2.bf16.msra.mxu0 0
        %3500 = vmatprep.subr.bf16.mxu0 0
        %3501 = vmatpush2.bf16.msra.mxu0 0
        %3502 = vmatprep.subr.bf16.mxu0 0
        %3503 = vmatpush2.bf16.msra.mxu0 0
        %3504 = vmatprep.subr.bf16.mxu0 0
        %3505 = vmatpush2.bf16.msra.mxu0 0
        %3506 = vmatprep.subr.bf16.mxu0 0
        %3507 = vmatpush2.bf16.msra.mxu0 0
        %3508 = vmatprep.subr.bf16.mxu0 0
        %3509 = vmatpush2.bf16.msra.mxu0 0
        %3510 = vmatprep.subr.bf16.mxu0 0
        %3511 = vmatpush2.bf16.msra.mxu0 0
        %3512 = vmatprep.mubr.bf16.mxu0 0
        %3513 = vmatmul.mubr.bf16.gmra.mxu0 %v3369
        %v3514 = vpop.f32.mrf.mxu0
        %v3515 = vadd.f32 %v655, %v3514
        %v3516 = vpop.f32.mrf.mxu0
        %v3517 = vadd.f32 %v659, %v3516
        %v3518 = vpop.f32.mrf.mxu0
        %v3519 = vadd.f32 %v655, %v3518
        %v3520 = vpop.f32.mrf.mxu0
        %v3521 = vadd.f32 %v659, %v3520
        %3522 = vmatprep.mubr.bf16.mxu0 0
        %3523 = vmatmul.mubr.bf16.gmra.mxu0 %v3372
        %v3524 = vpop.f32.mrf.mxu0
        %v3525 = vadd.f32 %v655, %v3524
        %v3526 = vpop.f32.mrf.mxu0
        %v3527 = vadd.f32 %v659, %v3526
        %v3528 = vpop.f32.mrf.mxu0
        %v3529 = vadd.f32 %v655, %v3528
        %v3530 = vpop.f32.mrf.mxu0
        %v3531 = vadd.f32 %v659, %v3530
        %3532 = vdwg.mxu0
        %3533 = vmatprep.subr.bf16.mxu0 0
        %3534 = vmatpush1.bf16.msra.mxu0 0
        %3535 = vmatprep.subr.bf16.mxu0 0
        %3536 = vmatpush1.bf16.msra.mxu0 0
        %3537 = vmatprep.subr.bf16.mxu0 0
        %3538 = vmatpush1.bf16.msra.mxu0 0
        %3539 = vmatprep.subr.bf16.mxu0 0
        %3540 = vmatpush1.bf16.msra.mxu0 0
        %3541 = vmatprep.subr.bf16.mxu0 0
        %3542 = vmatpush1.bf16.msra.mxu0 0
        %3543 = vmatprep.subr.bf16.mxu0 0
        %3544 = vmatpush1.bf16.msra.mxu0 0
        %3545 = vmatprep.subr.bf16.mxu0 0
        %3546 = vmatpush1.bf16.msra.mxu0 0
        %3547 = vmatprep.subr.bf16.mxu0 %v741
        %3548 = vmatpush1.bf16.msra.mxu0 %v738
        %3549 = vmatprep.subr.bf16.mxu0 0
        %3550 = vmatpush2.bf16.msra.mxu0 0
        %3551 = vmatprep.subr.bf16.mxu0 0
        %3552 = vmatpush2.bf16.msra.mxu0 0
        %3553 = vmatprep.subr.bf16.mxu0 0
        %3554 = vmatpush2.bf16.msra.mxu0 0
        %3555 = vmatprep.subr.bf16.mxu0 0
        %3556 = vmatpush2.bf16.msra.mxu0 0
        %3557 = vmatprep.subr.bf16.mxu0 0
        %3558 = vmatpush2.bf16.msra.mxu0 0
        %3559 = vmatprep.subr.bf16.mxu0 0
        %3560 = vmatpush2.bf16.msra.mxu0 0
        %3561 = vmatprep.subr.bf16.mxu0 0
        %3562 = vmatpush2.bf16.msra.mxu0 0
        %3563 = vmatprep.subr.bf16.mxu0 0
        %3564 = vmatpush2.bf16.msra.mxu0 0
        %3565 = vmatprep.mubr.bf16.mxu0 0
        %3566 = vmatmul.mubr.bf16.gmra.mxu0 %v3369
        %v3567 = vpop.f32.mrf.mxu0
        %v3568 = vadd.f32 %v663, %v3567
        %v3569 = vpop.f32.mrf.mxu0
        %v3570 = vadd.f32 %v667, %v3569
        %v3571 = vpop.f32.mrf.mxu0
        %v3572 = vadd.f32 %v663, %v3571
        %v3573 = vpop.f32.mrf.mxu0
        %v3574 = vadd.f32 %v667, %v3573
        %3575 = vmatprep.mubr.bf16.mxu0 0
        %3576 = vmatmul.mubr.bf16.gmra.mxu0 %v3372
        %v3577 = vpop.f32.mrf.mxu0
        %v3578 = vadd.f32 %v663, %v3577
        %v3579 = vpop.f32.mrf.mxu0
        %v3580 = vadd.f32 %v667, %v3579
        %v3581 = vpop.f32.mrf.mxu0
        %v3582 = vadd.f32 %v663, %v3581
        %v3583 = vpop.f32.mrf.mxu0
        %v3584 = vadd.f32 %v667, %v3583
        %3585 = vdwg.mxu0
        %3586 = vmatprep.subr.bf16.mxu0 %v2520
        %3587 = vmatpush1.bf16.msra.mxu0 %v2519
        %3588 = vmatprep.subr.bf16.mxu0 %v2512
        %3589 = vmatpush1.bf16.msra.mxu0 %v2511
        %3590 = vmatprep.subr.bf16.mxu0 %v2504
        %3591 = vmatpush1.bf16.msra.mxu0 %v2503
        %3592 = vmatprep.subr.bf16.mxu0 %v2496
        %3593 = vmatpush1.bf16.msra.mxu0 %v2495
        %3594 = vmatprep.subr.bf16.mxu0 %v2488
        %3595 = vmatpush1.bf16.msra.mxu0 %v2487
        %3596 = vmatprep.subr.bf16.mxu0 %v2480
        %3597 = vmatpush1.bf16.msra.mxu0 %v2479
        %3598 = vmatprep.subr.bf16.mxu0 %v2472
        %3599 = vmatpush1.bf16.msra.mxu0 %v2471
        %3600 = vmatprep.subr.bf16.mxu0 %v2464
        %3601 = vmatpush1.bf16.msra.mxu0 %v2463
        %3602 = vmatprep.subr.bf16.mxu0 %v2584
        %3603 = vmatpush2.bf16.msra.mxu0 %v2583
        %3604 = vmatprep.subr.bf16.mxu0 %v2576
        %3605 = vmatpush2.bf16.msra.mxu0 %v2575
        %3606 = vmatprep.subr.bf16.mxu0 %v2568
        %3607 = vmatpush2.bf16.msra.mxu0 %v2567
        %3608 = vmatprep.subr.bf16.mxu0 %v2560
        %3609 = vmatpush2.bf16.msra.mxu0 %v2559
        %3610 = vmatprep.subr.bf16.mxu0 %v2552
        %3611 = vmatpush2.bf16.msra.mxu0 %v2551
        %3612 = vmatprep.subr.bf16.mxu0 %v2544
        %3613 = vmatpush2.bf16.msra.mxu0 %v2543
        %3614 = vmatprep.subr.bf16.mxu0 %v2536
        %3615 = vmatpush2.bf16.msra.mxu0 %v2535
        %3616 = vmatprep.subr.bf16.mxu0 %v2528
        %3617 = vmatpush2.bf16.msra.mxu0 %v2527
        %3618 = vmatprep.mubr.bf16.mxu0 %v3084
        %3619 = vmatmul.mubr.bf16.gmra.mxu0 %v3083
        %v3620 = vpop.f32.mrf.mxu0
        %v3621 = vadd.f32 0.0, %v3620
        %v3622 = vpop.f32.mrf.mxu0
        %v3623 = vadd.f32 0.0, %v3622
        %v3624 = vpop.f32.mrf.mxu0
        %v3625 = vadd.f32 0.0, %v3624
        %v3626 = vpop.f32.mrf.mxu0
        %v3627 = vadd.f32 0.0, %v3626
        %3628 = vmatprep.mubr.bf16.mxu0 %v3086
        %3629 = vmatmul.mubr.bf16.gmra.mxu0 %v3085
        %v3630 = vpop.f32.mrf.mxu0
        %v3631 = vadd.f32 0.0, %v3630
        %v3632 = vpop.f32.mrf.mxu0
        %v3633 = vadd.f32 0.0, %v3632
        %v3634 = vpop.f32.mrf.mxu0
        %v3635 = vadd.f32 0.0, %v3634
        %v3636 = vpop.f32.mrf.mxu0
        %v3637 = vadd.f32 0.0, %v3636
        %3638 = vdwg.mxu0
        %3639 = vmatprep.subr.bf16.mxu0 %v2522
        %3640 = vmatpush1.bf16.msra.mxu0 %v2521
        %3641 = vmatprep.subr.bf16.mxu0 %v2514
        %3642 = vmatpush1.bf16.msra.mxu0 %v2513
        %3643 = vmatprep.subr.bf16.mxu0 %v2506
        %3644 = vmatpush1.bf16.msra.mxu0 %v2505
        %3645 = vmatprep.subr.bf16.mxu0 %v2498
        %3646 = vmatpush1.bf16.msra.mxu0 %v2497
        %3647 = vmatprep.subr.bf16.mxu0 %v2490
        %3648 = vmatpush1.bf16.msra.mxu0 %v2489
        %3649 = vmatprep.subr.bf16.mxu0 %v2482
        %3650 = vmatpush1.bf16.msra.mxu0 %v2481
        %3651 = vmatprep.subr.bf16.mxu0 %v2474
        %3652 = vmatpush1.bf16.msra.mxu0 %v2473
        %3653 = vmatprep.subr.bf16.mxu0 %v2466
        %3654 = vmatpush1.bf16.msra.mxu0 %v2465
        %3655 = vmatprep.subr.bf16.mxu0 %v2586
        %3656 = vmatpush2.bf16.msra.mxu0 %v2585
        %3657 = vmatprep.subr.bf16.mxu0 %v2578
        %3658 = vmatpush2.bf16.msra.mxu0 %v2577
        %3659 = vmatprep.subr.bf16.mxu0 %v2570
        %3660 = vmatpush2.bf16.msra.mxu0 %v2569
        %3661 = vmatprep.subr.bf16.mxu0 %v2562
        %3662 = vmatpush2.bf16.msra.mxu0 %v2561
        %3663 = vmatprep.subr.bf16.mxu0 %v2554
        %3664 = vmatpush2.bf16.msra.mxu0 %v2553
        %3665 = vmatprep.subr.bf16.mxu0 %v2546
        %3666 = vmatpush2.bf16.msra.mxu0 %v2545
        %3667 = vmatprep.subr.bf16.mxu0 %v2538
        %3668 = vmatpush2.bf16.msra.mxu0 %v2537
        %3669 = vmatprep.subr.bf16.mxu0 %v2530
        %3670 = vmatpush2.bf16.msra.mxu0 %v2529
        %3671 = vmatprep.mubr.bf16.mxu0 %v3084
        %3672 = vmatmul.mubr.bf16.gmra.mxu0 %v3083
        %v3673 = vpop.f32.mrf.mxu0
        %v3674 = vadd.f32 0.0, %v3673
        %v3675 = vpop.f32.mrf.mxu0
        %v3676 = vadd.f32 0.0, %v3675
        %v3677 = vpop.f32.mrf.mxu0
        %v3678 = vadd.f32 0.0, %v3677
        %v3679 = vpop.f32.mrf.mxu0
        %v3680 = vadd.f32 0.0, %v3679
        %3681 = vmatprep.mubr.bf16.mxu0 %v3086
        %3682 = vmatmul.mubr.bf16.gmra.mxu0 %v3085
        %v3683 = vpop.f32.mrf.mxu0
        %v3684 = vadd.f32 0.0, %v3683
        %v3685 = vpop.f32.mrf.mxu0
        %v3686 = vadd.f32 0.0, %v3685
        %v3687 = vpop.f32.mrf.mxu0
        %v3688 = vadd.f32 0.0, %v3687
        %v3689 = vpop.f32.mrf.mxu0
        %v3690 = vadd.f32 0.0, %v3689
        %3691 = vdwg.mxu0
        %3692 = vmatprep.subr.bf16.mxu0 %v2524
        %3693 = vmatpush1.bf16.msra.mxu0 %v2523
        %3694 = vmatprep.subr.bf16.mxu0 %v2516
        %3695 = vmatpush1.bf16.msra.mxu0 %v2515
        %3696 = vmatprep.subr.bf16.mxu0 %v2508
        %3697 = vmatpush1.bf16.msra.mxu0 %v2507
        %3698 = vmatprep.subr.bf16.mxu0 %v2500
        %3699 = vmatpush1.bf16.msra.mxu0 %v2499
        %3700 = vmatprep.subr.bf16.mxu0 %v2492
        %3701 = vmatpush1.bf16.msra.mxu0 %v2491
        %3702 = vmatprep.subr.bf16.mxu0 %v2484
        %3703 = vmatpush1.bf16.msra.mxu0 %v2483
        %3704 = vmatprep.subr.bf16.mxu0 %v2476
        %3705 = vmatpush1.bf16.msra.mxu0 %v2475
        %3706 = vmatprep.subr.bf16.mxu0 %v2468
        %3707 = vmatpush1.bf16.msra.mxu0 %v2467
        %3708 = vmatprep.subr.bf16.mxu0 %v2588
        %3709 = vmatpush2.bf16.msra.mxu0 %v2587
        %3710 = vmatprep.subr.bf16.mxu0 %v2580
        %3711 = vmatpush2.bf16.msra.mxu0 %v2579
        %3712 = vmatprep.subr.bf16.mxu0 %v2572
        %3713 = vmatpush2.bf16.msra.mxu0 %v2571
        %3714 = vmatprep.subr.bf16.mxu0 %v2564
        %3715 = vmatpush2.bf16.msra.mxu0 %v2563
        %3716 = vmatprep.subr.bf16.mxu0 %v2556
        %3717 = vmatpush2.bf16.msra.mxu0 %v2555
        %3718 = vmatprep.subr.bf16.mxu0 %v2548
        %3719 = vmatpush2.bf16.msra.mxu0 %v2547
        %3720 = vmatprep.subr.bf16.mxu0 %v2540
        %3721 = vmatpush2.bf16.msra.mxu0 %v2539
        %3722 = vmatprep.subr.bf16.mxu0 %v2532
        %3723 = vmatpush2.bf16.msra.mxu0 %v2531
        %3724 = vmatprep.mubr.bf16.mxu0 %v3084
        %3725 = vmatmul.mubr.bf16.gmra.mxu0 %v3083
        %v3726 = vpop.f32.mrf.mxu0
        %v3727 = vadd.f32 0.0, %v3726
        %v3728 = vpop.f32.mrf.mxu0
        %v3729 = vadd.f32 0.0, %v3728
        %v3730 = vpop.f32.mrf.mxu0
        %v3731 = vadd.f32 0.0, %v3730
        %v3732 = vpop.f32.mrf.mxu0
        %v3733 = vadd.f32 0.0, %v3732
        %3734 = vmatprep.mubr.bf16.mxu0 %v3086
        %3735 = vmatmul.mubr.bf16.gmra.mxu0 %v3085
        %v3736 = vpop.f32.mrf.mxu0
        %v3737 = vadd.f32 0.0, %v3736
        %v3738 = vpop.f32.mrf.mxu0
        %v3739 = vadd.f32 0.0, %v3738
        %v3740 = vpop.f32.mrf.mxu0
        %v3741 = vadd.f32 0.0, %v3740
        %v3742 = vpop.f32.mrf.mxu0
        %v3743 = vadd.f32 0.0, %v3742
        %3744 = vdwg.mxu0
        %3745 = vmatprep.subr.bf16.mxu0 %v2526
        %3746 = vmatpush1.bf16.msra.mxu0 %v2525
        %3747 = vmatprep.subr.bf16.mxu0 %v2518
        %3748 = vmatpush1.bf16.msra.mxu0 %v2517
        %3749 = vmatprep.subr.bf16.mxu0 %v2510
        %3750 = vmatpush1.bf16.msra.mxu0 %v2509
        %3751 = vmatprep.subr.bf16.mxu0 %v2502
        %3752 = vmatpush1.bf16.msra.mxu0 %v2501
        %3753 = vmatprep.subr.bf16.mxu0 %v2494
        %3754 = vmatpush1.bf16.msra.mxu0 %v2493
        %3755 = vmatprep.subr.bf16.mxu0 %v2486
        %3756 = vmatpush1.bf16.msra.mxu0 %v2485
        %3757 = vmatprep.subr.bf16.mxu0 %v2478
        %3758 = vmatpush1.bf16.msra.mxu0 %v2477
        %3759 = vmatprep.subr.bf16.mxu0 %v2470
        %3760 = vmatpush1.bf16.msra.mxu0 %v2469
        %3761 = vmatprep.subr.bf16.mxu0 %v2590
        %3762 = vmatpush2.bf16.msra.mxu0 %v2589
        %3763 = vmatprep.subr.bf16.mxu0 %v2582
        %3764 = vmatpush2.bf16.msra.mxu0 %v2581
        %3765 = vmatprep.subr.bf16.mxu0 %v2574
        %3766 = vmatpush2.bf16.msra.mxu0 %v2573
        %3767 = vmatprep.subr.bf16.mxu0 %v2566
        %3768 = vmatpush2.bf16.msra.mxu0 %v2565
        %3769 = vmatprep.subr.bf16.mxu0 %v2558
        %3770 = vmatpush2.bf16.msra.mxu0 %v2557
        %3771 = vmatprep.subr.bf16.mxu0 %v2550
        %3772 = vmatpush2.bf16.msra.mxu0 %v2549
        %3773 = vmatprep.subr.bf16.mxu0 %v2542
        %3774 = vmatpush2.bf16.msra.mxu0 %v2541
        %3775 = vmatprep.subr.bf16.mxu0 %v2534
        %3776 = vmatpush2.bf16.msra.mxu0 %v2533
        %3777 = vmatprep.mubr.bf16.mxu0 %v3084
        %3778 = vmatmul.mubr.bf16.gmra.mxu0 %v3083
        %v3779 = vpop.f32.mrf.mxu0
        %v3780 = vadd.f32 0.0, %v3779
        %v3781 = vpop.f32.mrf.mxu0
        %v3782 = vadd.f32 0.0, %v3781
        %v3783 = vpop.f32.mrf.mxu0
        %v3784 = vadd.f32 0.0, %v3783
        %v3785 = vpop.f32.mrf.mxu0
        %v3786 = vadd.f32 0.0, %v3785
        %3787 = vmatprep.mubr.bf16.mxu0 %v3086
        %3788 = vmatmul.mubr.bf16.gmra.mxu0 %v3085
        %v3789 = vpop.f32.mrf.mxu0
        %v3790 = vadd.f32 0.0, %v3789
        %v3791 = vpop.f32.mrf.mxu0
        %v3792 = vadd.f32 0.0, %v3791
        %v3793 = vpop.f32.mrf.mxu0
        %v3794 = vadd.f32 0.0, %v3793
        %v3795 = vpop.f32.mrf.mxu0
        %v3796 = vadd.f32 0.0, %v3795
        %3797 = vdwg.mxu0
        %v3798 = vadd.f32 %v3409, %v3621
        %v3799 = vadd.f32 %v3411, %v3623
        %v3800 = vadd.f32 %v3462, %v3674
        %v3801 = vadd.f32 %v3464, %v3676
        %v3802 = vadd.f32 %v3515, %v3727
        %v3803 = vadd.f32 %v3517, %v3729
        %v3804 = vadd.f32 %v3568, %v3780
        %v3805 = vadd.f32 %v3570, %v3782
        %v3806 = vadd.f32 %v3413, %v3625
        %v3807 = vadd.f32 %v3415, %v3627
        %v3808 = vadd.f32 %v3466, %v3678
        %v3809 = vadd.f32 %v3468, %v3680
        %v3810 = vadd.f32 %v3519, %v3731
        %v3811 = vadd.f32 %v3521, %v3733
        %v3812 = vadd.f32 %v3572, %v3784
        %v3813 = vadd.f32 %v3574, %v3786
        %v3814 = vadd.f32 %v3419, %v3631
        %v3815 = vadd.f32 %v3421, %v3633
        %v3816 = vadd.f32 %v3472, %v3684
        %v3817 = vadd.f32 %v3474, %v3686
        %v3818 = vadd.f32 %v3525, %v3737
        %v3819 = vadd.f32 %v3527, %v3739
        %v3820 = vadd.f32 %v3578, %v3790
        %v3821 = vadd.f32 %v3580, %v3792
        %v3822 = vadd.f32 %v3423, %v3635
        %v3823 = vadd.f32 %v3425, %v3637
        %v3824 = vadd.f32 %v3476, %v3688
        %v3825 = vadd.f32 %v3478, %v3690
        %v3826 = vadd.f32 %v3529, %v3741
        %v3827 = vadd.f32 %v3531, %v3743
        %v3828 = vadd.f32 %v3582, %v3794
        %v3829 = vadd.f32 %v3584, %v3796
        %v3830 = vtanh.pop %v3798
        %v3831 = vtanh.pop %v3799
        %v3832 = vtanh.pop %v3806
        %v3833 = vtanh.pop %v3807
        %v3834 = vtanh.pop %v3814
        %v3835 = vtanh.pop %v3815
        %v3836 = vtanh.pop %v3822
        %v3837 = vtanh.pop %v3823
        %v3838 = vmul.f32 %v3830, 0.5
        %v3839 = vmul.f32 %v3831, 0.5
        %v3840 = vmul.f32 %v3832, 0.5
        %v3841 = vmul.f32 %v3833, 0.5
        %v3842 = vmul.f32 %v3834, 0.5
        %v3843 = vmul.f32 %v3835, 0.5
        %v3844 = vmul.f32 %v3836, 0.5
        %v3845 = vmul.f32 %v3837, 0.5
        %v3846 = vadd.f32 %v3838, 0.5
        %v3847 = vadd.f32 %v3839, 0.5
        %v3848 = vadd.f32 %v3840, 0.5
        %v3849 = vadd.f32 %v3841, 0.5
        %v3850 = vadd.f32 %v3842, 0.5
        %v3851 = vadd.f32 %v3843, 0.5
        %v3852 = vadd.f32 %v3844, 0.5
        %v3853 = vadd.f32 %v3845, 0.5
        %v3854 = vtanh.pop %v3800
        %v3855 = vtanh.pop %v3801
        %v3856 = vtanh.pop %v3808
        %v3857 = vtanh.pop %v3809
        %v3858 = vtanh.pop %v3816
        %v3859 = vtanh.pop %v3817
        %v3860 = vtanh.pop %v3824
        %v3861 = vtanh.pop %v3825
        %v3862 = vmul.f32 %v3854, 0.5
        %v3863 = vmul.f32 %v3855, 0.5
        %v3864 = vmul.f32 %v3856, 0.5
        %v3865 = vmul.f32 %v3857, 0.5
        %v3866 = vmul.f32 %v3858, 0.5
        %v3867 = vmul.f32 %v3859, 0.5
        %v3868 = vmul.f32 %v3860, 0.5
        %v3869 = vmul.f32 %v3861, 0.5
        %v3870 = vadd.f32 %v3862, 0.5
        %v3871 = vadd.f32 %v3863, 0.5
        %v3872 = vadd.f32 %v3864, 0.5
        %v3873 = vadd.f32 %v3865, 0.5
        %v3874 = vadd.f32 %v3866, 0.5
        %v3875 = vadd.f32 %v3867, 0.5
        %v3876 = vadd.f32 %v3868, 0.5
        %v3877 = vadd.f32 %v3869, 0.5
        %v3878 = vtanh.pop %v3802
        %v3879 = vtanh.pop %v3803
        %v3880 = vtanh.pop %v3810
        %v3881 = vtanh.pop %v3811
        %v3882 = vtanh.pop %v3818
        %v3883 = vtanh.pop %v3819
        %v3884 = vtanh.pop %v3826
        %v3885 = vtanh.pop %v3827
        %v3886 = vtanh.pop %v3804
        %v3887 = vtanh.pop %v3805
        %v3888 = vtanh.pop %v3812
        %v3889 = vtanh.pop %v3813
        %v3890 = vtanh.pop %v3820
        %v3891 = vtanh.pop %v3821
        %v3892 = vtanh.pop %v3828
        %v3893 = vtanh.pop %v3829
        %v3894 = vmul.f32 %v3886, 0.5
        %v3895 = vmul.f32 %v3887, 0.5
        %v3896 = vmul.f32 %v3888, 0.5
        %v3897 = vmul.f32 %v3889, 0.5
        %v3898 = vmul.f32 %v3890, 0.5
        %v3899 = vmul.f32 %v3891, 0.5
        %v3900 = vmul.f32 %v3892, 0.5
        %v3901 = vmul.f32 %v3893, 0.5
        %v3902 = vadd.f32 %v3894, 0.5
        %v3903 = vadd.f32 %v3895, 0.5
        %v3904 = vadd.f32 %v3896, 0.5
        %v3905 = vadd.f32 %v3897, 0.5
        %v3906 = vadd.f32 %v3898, 0.5
        %v3907 = vadd.f32 %v3899, 0.5
        %v3908 = vadd.f32 %v3900, 0.5
        %v3909 = vadd.f32 %v3901, 0.5
        %v3910 = vmul.f32 %v3870, %v3059
        %v3911 = vmul.f32 %v3871, %v3060
        %v3912 = vmul.f32 %v3872, %v3061
        %v3913 = vmul.f32 %v3873, %v3062
        %v3914 = vmul.f32 %v3874, %v3063
        %v3915 = vmul.f32 %v3875, %v3064
        %v3916 = vmul.f32 %v3876, %v3065
        %v3917 = vmul.f32 %v3877, %v3066
        %v3918 = vmul.f32 %v3846, %v3878
        %v3919 = vmul.f32 %v3847, %v3879
        %v3920 = vmul.f32 %v3848, %v3880
        %v3921 = vmul.f32 %v3849, %v3881
        %v3922 = vmul.f32 %v3850, %v3882
        %v3923 = vmul.f32 %v3851, %v3883
        %v3924 = vmul.f32 %v3852, %v3884
        %v3925 = vmul.f32 %v3853, %v3885
        %v3926 = vadd.f32 %v3910, %v3918
        %v3927 = vadd.f32 %v3911, %v3919
        %v3928 = vadd.f32 %v3912, %v3920
        %v3929 = vadd.f32 %v3913, %v3921
        %v3930 = vadd.f32 %v3914, %v3922
        %v3931 = vadd.f32 %v3915, %v3923
        %v3932 = vadd.f32 %v3916, %v3924
        %v3933 = vadd.f32 %v3917, %v3925
        %v3934 = vtanh.pop %v3926
        %v3935 = vtanh.pop %v3927
        %v3936 = vtanh.pop %v3928
        %v3937 = vtanh.pop %v3929
        %v3938 = vtanh.pop %v3930
        %v3939 = vtanh.pop %v3931
        %v3940 = vtanh.pop %v3932
        %v3941 = vtanh.pop %v3933
        %v3942 = vmul.f32 %v3902, %v3934
        %v3943 = vmul.f32 %v3903, %v3935
        %v3944 = vmul.f32 %v3904, %v3936
        %v3945 = vmul.f32 %v3905, %v3937
        %v3946 = vmul.f32 %v3906, %v3938
        %v3947 = vmul.f32 %v3907, %v3939
        %v3948 = vmul.f32 %v3908, %v3940
        %v3949 = vmul.f32 %v3909, %v3941
        %v3950 = vpack.c.bf16 %v3944, %v3942
        %v3951 = vpack.c.bf16 %v3945, %v3943
        %v3952 = vpack.c.bf16 %v3948, %v3946
        %v3953 = vpack.c.bf16 %v3949, %v3947
        %3954 = vmatprep.subr.bf16.mxu0 %v1417
        %3955 = vmatpush1.bf16.msra.mxu0 %v1416
        %3956 = vmatprep.subr.bf16.mxu0 %v1413
        %3957 = vmatpush1.bf16.msra.mxu0 %v1412
        %3958 = vmatprep.subr.bf16.mxu0 %v1409
        %3959 = vmatpush1.bf16.msra.mxu0 %v1408
        %3960 = vmatprep.subr.bf16.mxu0 %v1405
        %3961 = vmatpush1.bf16.msra.mxu0 %v1404
        %3962 = vmatprep.subr.bf16.mxu0 %v1401
        %3963 = vmatpush1.bf16.msra.mxu0 %v1400
        %3964 = vmatprep.subr.bf16.mxu0 %v1397
        %3965 = vmatpush1.bf16.msra.mxu0 %v1396
        %3966 = vmatprep.subr.bf16.mxu0 %v1393
        %3967 = vmatpush1.bf16.msra.mxu0 %v1392
        %3968 = vmatprep.subr.bf16.mxu0 %v1389
        %3969 = vmatpush1.bf16.msra.mxu0 %v1388
        %3970 = vmatprep.subr.bf16.mxu0 %v1449
        %3971 = vmatpush2.bf16.msra.mxu0 %v1448
        %3972 = vmatprep.subr.bf16.mxu0 %v1445
        %3973 = vmatpush2.bf16.msra.mxu0 %v1444
        %3974 = vmatprep.subr.bf16.mxu0 %v1441
        %3975 = vmatpush2.bf16.msra.mxu0 %v1440
        %3976 = vmatprep.subr.bf16.mxu0 %v1437
        %3977 = vmatpush2.bf16.msra.mxu0 %v1436
        %3978 = vmatprep.subr.bf16.mxu0 %v1433
        %3979 = vmatpush2.bf16.msra.mxu0 %v1432
        %3980 = vmatprep.subr.bf16.mxu0 %v1429
        %3981 = vmatpush2.bf16.msra.mxu0 %v1428
        %3982 = vmatprep.subr.bf16.mxu0 %v1425
        %3983 = vmatpush2.bf16.msra.mxu0 %v1424
        %3984 = vmatprep.subr.bf16.mxu0 %v1421
        %3985 = vmatpush2.bf16.msra.mxu0 %v1420
        %3986 = vmatprep.mubr.bf16.mxu0 %v3951
        %3987 = vmatmul.mubr.bf16.gmra.mxu0 %v3950
        %v3988 = vpop.f32.mrf.mxu0
        %v3989 = vadd.f32 %v1083, %v3988
        %v3990 = vpop.f32.mrf.mxu0
        %v3991 = vadd.f32 %v1087, %v3990
        %v3992 = vpop.f32.mrf.mxu0
        %v3993 = vadd.f32 %v1083, %v3992
        %v3994 = vpop.f32.mrf.mxu0
        %v3995 = vadd.f32 %v1087, %v3994
        %3996 = vmatprep.mubr.bf16.mxu0 %v3953
        %3997 = vmatmul.mubr.bf16.gmra.mxu0 %v3952
        %v3998 = vpop.f32.mrf.mxu0
        %v3999 = vadd.f32 %v1083, %v3998
        %v4000 = vpop.f32.mrf.mxu0
        %v4001 = vadd.f32 %v1087, %v4000
        %v4002 = vpop.f32.mrf.mxu0
        %v4003 = vadd.f32 %v1083, %v4002
        %v4004 = vpop.f32.mrf.mxu0
        %v4005 = vadd.f32 %v1087, %v4004
        %4006 = vdwg.mxu0
        %4007 = vmatprep.subr.bf16.mxu0 %v1481
        %4008 = vmatpush1.bf16.msra.mxu0 %v1480
        %4009 = vmatprep.subr.bf16.mxu0 %v1477
        %4010 = vmatpush1.bf16.msra.mxu0 %v1476
        %4011 = vmatprep.subr.bf16.mxu0 %v1473
        %4012 = vmatpush1.bf16.msra.mxu0 %v1472
        %4013 = vmatprep.subr.bf16.mxu0 %v1469
        %4014 = vmatpush1.bf16.msra.mxu0 %v1468
        %4015 = vmatprep.subr.bf16.mxu0 %v1465
        %4016 = vmatpush1.bf16.msra.mxu0 %v1464
        %4017 = vmatprep.subr.bf16.mxu0 %v1461
        %4018 = vmatpush1.bf16.msra.mxu0 %v1460
        %4019 = vmatprep.subr.bf16.mxu0 %v1457
        %4020 = vmatpush1.bf16.msra.mxu0 %v1456
        %4021 = vmatprep.subr.bf16.mxu0 %v1453
        %4022 = vmatpush1.bf16.msra.mxu0 %v1452
        %4023 = vmatprep.subr.bf16.mxu0 0
        %4024 = vmatpush2.bf16.msra.mxu0 0
        %4025 = vmatprep.subr.bf16.mxu0 0
        %4026 = vmatpush2.bf16.msra.mxu0 0
        %4027 = vmatprep.subr.bf16.mxu0 0
        %4028 = vmatpush2.bf16.msra.mxu0 0
        %4029 = vmatprep.subr.bf16.mxu0 0
        %4030 = vmatpush2.bf16.msra.mxu0 0
        %4031 = vmatprep.subr.bf16.mxu0 0
        %4032 = vmatpush2.bf16.msra.mxu0 0
        %4033 = vmatprep.subr.bf16.mxu0 0
        %4034 = vmatpush2.bf16.msra.mxu0 0
        %4035 = vmatprep.subr.bf16.mxu0 0
        %4036 = vmatpush2.bf16.msra.mxu0 0
        %4037 = vmatprep.subr.bf16.mxu0 0
        %4038 = vmatpush2.bf16.msra.mxu0 0
        %4039 = vmatprep.mubr.bf16.mxu0 0
        %4040 = vmatmul.mubr.bf16.gmra.mxu0 %v3359
        %v4041 = vpop.f32.mrf.mxu0
        %v4042 = vadd.f32 %v3989, %v4041
        %v4043 = vpop.f32.mrf.mxu0
        %v4044 = vadd.f32 %v3991, %v4043
        %v4045 = vpop.f32.mrf.mxu0
        %v4046 = vadd.f32 %v3993, %v4045
        %v4047 = vpop.f32.mrf.mxu0
        %v4048 = vadd.f32 %v3995, %v4047
        %4049 = vmatprep.mubr.bf16.mxu0 0
        %4050 = vmatmul.mubr.bf16.gmra.mxu0 %v3360
        %v4051 = vpop.f32.mrf.mxu0
        %v4052 = vadd.f32 %v3999, %v4051
        %v4053 = vpop.f32.mrf.mxu0
        %v4054 = vadd.f32 %v4001, %v4053
        %v4055 = vpop.f32.mrf.mxu0
        %v4056 = vadd.f32 %v4003, %v4055
        %v4057 = vpop.f32.mrf.mxu0
        %v4058 = vadd.f32 %v4005, %v4057
        %4059 = vdwg.mxu0
        %4060 = vmatprep.subr.bf16.mxu0 %v1419
        %4061 = vmatpush1.bf16.msra.mxu0 %v1418
        %4062 = vmatprep.subr.bf16.mxu0 %v1415
        %4063 = vmatpush1.bf16.msra.mxu0 %v1414
        %4064 = vmatprep.subr.bf16.mxu0 %v1411
        %4065 = vmatpush1.bf16.msra.mxu0 %v1410
        %4066 = vmatprep.subr.bf16.mxu0 %v1407
        %4067 = vmatpush1.bf16.msra.mxu0 %v1406
        %4068 = vmatprep.subr.bf16.mxu0 %v1403
        %4069 = vmatpush1.bf16.msra.mxu0 %v1402
        %4070 = vmatprep.subr.bf16.mxu0 %v1399
        %4071 = vmatpush1.bf16.msra.mxu0 %v1398
        %4072 = vmatprep.subr.bf16.mxu0 %v1395
        %4073 = vmatpush1.bf16.msra.mxu0 %v1394
        %4074 = vmatprep.subr.bf16.mxu0 %v1391
        %4075 = vmatpush1.bf16.msra.mxu0 %v1390
        %4076 = vmatprep.subr.bf16.mxu0 %v1451
        %4077 = vmatpush2.bf16.msra.mxu0 %v1450
        %4078 = vmatprep.subr.bf16.mxu0 %v1447
        %4079 = vmatpush2.bf16.msra.mxu0 %v1446
        %4080 = vmatprep.subr.bf16.mxu0 %v1443
        %4081 = vmatpush2.bf16.msra.mxu0 %v1442
        %4082 = vmatprep.subr.bf16.mxu0 %v1439
        %4083 = vmatpush2.bf16.msra.mxu0 %v1438
        %4084 = vmatprep.subr.bf16.mxu0 %v1435
        %4085 = vmatpush2.bf16.msra.mxu0 %v1434
        %4086 = vmatprep.subr.bf16.mxu0 %v1431
        %4087 = vmatpush2.bf16.msra.mxu0 %v1430
        %4088 = vmatprep.subr.bf16.mxu0 %v1427
        %4089 = vmatpush2.bf16.msra.mxu0 %v1426
        %4090 = vmatprep.subr.bf16.mxu0 %v1423
        %4091 = vmatpush2.bf16.msra.mxu0 %v1422
        %4092 = vmatprep.mubr.bf16.mxu0 %v3951
        %4093 = vmatmul.mubr.bf16.gmra.mxu0 %v3950
        %v4094 = vpop.f32.mrf.mxu0
        %v4095 = vadd.f32 %v1091, %v4094
        %v4096 = vpop.f32.mrf.mxu0
        %v4097 = vadd.f32 %v1095, %v4096
        %v4098 = vpop.f32.mrf.mxu0
        %v4099 = vadd.f32 %v1091, %v4098
        %v4100 = vpop.f32.mrf.mxu0
        %v4101 = vadd.f32 %v1095, %v4100
        %4102 = vmatprep.mubr.bf16.mxu0 %v3953
        %4103 = vmatmul.mubr.bf16.gmra.mxu0 %v3952
        %v4104 = vpop.f32.mrf.mxu0
        %v4105 = vadd.f32 %v1091, %v4104
        %v4106 = vpop.f32.mrf.mxu0
        %v4107 = vadd.f32 %v1095, %v4106
        %v4108 = vpop.f32.mrf.mxu0
        %v4109 = vadd.f32 %v1091, %v4108
        %v4110 = vpop.f32.mrf.mxu0
        %v4111 = vadd.f32 %v1095, %v4110
        %4112 = vdwg.mxu0
        %4113 = vmatprep.subr.bf16.mxu0 %v1483
        %4114 = vmatpush1.bf16.msra.mxu0 %v1482
        %4115 = vmatprep.subr.bf16.mxu0 %v1479
        %4116 = vmatpush1.bf16.msra.mxu0 %v1478
        %4117 = vmatprep.subr.bf16.mxu0 %v1475
        %4118 = vmatpush1.bf16.msra.mxu0 %v1474
        %4119 = vmatprep.subr.bf16.mxu0 %v1471
        %4120 = vmatpush1.bf16.msra.mxu0 %v1470
        %4121 = vmatprep.subr.bf16.mxu0 %v1467
        %4122 = vmatpush1.bf16.msra.mxu0 %v1466
        %4123 = vmatprep.subr.bf16.mxu0 %v1463
        %4124 = vmatpush1.bf16.msra.mxu0 %v1462
        %4125 = vmatprep.subr.bf16.mxu0 %v1459
        %4126 = vmatpush1.bf16.msra.mxu0 %v1458
        %4127 = vmatprep.subr.bf16.mxu0 %v1455
        %4128 = vmatpush1.bf16.msra.mxu0 %v1454
        %4129 = vmatprep.subr.bf16.mxu0 0
        %4130 = vmatpush2.bf16.msra.mxu0 0
        %4131 = vmatprep.subr.bf16.mxu0 0
        %4132 = vmatpush2.bf16.msra.mxu0 0
        %4133 = vmatprep.subr.bf16.mxu0 0
        %4134 = vmatpush2.bf16.msra.mxu0 0
        %4135 = vmatprep.subr.bf16.mxu0 0
        %4136 = vmatpush2.bf16.msra.mxu0 0
        %4137 = vmatprep.subr.bf16.mxu0 0
        %4138 = vmatpush2.bf16.msra.mxu0 0
        %4139 = vmatprep.subr.bf16.mxu0 0
        %4140 = vmatpush2.bf16.msra.mxu0 0
        %4141 = vmatprep.subr.bf16.mxu0 0
        %4142 = vmatpush2.bf16.msra.mxu0 0
        %4143 = vmatprep.subr.bf16.mxu0 0
        %4144 = vmatpush2.bf16.msra.mxu0 0
        %4145 = vmatprep.mubr.bf16.mxu0 0
        %4146 = vmatmul.mubr.bf16.gmra.mxu0 %v3359
        %v4147 = vpop.f32.mrf.mxu0
        %v4148 = vadd.f32 %v4095, %v4147
        %v4149 = vpop.f32.mrf.mxu0
        %v4150 = vadd.f32 %v4097, %v4149
        %v4151 = vpop.f32.mrf.mxu0
        %v4152 = vadd.f32 %v4099, %v4151
        %v4153 = vpop.f32.mrf.mxu0
        %v4154 = vadd.f32 %v4101, %v4153
        %4155 = vmatprep.mubr.bf16.mxu0 0
        %4156 = vmatmul.mubr.bf16.gmra.mxu0 %v3360
        %v4157 = vpop.f32.mrf.mxu0
        %v4158 = vadd.f32 %v4105, %v4157
        %v4159 = vpop.f32.mrf.mxu0
        %v4160 = vadd.f32 %v4107, %v4159
        %v4161 = vpop.f32.mrf.mxu0
        %v4162 = vadd.f32 %v4109, %v4161
        %v4163 = vpop.f32.mrf.mxu0
        %v4164 = vadd.f32 %v4111, %v4163
        %4165 = vdwg.mxu0
        %v4166 = vtanh.pop %v4042
        %v4167 = vtanh.pop %v4046
        %v4168 = vtanh.pop %v4052
        %v4169 = vtanh.pop %v4056
        %v4170 = vmul.f32 %v4166, 0.5
        %v4171 = vmul.f32 %v4167, 0.5
        %v4172 = vmul.f32 %v4168, 0.5
        %v4173 = vmul.f32 %v4169, 0.5
        %v4174 = vadd.f32 %v4170, 0.5
        %v4175 = vadd.f32 %v4171, 0.5
        %v4176 = vadd.f32 %v4172, 0.5
        %v4177 = vadd.f32 %v4173, 0.5
        %v4178 = vtanh.pop %v4044
        %v4179 = vtanh.pop %v4048
        %v4180 = vtanh.pop %v4054
        %v4181 = vtanh.pop %v4058
        %v4182 = vmul.f32 %v4178, 0.5
        %v4183 = vmul.f32 %v4179, 0.5
        %v4184 = vmul.f32 %v4180, 0.5
        %v4185 = vmul.f32 %v4181, 0.5
        %v4186 = vadd.f32 %v4182, 0.5
        %v4187 = vadd.f32 %v4183, 0.5
        %v4188 = vadd.f32 %v4184, 0.5
        %v4189 = vadd.f32 %v4185, 0.5
        %v4190 = vtanh.pop %v4148
        %v4191 = vtanh.pop %v4152
        %v4192 = vtanh.pop %v4158
        %v4193 = vtanh.pop %v4162
        %v4194 = vtanh.pop %v4150
        %v4195 = vtanh.pop %v4154
        %v4196 = vtanh.pop %v4160
        %v4197 = vtanh.pop %v4164
        %v4198 = vmul.f32 %v4194, 0.5
        %v4199 = vmul.f32 %v4195, 0.5
        %v4200 = vmul.f32 %v4196, 0.5
        %v4201 = vmul.f32 %v4197, 0.5
        %v4202 = vadd.f32 %v4198, 0.5
        %v4203 = vadd.f32 %v4199, 0.5
        %v4204 = vadd.f32 %v4200, 0.5
        %v4205 = vadd.f32 %v4201, 0.5
        %v4206 = vmul.f32 %v4186, %v3347
        %v4207 = vmul.f32 %v4187, %v3348
        %v4208 = vmul.f32 %v4188, %v3349
        %v4209 = vmul.f32 %v4189, %v3350
        %v4210 = vmul.f32 %v4174, %v4190
        %v4211 = vmul.f32 %v4175, %v4191
        %v4212 = vmul.f32 %v4176, %v4192
        %v4213 = vmul.f32 %v4177, %v4193
        %v4214 = vadd.f32 %v4206, %v4210
        %v4215 = vadd.f32 %v4207, %v4211
        %v4216 = vadd.f32 %v4208, %v4212
        %v4217 = vadd.f32 %v4209, %v4213
        %v4218 = vtanh.pop %v4214
        %v4219 = vtanh.pop %v4215
        %v4220 = vtanh.pop %v4216
        %v4221 = vtanh.pop %v4217
        %v4222 = vmul.f32 %v4202, %v4218
        %v4223 = vmul.f32 %v4203, %v4219
        %v4224 = vmul.f32 %v4204, %v4220
        %v4225 = vmul.f32 %v4205, %v4221
        %v4226 = vpack.c.bf16 %v4223, %v4222
        %v4227 = vpack.c.bf16 %v4225, %v4224
        %s4228 = scalar_lea.vmem %s357, 96 [#allocation2]
        %v4229 = vld [vmem:[%s4228] sm:$0xff]
        %v4230 = vld [vmem:[%s4228 + $0x8] sm:$0xff]
        %v4231 = vld [vmem:[%s4228 + $0x10] sm:$0xff]
        %v4232 = vld [vmem:[%s4228 + $0x18] sm:$0xff]
        %v4233 = vpack.c.bf16 %v4230, %v4229
        %v4234 = vpack.c.bf16 %v4232, %v4231
        %v4236 = vsel %vm708, %v4233, 0
        %v4239 = vsel %vm708, %v4234, 0
        %4241 = vmatprep.subr.bf16.mxu0 0
        %4242 = vmatpush1.bf16.msra.mxu0 0
        %4243 = vmatprep.subr.bf16.mxu0 0
        %4244 = vmatpush1.bf16.msra.mxu0 0
        %4245 = vmatprep.subr.bf16.mxu0 0
        %4246 = vmatpush1.bf16.msra.mxu0 0
        %4247 = vmatprep.subr.bf16.mxu0 0
        %4248 = vmatpush1.bf16.msra.mxu0 0
        %4249 = vmatprep.subr.bf16.mxu0 0
        %4250 = vmatpush1.bf16.msra.mxu0 0
        %4251 = vmatprep.subr.bf16.mxu0 0
        %4252 = vmatpush1.bf16.msra.mxu0 0
        %4253 = vmatprep.subr.bf16.mxu0 0
        %4254 = vmatpush1.bf16.msra.mxu0 0
        %4255 = vmatprep.subr.bf16.mxu0 %v723
        %4256 = vmatpush1.bf16.msra.mxu0 %v720
        %4257 = vmatprep.subr.bf16.mxu0 0
        %4258 = vmatpush2.bf16.msra.mxu0 0
        %4259 = vmatprep.subr.bf16.mxu0 0
        %4260 = vmatpush2.bf16.msra.mxu0 0
        %4261 = vmatprep.subr.bf16.mxu0 0
        %4262 = vmatpush2.bf16.msra.mxu0 0
        %4263 = vmatprep.subr.bf16.mxu0 0
        %4264 = vmatpush2.bf16.msra.mxu0 0
        %4265 = vmatprep.subr.bf16.mxu0 0
        %4266 = vmatpush2.bf16.msra.mxu0 0
        %4267 = vmatprep.subr.bf16.mxu0 0
        %4268 = vmatpush2.bf16.msra.mxu0 0
        %4269 = vmatprep.subr.bf16.mxu0 0
        %4270 = vmatpush2.bf16.msra.mxu0 0
        %4271 = vmatprep.subr.bf16.mxu0 0
        %4272 = vmatpush2.bf16.msra.mxu0 0
        %4273 = vmatprep.mubr.bf16.mxu0 0
        %4274 = vmatmul.mubr.bf16.gmra.mxu0 %v4236
        %v4275 = vpop.f32.mrf.mxu0
        %v4276 = vadd.f32 %v639, %v4275
        %v4277 = vpop.f32.mrf.mxu0
        %v4278 = vadd.f32 %v643, %v4277
        %v4279 = vpop.f32.mrf.mxu0
        %v4280 = vadd.f32 %v639, %v4279
        %v4281 = vpop.f32.mrf.mxu0
        %v4282 = vadd.f32 %v643, %v4281
        %4283 = vmatprep.mubr.bf16.mxu0 0
        %4284 = vmatmul.mubr.bf16.gmra.mxu0 %v4239
        %v4285 = vpop.f32.mrf.mxu0
        %v4286 = vadd.f32 %v639, %v4285
        %v4287 = vpop.f32.mrf.mxu0
        %v4288 = vadd.f32 %v643, %v4287
        %v4289 = vpop.f32.mrf.mxu0
        %v4290 = vadd.f32 %v639, %v4289
        %v4291 = vpop.f32.mrf.mxu0
        %v4292 = vadd.f32 %v643, %v4291
        %4293 = vdwg.mxu0
        %4294 = vmatprep.subr.bf16.mxu0 0
        %4295 = vmatpush1.bf16.msra.mxu0 0
        %4296 = vmatprep.subr.bf16.mxu0 0
        %4297 = vmatpush1.bf16.msra.mxu0 0
        %4298 = vmatprep.subr.bf16.mxu0 0
        %4299 = vmatpush1.bf16.msra.mxu0 0
        %4300 = vmatprep.subr.bf16.mxu0 0
        %4301 = vmatpush1.bf16.msra.mxu0 0
        %4302 = vmatprep.subr.bf16.mxu0 0
        %4303 = vmatpush1.bf16.msra.mxu0 0
        %4304 = vmatprep.subr.bf16.mxu0 0
        %4305 = vmatpush1.bf16.msra.mxu0 0
        %4306 = vmatprep.subr.bf16.mxu0 0
        %4307 = vmatpush1.bf16.msra.mxu0 0
        %4308 = vmatprep.subr.bf16.mxu0 %v729
        %4309 = vmatpush1.bf16.msra.mxu0 %v726
        %4310 = vmatprep.subr.bf16.mxu0 0
        %4311 = vmatpush2.bf16.msra.mxu0 0
        %4312 = vmatprep.subr.bf16.mxu0 0
        %4313 = vmatpush2.bf16.msra.mxu0 0
        %4314 = vmatprep.subr.bf16.mxu0 0
        %4315 = vmatpush2.bf16.msra.mxu0 0
        %4316 = vmatprep.subr.bf16.mxu0 0
        %4317 = vmatpush2.bf16.msra.mxu0 0
        %4318 = vmatprep.subr.bf16.mxu0 0
        %4319 = vmatpush2.bf16.msra.mxu0 0
        %4320 = vmatprep.subr.bf16.mxu0 0
        %4321 = vmatpush2.bf16.msra.mxu0 0
        %4322 = vmatprep.subr.bf16.mxu0 0
        %4323 = vmatpush2.bf16.msra.mxu0 0
        %4324 = vmatprep.subr.bf16.mxu0 0
        %4325 = vmatpush2.bf16.msra.mxu0 0
        %4326 = vmatprep.mubr.bf16.mxu0 0
        %4327 = vmatmul.mubr.bf16.gmra.mxu0 %v4236
        %v4328 = vpop.f32.mrf.mxu0
        %v4329 = vadd.f32 %v647, %v4328
        %v4330 = vpop.f32.mrf.mxu0
        %v4331 = vadd.f32 %v651, %v4330
        %v4332 = vpop.f32.mrf.mxu0
        %v4333 = vadd.f32 %v647, %v4332
        %v4334 = vpop.f32.mrf.mxu0
        %v4335 = vadd.f32 %v651, %v4334
        %4336 = vmatprep.mubr.bf16.mxu0 0
        %4337 = vmatmul.mubr.bf16.gmra.mxu0 %v4239
        %v4338 = vpop.f32.mrf.mxu0
        %v4339 = vadd.f32 %v647, %v4338
        %v4340 = vpop.f32.mrf.mxu0
        %v4341 = vadd.f32 %v651, %v4340
        %v4342 = vpop.f32.mrf.mxu0
        %v4343 = vadd.f32 %v647, %v4342
        %v4344 = vpop.f32.mrf.mxu0
        %v4345 = vadd.f32 %v651, %v4344
        %4346 = vdwg.mxu0
        %4347 = vmatprep.subr.bf16.mxu0 0
        %4348 = vmatpush1.bf16.msra.mxu0 0
        %4349 = vmatprep.subr.bf16.mxu0 0
        %4350 = vmatpush1.bf16.msra.mxu0 0
        %4351 = vmatprep.subr.bf16.mxu0 0
        %4352 = vmatpush1.bf16.msra.mxu0 0
        %4353 = vmatprep.subr.bf16.mxu0 0
        %4354 = vmatpush1.bf16.msra.mxu0 0
        %4355 = vmatprep.subr.bf16.mxu0 0
        %4356 = vmatpush1.bf16.msra.mxu0 0
        %4357 = vmatprep.subr.bf16.mxu0 0
        %4358 = vmatpush1.bf16.msra.mxu0 0
        %4359 = vmatprep.subr.bf16.mxu0 0
        %4360 = vmatpush1.bf16.msra.mxu0 0
        %4361 = vmatprep.subr.bf16.mxu0 %v735
        %4362 = vmatpush1.bf16.msra.mxu0 %v732
        %4363 = vmatprep.subr.bf16.mxu0 0
        %4364 = vmatpush2.bf16.msra.mxu0 0
        %4365 = vmatprep.subr.bf16.mxu0 0
        %4366 = vmatpush2.bf16.msra.mxu0 0
        %4367 = vmatprep.subr.bf16.mxu0 0
        %4368 = vmatpush2.bf16.msra.mxu0 0
        %4369 = vmatprep.subr.bf16.mxu0 0
        %4370 = vmatpush2.bf16.msra.mxu0 0
        %4371 = vmatprep.subr.bf16.mxu0 0
        %4372 = vmatpush2.bf16.msra.mxu0 0
        %4373 = vmatprep.subr.bf16.mxu0 0
        %4374 = vmatpush2.bf16.msra.mxu0 0
        %4375 = vmatprep.subr.bf16.mxu0 0
        %4376 = vmatpush2.bf16.msra.mxu0 0
        %4377 = vmatprep.subr.bf16.mxu0 0
        %4378 = vmatpush2.bf16.msra.mxu0 0
        %4379 = vmatprep.mubr.bf16.mxu0 0
        %4380 = vmatmul.mubr.bf16.gmra.mxu0 %v4236
        %v4381 = vpop.f32.mrf.mxu0
        %v4382 = vadd.f32 %v655, %v4381
        %v4383 = vpop.f32.mrf.mxu0
        %v4384 = vadd.f32 %v659, %v4383
        %v4385 = vpop.f32.mrf.mxu0
        %v4386 = vadd.f32 %v655, %v4385
        %v4387 = vpop.f32.mrf.mxu0
        %v4388 = vadd.f32 %v659, %v4387
        %4389 = vmatprep.mubr.bf16.mxu0 0
        %4390 = vmatmul.mubr.bf16.gmra.mxu0 %v4239
        %v4391 = vpop.f32.mrf.mxu0
        %v4392 = vadd.f32 %v655, %v4391
        %v4393 = vpop.f32.mrf.mxu0
        %v4394 = vadd.f32 %v659, %v4393
        %v4395 = vpop.f32.mrf.mxu0
        %v4396 = vadd.f32 %v655, %v4395
        %v4397 = vpop.f32.mrf.mxu0
        %v4398 = vadd.f32 %v659, %v4397
        %4399 = vdwg.mxu0
        %4400 = vmatprep.subr.bf16.mxu0 0
        %4401 = vmatpush1.bf16.msra.mxu0 0
        %4402 = vmatprep.subr.bf16.mxu0 0
        %4403 = vmatpush1.bf16.msra.mxu0 0
        %4404 = vmatprep.subr.bf16.mxu0 0
        %4405 = vmatpush1.bf16.msra.mxu0 0
        %4406 = vmatprep.subr.bf16.mxu0 0
        %4407 = vmatpush1.bf16.msra.mxu0 0
        %4408 = vmatprep.subr.bf16.mxu0 0
        %4409 = vmatpush1.bf16.msra.mxu0 0
        %4410 = vmatprep.subr.bf16.mxu0 0
        %4411 = vmatpush1.bf16.msra.mxu0 0
        %4412 = vmatprep.subr.bf16.mxu0 0
        %4413 = vmatpush1.bf16.msra.mxu0 0
        %4414 = vmatprep.subr.bf16.mxu0 %v741
        %4415 = vmatpush1.bf16.msra.mxu0 %v738
        %4416 = vmatprep.subr.bf16.mxu0 0
        %4417 = vmatpush2.bf16.msra.mxu0 0
        %4418 = vmatprep.subr.bf16.mxu0 0
        %4419 = vmatpush2.bf16.msra.mxu0 0
        %4420 = vmatprep.subr.bf16.mxu0 0
        %4421 = vmatpush2.bf16.msra.mxu0 0
        %4422 = vmatprep.subr.bf16.mxu0 0
        %4423 = vmatpush2.bf16.msra.mxu0 0
        %4424 = vmatprep.subr.bf16.mxu0 0
        %4425 = vmatpush2.bf16.msra.mxu0 0
        %4426 = vmatprep.subr.bf16.mxu0 0
        %4427 = vmatpush2.bf16.msra.mxu0 0
        %4428 = vmatprep.subr.bf16.mxu0 0
        %4429 = vmatpush2.bf16.msra.mxu0 0
        %4430 = vmatprep.subr.bf16.mxu0 0
        %4431 = vmatpush2.bf16.msra.mxu0 0
        %4432 = vmatprep.mubr.bf16.mxu0 0
        %4433 = vmatmul.mubr.bf16.gmra.mxu0 %v4236
        %v4434 = vpop.f32.mrf.mxu0
        %v4435 = vadd.f32 %v663, %v4434
        %v4436 = vpop.f32.mrf.mxu0
        %v4437 = vadd.f32 %v667, %v4436
        %v4438 = vpop.f32.mrf.mxu0
        %v4439 = vadd.f32 %v663, %v4438
        %v4440 = vpop.f32.mrf.mxu0
        %v4441 = vadd.f32 %v667, %v4440
        %4442 = vmatprep.mubr.bf16.mxu0 0
        %4443 = vmatmul.mubr.bf16.gmra.mxu0 %v4239
        %v4444 = vpop.f32.mrf.mxu0
        %v4445 = vadd.f32 %v663, %v4444
        %v4446 = vpop.f32.mrf.mxu0
        %v4447 = vadd.f32 %v667, %v4446
        %v4448 = vpop.f32.mrf.mxu0
        %v4449 = vadd.f32 %v663, %v4448
        %v4450 = vpop.f32.mrf.mxu0
        %v4451 = vadd.f32 %v667, %v4450
        %4452 = vdwg.mxu0
        %4453 = vmatprep.subr.bf16.mxu0 %v2520
        %4454 = vmatpush1.bf16.msra.mxu0 %v2519
        %4455 = vmatprep.subr.bf16.mxu0 %v2512
        %4456 = vmatpush1.bf16.msra.mxu0 %v2511
        %4457 = vmatprep.subr.bf16.mxu0 %v2504
        %4458 = vmatpush1.bf16.msra.mxu0 %v2503
        %4459 = vmatprep.subr.bf16.mxu0 %v2496
        %4460 = vmatpush1.bf16.msra.mxu0 %v2495
        %4461 = vmatprep.subr.bf16.mxu0 %v2488
        %4462 = vmatpush1.bf16.msra.mxu0 %v2487
        %4463 = vmatprep.subr.bf16.mxu0 %v2480
        %4464 = vmatpush1.bf16.msra.mxu0 %v2479
        %4465 = vmatprep.subr.bf16.mxu0 %v2472
        %4466 = vmatpush1.bf16.msra.mxu0 %v2471
        %4467 = vmatprep.subr.bf16.mxu0 %v2464
        %4468 = vmatpush1.bf16.msra.mxu0 %v2463
        %4469 = vmatprep.subr.bf16.mxu0 %v2584
        %4470 = vmatpush2.bf16.msra.mxu0 %v2583
        %4471 = vmatprep.subr.bf16.mxu0 %v2576
        %4472 = vmatpush2.bf16.msra.mxu0 %v2575
        %4473 = vmatprep.subr.bf16.mxu0 %v2568
        %4474 = vmatpush2.bf16.msra.mxu0 %v2567
        %4475 = vmatprep.subr.bf16.mxu0 %v2560
        %4476 = vmatpush2.bf16.msra.mxu0 %v2559
        %4477 = vmatprep.subr.bf16.mxu0 %v2552
        %4478 = vmatpush2.bf16.msra.mxu0 %v2551
        %4479 = vmatprep.subr.bf16.mxu0 %v2544
        %4480 = vmatpush2.bf16.msra.mxu0 %v2543
        %4481 = vmatprep.subr.bf16.mxu0 %v2536
        %4482 = vmatpush2.bf16.msra.mxu0 %v2535
        %4483 = vmatprep.subr.bf16.mxu0 %v2528
        %4484 = vmatpush2.bf16.msra.mxu0 %v2527
        %4485 = vmatprep.mubr.bf16.mxu0 %v3951
        %4486 = vmatmul.mubr.bf16.gmra.mxu0 %v3950
        %v4487 = vpop.f32.mrf.mxu0
        %v4488 = vadd.f32 0.0, %v4487
        %v4489 = vpop.f32.mrf.mxu0
        %v4490 = vadd.f32 0.0, %v4489
        %v4491 = vpop.f32.mrf.mxu0
        %v4492 = vadd.f32 0.0, %v4491
        %v4493 = vpop.f32.mrf.mxu0
        %v4494 = vadd.f32 0.0, %v4493
        %4495 = vmatprep.mubr.bf16.mxu0 %v3953
        %4496 = vmatmul.mubr.bf16.gmra.mxu0 %v3952
        %v4497 = vpop.f32.mrf.mxu0
        %v4498 = vadd.f32 0.0, %v4497
        %v4499 = vpop.f32.mrf.mxu0
        %v4500 = vadd.f32 0.0, %v4499
        %v4501 = vpop.f32.mrf.mxu0
        %v4502 = vadd.f32 0.0, %v4501
        %v4503 = vpop.f32.mrf.mxu0
        %v4504 = vadd.f32 0.0, %v4503
        %4505 = vdwg.mxu0
        %4506 = vmatprep.subr.bf16.mxu0 %v2522
        %4507 = vmatpush1.bf16.msra.mxu0 %v2521
        %4508 = vmatprep.subr.bf16.mxu0 %v2514
        %4509 = vmatpush1.bf16.msra.mxu0 %v2513
        %4510 = vmatprep.subr.bf16.mxu0 %v2506
        %4511 = vmatpush1.bf16.msra.mxu0 %v2505
        %4512 = vmatprep.subr.bf16.mxu0 %v2498
        %4513 = vmatpush1.bf16.msra.mxu0 %v2497
        %4514 = vmatprep.subr.bf16.mxu0 %v2490
        %4515 = vmatpush1.bf16.msra.mxu0 %v2489
        %4516 = vmatprep.subr.bf16.mxu0 %v2482
        %4517 = vmatpush1.bf16.msra.mxu0 %v2481
        %4518 = vmatprep.subr.bf16.mxu0 %v2474
        %4519 = vmatpush1.bf16.msra.mxu0 %v2473
        %4520 = vmatprep.subr.bf16.mxu0 %v2466
        %4521 = vmatpush1.bf16.msra.mxu0 %v2465
        %4522 = vmatprep.subr.bf16.mxu0 %v2586
        %4523 = vmatpush2.bf16.msra.mxu0 %v2585
        %4524 = vmatprep.subr.bf16.mxu0 %v2578
        %4525 = vmatpush2.bf16.msra.mxu0 %v2577
        %4526 = vmatprep.subr.bf16.mxu0 %v2570
        %4527 = vmatpush2.bf16.msra.mxu0 %v2569
        %4528 = vmatprep.subr.bf16.mxu0 %v2562
        %4529 = vmatpush2.bf16.msra.mxu0 %v2561
        %4530 = vmatprep.subr.bf16.mxu0 %v2554
        %4531 = vmatpush2.bf16.msra.mxu0 %v2553
        %4532 = vmatprep.subr.bf16.mxu0 %v2546
        %4533 = vmatpush2.bf16.msra.mxu0 %v2545
        %4534 = vmatprep.subr.bf16.mxu0 %v2538
        %4535 = vmatpush2.bf16.msra.mxu0 %v2537
        %4536 = vmatprep.subr.bf16.mxu0 %v2530
        %4537 = vmatpush2.bf16.msra.mxu0 %v2529
        %4538 = vmatprep.mubr.bf16.mxu0 %v3951
        %4539 = vmatmul.mubr.bf16.gmra.mxu0 %v3950
        %v4540 = vpop.f32.mrf.mxu0
        %v4541 = vadd.f32 0.0, %v4540
        %v4542 = vpop.f32.mrf.mxu0
        %v4543 = vadd.f32 0.0, %v4542
        %v4544 = vpop.f32.mrf.mxu0
        %v4545 = vadd.f32 0.0, %v4544
        %v4546 = vpop.f32.mrf.mxu0
        %v4547 = vadd.f32 0.0, %v4546
        %4548 = vmatprep.mubr.bf16.mxu0 %v3953
        %4549 = vmatmul.mubr.bf16.gmra.mxu0 %v3952
        %v4550 = vpop.f32.mrf.mxu0
        %v4551 = vadd.f32 0.0, %v4550
        %v4552 = vpop.f32.mrf.mxu0
        %v4553 = vadd.f32 0.0, %v4552
        %v4554 = vpop.f32.mrf.mxu0
        %v4555 = vadd.f32 0.0, %v4554
        %v4556 = vpop.f32.mrf.mxu0
        %v4557 = vadd.f32 0.0, %v4556
        %4558 = vdwg.mxu0
        %4559 = vmatprep.subr.bf16.mxu0 %v2524
        %4560 = vmatpush1.bf16.msra.mxu0 %v2523
        %4561 = vmatprep.subr.bf16.mxu0 %v2516
        %4562 = vmatpush1.bf16.msra.mxu0 %v2515
        %4563 = vmatprep.subr.bf16.mxu0 %v2508
        %4564 = vmatpush1.bf16.msra.mxu0 %v2507
        %4565 = vmatprep.subr.bf16.mxu0 %v2500
        %4566 = vmatpush1.bf16.msra.mxu0 %v2499
        %4567 = vmatprep.subr.bf16.mxu0 %v2492
        %4568 = vmatpush1.bf16.msra.mxu0 %v2491
        %4569 = vmatprep.subr.bf16.mxu0 %v2484
        %4570 = vmatpush1.bf16.msra.mxu0 %v2483
        %4571 = vmatprep.subr.bf16.mxu0 %v2476
        %4572 = vmatpush1.bf16.msra.mxu0 %v2475
        %4573 = vmatprep.subr.bf16.mxu0 %v2468
        %4574 = vmatpush1.bf16.msra.mxu0 %v2467
        %4575 = vmatprep.subr.bf16.mxu0 %v2588
        %4576 = vmatpush2.bf16.msra.mxu0 %v2587
        %4577 = vmatprep.subr.bf16.mxu0 %v2580
        %4578 = vmatpush2.bf16.msra.mxu0 %v2579
        %4579 = vmatprep.subr.bf16.mxu0 %v2572
        %4580 = vmatpush2.bf16.msra.mxu0 %v2571
        %4581 = vmatprep.subr.bf16.mxu0 %v2564
        %4582 = vmatpush2.bf16.msra.mxu0 %v2563
        %4583 = vmatprep.subr.bf16.mxu0 %v2556
        %4584 = vmatpush2.bf16.msra.mxu0 %v2555
        %4585 = vmatprep.subr.bf16.mxu0 %v2548
        %4586 = vmatpush2.bf16.msra.mxu0 %v2547
        %4587 = vmatprep.subr.bf16.mxu0 %v2540
        %4588 = vmatpush2.bf16.msra.mxu0 %v2539
        %4589 = vmatprep.subr.bf16.mxu0 %v2532
        %4590 = vmatpush2.bf16.msra.mxu0 %v2531
        %4591 = vmatprep.mubr.bf16.mxu0 %v3951
        %4592 = vmatmul.mubr.bf16.gmra.mxu0 %v3950
        %v4593 = vpop.f32.mrf.mxu0
        %v4594 = vadd.f32 0.0, %v4593
        %v4595 = vpop.f32.mrf.mxu0
        %v4596 = vadd.f32 0.0, %v4595
        %v4597 = vpop.f32.mrf.mxu0
        %v4598 = vadd.f32 0.0, %v4597
        %v4599 = vpop.f32.mrf.mxu0
        %v4600 = vadd.f32 0.0, %v4599
        %4601 = vmatprep.mubr.bf16.mxu0 %v3953
        %4602 = vmatmul.mubr.bf16.gmra.mxu0 %v3952
        %v4603 = vpop.f32.mrf.mxu0
        %v4604 = vadd.f32 0.0, %v4603
        %v4605 = vpop.f32.mrf.mxu0
        %v4606 = vadd.f32 0.0, %v4605
        %v4607 = vpop.f32.mrf.mxu0
        %v4608 = vadd.f32 0.0, %v4607
        %v4609 = vpop.f32.mrf.mxu0
        %v4610 = vadd.f32 0.0, %v4609
        %4611 = vdwg.mxu0
        %4612 = vmatprep.subr.bf16.mxu0 %v2526
        %4613 = vmatpush1.bf16.msra.mxu0 %v2525
        %4614 = vmatprep.subr.bf16.mxu0 %v2518
        %4615 = vmatpush1.bf16.msra.mxu0 %v2517
        %4616 = vmatprep.subr.bf16.mxu0 %v2510
        %4617 = vmatpush1.bf16.msra.mxu0 %v2509
        %4618 = vmatprep.subr.bf16.mxu0 %v2502
        %4619 = vmatpush1.bf16.msra.mxu0 %v2501
        %4620 = vmatprep.subr.bf16.mxu0 %v2494
        %4621 = vmatpush1.bf16.msra.mxu0 %v2493
        %4622 = vmatprep.subr.bf16.mxu0 %v2486
        %4623 = vmatpush1.bf16.msra.mxu0 %v2485
        %4624 = vmatprep.subr.bf16.mxu0 %v2478
        %4625 = vmatpush1.bf16.msra.mxu0 %v2477
        %4626 = vmatprep.subr.bf16.mxu0 %v2470
        %4627 = vmatpush1.bf16.msra.mxu0 %v2469
        %4628 = vmatprep.subr.bf16.mxu0 %v2590
        %4629 = vmatpush2.bf16.msra.mxu0 %v2589
        %4630 = vmatprep.subr.bf16.mxu0 %v2582
        %4631 = vmatpush2.bf16.msra.mxu0 %v2581
        %4632 = vmatprep.subr.bf16.mxu0 %v2574
        %4633 = vmatpush2.bf16.msra.mxu0 %v2573
        %4634 = vmatprep.subr.bf16.mxu0 %v2566
        %4635 = vmatpush2.bf16.msra.mxu0 %v2565
        %4636 = vmatprep.subr.bf16.mxu0 %v2558
        %4637 = vmatpush2.bf16.msra.mxu0 %v2557
        %4638 = vmatprep.subr.bf16.mxu0 %v2550
        %4639 = vmatpush2.bf16.msra.mxu0 %v2549
        %4640 = vmatprep.subr.bf16.mxu0 %v2542
        %4641 = vmatpush2.bf16.msra.mxu0 %v2541
        %4642 = vmatprep.subr.bf16.mxu0 %v2534
        %4643 = vmatpush2.bf16.msra.mxu0 %v2533
        %4644 = vmatprep.mubr.bf16.mxu0 %v3951
        %4645 = vmatmul.mubr.bf16.gmra.mxu0 %v3950
        %v4646 = vpop.f32.mrf.mxu0
        %v4647 = vadd.f32 0.0, %v4646
        %v4648 = vpop.f32.mrf.mxu0
        %v4649 = vadd.f32 0.0, %v4648
        %v4650 = vpop.f32.mrf.mxu0
        %v4651 = vadd.f32 0.0, %v4650
        %v4652 = vpop.f32.mrf.mxu0
        %v4653 = vadd.f32 0.0, %v4652
        %4654 = vmatprep.mubr.bf16.mxu0 %v3953
        %4655 = vmatmul.mubr.bf16.gmra.mxu0 %v3952
        %v4656 = vpop.f32.mrf.mxu0
        %v4657 = vadd.f32 0.0, %v4656
        %v4658 = vpop.f32.mrf.mxu0
        %v4659 = vadd.f32 0.0, %v4658
        %v4660 = vpop.f32.mrf.mxu0
        %v4661 = vadd.f32 0.0, %v4660
        %v4662 = vpop.f32.mrf.mxu0
        %v4663 = vadd.f32 0.0, %v4662
        %4664 = vdwg.mxu0
        %v4665 = vadd.f32 %v4276, %v4488
        %v4666 = vadd.f32 %v4278, %v4490
        %v4667 = vadd.f32 %v4329, %v4541
        %v4668 = vadd.f32 %v4331, %v4543
        %v4669 = vadd.f32 %v4382, %v4594
        %v4670 = vadd.f32 %v4384, %v4596
        %v4671 = vadd.f32 %v4435, %v4647
        %v4672 = vadd.f32 %v4437, %v4649
        %v4673 = vadd.f32 %v4280, %v4492
        %v4674 = vadd.f32 %v4282, %v4494
        %v4675 = vadd.f32 %v4333, %v4545
        %v4676 = vadd.f32 %v4335, %v4547
        %v4677 = vadd.f32 %v4386, %v4598
        %v4678 = vadd.f32 %v4388, %v4600
        %v4679 = vadd.f32 %v4439, %v4651
        %v4680 = vadd.f32 %v4441, %v4653
        %v4681 = vadd.f32 %v4286, %v4498
        %v4682 = vadd.f32 %v4288, %v4500
        %v4683 = vadd.f32 %v4339, %v4551
        %v4684 = vadd.f32 %v4341, %v4553
        %v4685 = vadd.f32 %v4392, %v4604
        %v4686 = vadd.f32 %v4394, %v4606
        %v4687 = vadd.f32 %v4445, %v4657
        %v4688 = vadd.f32 %v4447, %v4659
        %v4689 = vadd.f32 %v4290, %v4502
        %v4690 = vadd.f32 %v4292, %v4504
        %v4691 = vadd.f32 %v4343, %v4555
        %v4692 = vadd.f32 %v4345, %v4557
        %v4693 = vadd.f32 %v4396, %v4608
        %v4694 = vadd.f32 %v4398, %v4610
        %v4695 = vadd.f32 %v4449, %v4661
        %v4696 = vadd.f32 %v4451, %v4663
        %v4697 = vtanh.pop %v4665
        %v4698 = vtanh.pop %v4666
        %v4699 = vtanh.pop %v4673
        %v4700 = vtanh.pop %v4674
        %v4701 = vtanh.pop %v4681
        %v4702 = vtanh.pop %v4682
        %v4703 = vtanh.pop %v4689
        %v4704 = vtanh.pop %v4690
        %v4705 = vmul.f32 %v4697, 0.5
        %v4706 = vmul.f32 %v4698, 0.5
        %v4707 = vmul.f32 %v4699, 0.5
        %v4708 = vmul.f32 %v4700, 0.5
        %v4709 = vmul.f32 %v4701, 0.5
        %v4710 = vmul.f32 %v4702, 0.5
        %v4711 = vmul.f32 %v4703, 0.5
        %v4712 = vmul.f32 %v4704, 0.5
        %v4713 = vadd.f32 %v4705, 0.5
        %v4714 = vadd.f32 %v4706, 0.5
        %v4715 = vadd.f32 %v4707, 0.5
        %v4716 = vadd.f32 %v4708, 0.5
        %v4717 = vadd.f32 %v4709, 0.5
        %v4718 = vadd.f32 %v4710, 0.5
        %v4719 = vadd.f32 %v4711, 0.5
        %v4720 = vadd.f32 %v4712, 0.5
        %v4721 = vtanh.pop %v4667
        %v4722 = vtanh.pop %v4668
        %v4723 = vtanh.pop %v4675
        %v4724 = vtanh.pop %v4676
        %v4725 = vtanh.pop %v4683
        %v4726 = vtanh.pop %v4684
        %v4727 = vtanh.pop %v4691
        %v4728 = vtanh.pop %v4692
        %v4729 = vmul.f32 %v4721, 0.5
        %v4730 = vmul.f32 %v4722, 0.5
        %v4731 = vmul.f32 %v4723, 0.5
        %v4732 = vmul.f32 %v4724, 0.5
        %v4733 = vmul.f32 %v4725, 0.5
        %v4734 = vmul.f32 %v4726, 0.5
        %v4735 = vmul.f32 %v4727, 0.5
        %v4736 = vmul.f32 %v4728, 0.5
        %v4737 = vadd.f32 %v4729, 0.5
        %v4738 = vadd.f32 %v4730, 0.5
        %v4739 = vadd.f32 %v4731, 0.5
        %v4740 = vadd.f32 %v4732, 0.5
        %v4741 = vadd.f32 %v4733, 0.5
        %v4742 = vadd.f32 %v4734, 0.5
        %v4743 = vadd.f32 %v4735, 0.5
        %v4744 = vadd.f32 %v4736, 0.5
        %v4745 = vtanh.pop %v4669
        %v4746 = vtanh.pop %v4670
        %v4747 = vtanh.pop %v4677
        %v4748 = vtanh.pop %v4678
        %v4749 = vtanh.pop %v4685
        %v4750 = vtanh.pop %v4686
        %v4751 = vtanh.pop %v4693
        %v4752 = vtanh.pop %v4694
        %v4753 = vtanh.pop %v4671
        %v4754 = vtanh.pop %v4672
        %v4755 = vtanh.pop %v4679
        %v4756 = vtanh.pop %v4680
        %v4757 = vtanh.pop %v4687
        %v4758 = vtanh.pop %v4688
        %v4759 = vtanh.pop %v4695
        %v4760 = vtanh.pop %v4696
        %v4761 = vmul.f32 %v4753, 0.5
        %v4762 = vmul.f32 %v4754, 0.5
        %v4763 = vmul.f32 %v4755, 0.5
        %v4764 = vmul.f32 %v4756, 0.5
        %v4765 = vmul.f32 %v4757, 0.5
        %v4766 = vmul.f32 %v4758, 0.5
        %v4767 = vmul.f32 %v4759, 0.5
        %v4768 = vmul.f32 %v4760, 0.5
        %v4769 = vadd.f32 %v4761, 0.5
        %v4770 = vadd.f32 %v4762, 0.5
        %v4771 = vadd.f32 %v4763, 0.5
        %v4772 = vadd.f32 %v4764, 0.5
        %v4773 = vadd.f32 %v4765, 0.5
        %v4774 = vadd.f32 %v4766, 0.5
        %v4775 = vadd.f32 %v4767, 0.5
        %v4776 = vadd.f32 %v4768, 0.5
        %v4777 = vmul.f32 %v4737, %v3926
        %v4778 = vmul.f32 %v4738, %v3927
        %v4779 = vmul.f32 %v4739, %v3928
        %v4780 = vmul.f32 %v4740, %v3929
        %v4781 = vmul.f32 %v4741, %v3930
        %v4782 = vmul.f32 %v4742, %v3931
        %v4783 = vmul.f32 %v4743, %v3932
        %v4784 = vmul.f32 %v4744, %v3933
        %v4785 = vmul.f32 %v4713, %v4745
        %v4786 = vmul.f32 %v4714, %v4746
        %v4787 = vmul.f32 %v4715, %v4747
        %v4788 = vmul.f32 %v4716, %v4748
        %v4789 = vmul.f32 %v4717, %v4749
        %v4790 = vmul.f32 %v4718, %v4750
        %v4791 = vmul.f32 %v4719, %v4751
        %v4792 = vmul.f32 %v4720, %v4752
        %v4793 = vadd.f32 %v4777, %v4785
        %v4794 = vadd.f32 %v4778, %v4786
        %v4795 = vadd.f32 %v4779, %v4787
        %v4796 = vadd.f32 %v4780, %v4788
        %v4797 = vadd.f32 %v4781, %v4789
        %v4798 = vadd.f32 %v4782, %v4790
        %v4799 = vadd.f32 %v4783, %v4791
        %v4800 = vadd.f32 %v4784, %v4792
        %v4801 = vtanh.pop %v4793
        %v4802 = vtanh.pop %v4794
        %v4803 = vtanh.pop %v4795
        %v4804 = vtanh.pop %v4796
        %v4805 = vtanh.pop %v4797
        %v4806 = vtanh.pop %v4798
        %v4807 = vtanh.pop %v4799
        %v4808 = vtanh.pop %v4800
        %v4809 = vmul.f32 %v4769, %v4801
        %v4810 = vmul.f32 %v4770, %v4802
        %v4811 = vmul.f32 %v4771, %v4803
        %v4812 = vmul.f32 %v4772, %v4804
        %v4813 = vmul.f32 %v4773, %v4805
        %v4814 = vmul.f32 %v4774, %v4806
        %v4815 = vmul.f32 %v4775, %v4807
        %v4816 = vmul.f32 %v4776, %v4808
        %v4817 = vpack.c.bf16 %v4811, %v4809
        %v4818 = vpack.c.bf16 %v4812, %v4810
        %v4819 = vpack.c.bf16 %v4815, %v4813
        %v4820 = vpack.c.bf16 %v4816, %v4814
        %4821 = vmatprep.subr.bf16.mxu0 %v1417
        %4822 = vmatpush1.bf16.msra.mxu0 %v1416
        %4823 = vmatprep.subr.bf16.mxu0 %v1413
        %4824 = vmatpush1.bf16.msra.mxu0 %v1412
        %4825 = vmatprep.subr.bf16.mxu0 %v1409
        %4826 = vmatpush1.bf16.msra.mxu0 %v1408
        %4827 = vmatprep.subr.bf16.mxu0 %v1405
        %4828 = vmatpush1.bf16.msra.mxu0 %v1404
        %4829 = vmatprep.subr.bf16.mxu0 %v1401
        %4830 = vmatpush1.bf16.msra.mxu0 %v1400
        %4831 = vmatprep.subr.bf16.mxu0 %v1397
        %4832 = vmatpush1.bf16.msra.mxu0 %v1396
        %4833 = vmatprep.subr.bf16.mxu0 %v1393
        %4834 = vmatpush1.bf16.msra.mxu0 %v1392
        %4835 = vmatprep.subr.bf16.mxu0 %v1389
        %4836 = vmatpush1.bf16.msra.mxu0 %v1388
        %4837 = vmatprep.subr.bf16.mxu0 %v1449
        %4838 = vmatpush2.bf16.msra.mxu0 %v1448
        %4839 = vmatprep.subr.bf16.mxu0 %v1445
        %4840 = vmatpush2.bf16.msra.mxu0 %v1444
        %4841 = vmatprep.subr.bf16.mxu0 %v1441
        %4842 = vmatpush2.bf16.msra.mxu0 %v1440
        %4843 = vmatprep.subr.bf16.mxu0 %v1437
        %4844 = vmatpush2.bf16.msra.mxu0 %v1436
        %4845 = vmatprep.subr.bf16.mxu0 %v1433
        %4846 = vmatpush2.bf16.msra.mxu0 %v1432
        %4847 = vmatprep.subr.bf16.mxu0 %v1429
        %4848 = vmatpush2.bf16.msra.mxu0 %v1428
        %4849 = vmatprep.subr.bf16.mxu0 %v1425
        %4850 = vmatpush2.bf16.msra.mxu0 %v1424
        %4851 = vmatprep.subr.bf16.mxu0 %v1421
        %4852 = vmatpush2.bf16.msra.mxu0 %v1420
        %4853 = vmatprep.mubr.bf16.mxu0 %v4818
        %4854 = vmatmul.mubr.bf16.gmra.mxu0 %v4817
        %v4855 = vpop.f32.mrf.mxu0
        %v4856 = vadd.f32 %v1083, %v4855
        %v4857 = vpop.f32.mrf.mxu0
        %v4858 = vadd.f32 %v1087, %v4857
        %v4859 = vpop.f32.mrf.mxu0
        %v4860 = vadd.f32 %v1083, %v4859
        %v4861 = vpop.f32.mrf.mxu0
        %v4862 = vadd.f32 %v1087, %v4861
        %4863 = vmatprep.mubr.bf16.mxu0 %v4820
        %4864 = vmatmul.mubr.bf16.gmra.mxu0 %v4819
        %v4865 = vpop.f32.mrf.mxu0
        %v4866 = vadd.f32 %v1083, %v4865
        %v4867 = vpop.f32.mrf.mxu0
        %v4868 = vadd.f32 %v1087, %v4867
        %v4869 = vpop.f32.mrf.mxu0
        %v4870 = vadd.f32 %v1083, %v4869
        %v4871 = vpop.f32.mrf.mxu0
        %v4872 = vadd.f32 %v1087, %v4871
        %4873 = vdwg.mxu0
        %4874 = vmatprep.subr.bf16.mxu0 %v1481
        %4875 = vmatpush1.bf16.msra.mxu0 %v1480
        %4876 = vmatprep.subr.bf16.mxu0 %v1477
        %4877 = vmatpush1.bf16.msra.mxu0 %v1476
        %4878 = vmatprep.subr.bf16.mxu0 %v1473
        %4879 = vmatpush1.bf16.msra.mxu0 %v1472
        %4880 = vmatprep.subr.bf16.mxu0 %v1469
        %4881 = vmatpush1.bf16.msra.mxu0 %v1468
        %4882 = vmatprep.subr.bf16.mxu0 %v1465
        %4883 = vmatpush1.bf16.msra.mxu0 %v1464
        %4884 = vmatprep.subr.bf16.mxu0 %v1461
        %4885 = vmatpush1.bf16.msra.mxu0 %v1460
        %4886 = vmatprep.subr.bf16.mxu0 %v1457
        %4887 = vmatpush1.bf16.msra.mxu0 %v1456
        %4888 = vmatprep.subr.bf16.mxu0 %v1453
        %4889 = vmatpush1.bf16.msra.mxu0 %v1452
        %4890 = vmatprep.subr.bf16.mxu0 0
        %4891 = vmatpush2.bf16.msra.mxu0 0
        %4892 = vmatprep.subr.bf16.mxu0 0
        %4893 = vmatpush2.bf16.msra.mxu0 0
        %4894 = vmatprep.subr.bf16.mxu0 0
        %4895 = vmatpush2.bf16.msra.mxu0 0
        %4896 = vmatprep.subr.bf16.mxu0 0
        %4897 = vmatpush2.bf16.msra.mxu0 0
        %4898 = vmatprep.subr.bf16.mxu0 0
        %4899 = vmatpush2.bf16.msra.mxu0 0
        %4900 = vmatprep.subr.bf16.mxu0 0
        %4901 = vmatpush2.bf16.msra.mxu0 0
        %4902 = vmatprep.subr.bf16.mxu0 0
        %4903 = vmatpush2.bf16.msra.mxu0 0
        %4904 = vmatprep.subr.bf16.mxu0 0
        %4905 = vmatpush2.bf16.msra.mxu0 0
        %4906 = vmatprep.mubr.bf16.mxu0 0
        %4907 = vmatmul.mubr.bf16.gmra.mxu0 %v4226
        %v4908 = vpop.f32.mrf.mxu0
        %v4909 = vadd.f32 %v4856, %v4908
        %v4910 = vpop.f32.mrf.mxu0
        %v4911 = vadd.f32 %v4858, %v4910
        %v4912 = vpop.f32.mrf.mxu0
        %v4913 = vadd.f32 %v4860, %v4912
        %v4914 = vpop.f32.mrf.mxu0
        %v4915 = vadd.f32 %v4862, %v4914
        %4916 = vmatprep.mubr.bf16.mxu0 0
        %4917 = vmatmul.mubr.bf16.gmra.mxu0 %v4227
        %v4918 = vpop.f32.mrf.mxu0
        %v4919 = vadd.f32 %v4866, %v4918
        %v4920 = vpop.f32.mrf.mxu0
        %v4921 = vadd.f32 %v4868, %v4920
        %v4922 = vpop.f32.mrf.mxu0
        %v4923 = vadd.f32 %v4870, %v4922
        %v4924 = vpop.f32.mrf.mxu0
        %v4925 = vadd.f32 %v4872, %v4924
        %4926 = vdwg.mxu0
        %4927 = vmatprep.subr.bf16.mxu0 %v1419
        %4928 = vmatpush1.bf16.msra.mxu0 %v1418
        %4929 = vmatprep.subr.bf16.mxu0 %v1415
        %4930 = vmatpush1.bf16.msra.mxu0 %v1414
        %4931 = vmatprep.subr.bf16.mxu0 %v1411
        %4932 = vmatpush1.bf16.msra.mxu0 %v1410
        %4933 = vmatprep.subr.bf16.mxu0 %v1407
        %4934 = vmatpush1.bf16.msra.mxu0 %v1406
        %4935 = vmatprep.subr.bf16.mxu0 %v1403
        %4936 = vmatpush1.bf16.msra.mxu0 %v1402
        %4937 = vmatprep.subr.bf16.mxu0 %v1399
        %4938 = vmatpush1.bf16.msra.mxu0 %v1398
        %4939 = vmatprep.subr.bf16.mxu0 %v1395
        %4940 = vmatpush1.bf16.msra.mxu0 %v1394
        %4941 = vmatprep.subr.bf16.mxu0 %v1391
        %4942 = vmatpush1.bf16.msra.mxu0 %v1390
        %4943 = vmatprep.subr.bf16.mxu0 %v1451
        %4944 = vmatpush2.bf16.msra.mxu0 %v1450
        %4945 = vmatprep.subr.bf16.mxu0 %v1447
        %4946 = vmatpush2.bf16.msra.mxu0 %v1446
        %4947 = vmatprep.subr.bf16.mxu0 %v1443
        %4948 = vmatpush2.bf16.msra.mxu0 %v1442
        %4949 = vmatprep.subr.bf16.mxu0 %v1439
        %4950 = vmatpush2.bf16.msra.mxu0 %v1438
        %4951 = vmatprep.subr.bf16.mxu0 %v1435
        %4952 = vmatpush2.bf16.msra.mxu0 %v1434
        %4953 = vmatprep.subr.bf16.mxu0 %v1431
        %4954 = vmatpush2.bf16.msra.mxu0 %v1430
        %4955 = vmatprep.subr.bf16.mxu0 %v1427
        %4956 = vmatpush2.bf16.msra.mxu0 %v1426
        %4957 = vmatprep.subr.bf16.mxu0 %v1423
        %4958 = vmatpush2.bf16.msra.mxu0 %v1422
        %4959 = vmatprep.mubr.bf16.mxu0 %v4818
        %4960 = vmatmul.mubr.bf16.gmra.mxu0 %v4817
        %v4961 = vpop.f32.mrf.mxu0
        %v4962 = vadd.f32 %v1091, %v4961
        %v4963 = vpop.f32.mrf.mxu0
        %v4964 = vadd.f32 %v1095, %v4963
        %v4965 = vpop.f32.mrf.mxu0
        %v4966 = vadd.f32 %v1091, %v4965
        %v4967 = vpop.f32.mrf.mxu0
        %v4968 = vadd.f32 %v1095, %v4967
        %4969 = vmatprep.mubr.bf16.mxu0 %v4820
        %4970 = vmatmul.mubr.bf16.gmra.mxu0 %v4819
        %v4971 = vpop.f32.mrf.mxu0
        %v4972 = vadd.f32 %v1091, %v4971
        %v4973 = vpop.f32.mrf.mxu0
        %v4974 = vadd.f32 %v1095, %v4973
        %v4975 = vpop.f32.mrf.mxu0
        %v4976 = vadd.f32 %v1091, %v4975
        %v4977 = vpop.f32.mrf.mxu0
        %v4978 = vadd.f32 %v1095, %v4977
        %4979 = vdwg.mxu0
        %4980 = vmatprep.subr.bf16.mxu0 %v1483
        %4981 = vmatpush1.bf16.msra.mxu0 %v1482
        %4982 = vmatprep.subr.bf16.mxu0 %v1479
        %4983 = vmatpush1.bf16.msra.mxu0 %v1478
        %4984 = vmatprep.subr.bf16.mxu0 %v1475
        %4985 = vmatpush1.bf16.msra.mxu0 %v1474
        %4986 = vmatprep.subr.bf16.mxu0 %v1471
        %4987 = vmatpush1.bf16.msra.mxu0 %v1470
        %4988 = vmatprep.subr.bf16.mxu0 %v1467
        %4989 = vmatpush1.bf16.msra.mxu0 %v1466
        %4990 = vmatprep.subr.bf16.mxu0 %v1463
        %4991 = vmatpush1.bf16.msra.mxu0 %v1462
        %4992 = vmatprep.subr.bf16.mxu0 %v1459
        %4993 = vmatpush1.bf16.msra.mxu0 %v1458
        %4994 = vmatprep.subr.bf16.mxu0 %v1455
        %4995 = vmatpush1.bf16.msra.mxu0 %v1454
        %4996 = vmatprep.subr.bf16.mxu0 0
        %4997 = vmatpush2.bf16.msra.mxu0 0
        %4998 = vmatprep.subr.bf16.mxu0 0
        %4999 = vmatpush2.bf16.msra.mxu0 0
        %5000 = vmatprep.subr.bf16.mxu0 0
        %5001 = vmatpush2.bf16.msra.mxu0 0
        %5002 = vmatprep.subr.bf16.mxu0 0
        %5003 = vmatpush2.bf16.msra.mxu0 0
        %5004 = vmatprep.subr.bf16.mxu0 0
        %5005 = vmatpush2.bf16.msra.mxu0 0
        %5006 = vmatprep.subr.bf16.mxu0 0
        %5007 = vmatpush2.bf16.msra.mxu0 0
        %5008 = vmatprep.subr.bf16.mxu0 0
        %5009 = vmatpush2.bf16.msra.mxu0 0
        %5010 = vmatprep.subr.bf16.mxu0 0
        %5011 = vmatpush2.bf16.msra.mxu0 0
        %5012 = vmatprep.mubr.bf16.mxu0 0
        %5013 = vmatmul.mubr.bf16.gmra.mxu0 %v4226
        %v5014 = vpop.f32.mrf.mxu0
        %v5015 = vadd.f32 %v4962, %v5014
        %v5016 = vpop.f32.mrf.mxu0
        %v5017 = vadd.f32 %v4964, %v5016
        %v5018 = vpop.f32.mrf.mxu0
        %v5019 = vadd.f32 %v4966, %v5018
        %v5020 = vpop.f32.mrf.mxu0
        %v5021 = vadd.f32 %v4968, %v5020
        %5022 = vmatprep.mubr.bf16.mxu0 0
        %5023 = vmatmul.mubr.bf16.gmra.mxu0 %v4227
        %v5024 = vpop.f32.mrf.mxu0
        %v5025 = vadd.f32 %v4972, %v5024
        %v5026 = vpop.f32.mrf.mxu0
        %v5027 = vadd.f32 %v4974, %v5026
        %v5028 = vpop.f32.mrf.mxu0
        %v5029 = vadd.f32 %v4976, %v5028
        %v5030 = vpop.f32.mrf.mxu0
        %v5031 = vadd.f32 %v4978, %v5030
        %5032 = vdwg.mxu0
        %v5033 = vtanh.pop %v4909
        %v5034 = vtanh.pop %v4913
        %v5035 = vtanh.pop %v4919
        %v5036 = vtanh.pop %v4923
        %v5037 = vmul.f32 %v5033, 0.5
        %v5038 = vmul.f32 %v5034, 0.5
        %v5039 = vmul.f32 %v5035, 0.5
        %v5040 = vmul.f32 %v5036, 0.5
        %v5041 = vadd.f32 %v5037, 0.5
        %v5042 = vadd.f32 %v5038, 0.5
        %v5043 = vadd.f32 %v5039, 0.5
        %v5044 = vadd.f32 %v5040, 0.5
        %v5045 = vtanh.pop %v4911
        %v5046 = vtanh.pop %v4915
        %v5047 = vtanh.pop %v4921
        %v5048 = vtanh.pop %v4925
        %v5049 = vmul.f32 %v5045, 0.5
        %v5050 = vmul.f32 %v5046, 0.5
        %v5051 = vmul.f32 %v5047, 0.5
        %v5052 = vmul.f32 %v5048, 0.5
        %v5053 = vadd.f32 %v5049, 0.5
        %v5054 = vadd.f32 %v5050, 0.5
        %v5055 = vadd.f32 %v5051, 0.5
        %v5056 = vadd.f32 %v5052, 0.5
        %v5057 = vtanh.pop %v5015
        %v5058 = vtanh.pop %v5019
        %v5059 = vtanh.pop %v5025
        %v5060 = vtanh.pop %v5029
        %v5061 = vtanh.pop %v5017
        %v5062 = vtanh.pop %v5021
        %v5063 = vtanh.pop %v5027
        %v5064 = vtanh.pop %v5031
        %v5065 = vmul.f32 %v5061, 0.5
        %v5066 = vmul.f32 %v5062, 0.5
        %v5067 = vmul.f32 %v5063, 0.5
        %v5068 = vmul.f32 %v5064, 0.5
        %v5069 = vadd.f32 %v5065, 0.5
        %v5070 = vadd.f32 %v5066, 0.5
        %v5071 = vadd.f32 %v5067, 0.5
        %v5072 = vadd.f32 %v5068, 0.5
        %v5073 = vmul.f32 %v5053, %v4214
        %v5074 = vmul.f32 %v5054, %v4215
        %v5075 = vmul.f32 %v5055, %v4216
        %v5076 = vmul.f32 %v5056, %v4217
        %v5077 = vmul.f32 %v5041, %v5057
        %v5078 = vmul.f32 %v5042, %v5058
        %v5079 = vmul.f32 %v5043, %v5059
        %v5080 = vmul.f32 %v5044, %v5060
        %v5081 = vadd.f32 %v5073, %v5077
        %v5082 = vadd.f32 %v5074, %v5078
        %v5083 = vadd.f32 %v5075, %v5079
        %v5084 = vadd.f32 %v5076, %v5080
        %v5085 = vtanh.pop %v5081
        %v5086 = vtanh.pop %v5082
        %v5087 = vtanh.pop %v5083
        %v5088 = vtanh.pop %v5084
        %v5089 = vmul.f32 %v5069, %v5085
        %v5090 = vmul.f32 %v5070, %v5086
        %v5091 = vmul.f32 %v5071, %v5087
        %v5092 = vmul.f32 %v5072, %v5088
        %v5093 = vpack.c.bf16 %v5090, %v5089
        %v5094 = vpack.c.bf16 %v5092, %v5091
        %s5095 = scalar_lea.vmem %s357, 128 [#allocation2]
        %v5096 = vld [vmem:[%s5095] sm:$0xff]
        %v5097 = vld [vmem:[%s5095 + $0x8] sm:$0xff]
        %v5098 = vld [vmem:[%s5095 + $0x10] sm:$0xff]
        %v5099 = vld [vmem:[%s5095 + $0x18] sm:$0xff]
        %v5100 = vpack.c.bf16 %v5097, %v5096
        %v5101 = vpack.c.bf16 %v5099, %v5098
        %v5103 = vsel %vm708, %v5100, 0
        %v5106 = vsel %vm708, %v5101, 0
        %5108 = vmatprep.subr.bf16.mxu0 0
        %5109 = vmatpush1.bf16.msra.mxu0 0
        %5110 = vmatprep.subr.bf16.mxu0 0
        %5111 = vmatpush1.bf16.msra.mxu0 0
        %5112 = vmatprep.subr.bf16.mxu0 0
        %5113 = vmatpush1.bf16.msra.mxu0 0
        %5114 = vmatprep.subr.bf16.mxu0 0
        %5115 = vmatpush1.bf16.msra.mxu0 0
        %5116 = vmatprep.subr.bf16.mxu0 0
        %5117 = vmatpush1.bf16.msra.mxu0 0
        %5118 = vmatprep.subr.bf16.mxu0 0
        %5119 = vmatpush1.bf16.msra.mxu0 0
        %5120 = vmatprep.subr.bf16.mxu0 0
        %5121 = vmatpush1.bf16.msra.mxu0 0
        %5122 = vmatprep.subr.bf16.mxu0 %v723
        %5123 = vmatpush1.bf16.msra.mxu0 %v720
        %5124 = vmatprep.subr.bf16.mxu0 0
        %5125 = vmatpush2.bf16.msra.mxu0 0
        %5126 = vmatprep.subr.bf16.mxu0 0
        %5127 = vmatpush2.bf16.msra.mxu0 0
        %5128 = vmatprep.subr.bf16.mxu0 0
        %5129 = vmatpush2.bf16.msra.mxu0 0
        %5130 = vmatprep.subr.bf16.mxu0 0
        %5131 = vmatpush2.bf16.msra.mxu0 0
        %5132 = vmatprep.subr.bf16.mxu0 0
        %5133 = vmatpush2.bf16.msra.mxu0 0
        %5134 = vmatprep.subr.bf16.mxu0 0
        %5135 = vmatpush2.bf16.msra.mxu0 0
        %5136 = vmatprep.subr.bf16.mxu0 0
        %5137 = vmatpush2.bf16.msra.mxu0 0
        %5138 = vmatprep.subr.bf16.mxu0 0
        %5139 = vmatpush2.bf16.msra.mxu0 0
        %5140 = vmatprep.mubr.bf16.mxu0 0
        %5141 = vmatmul.mubr.bf16.gmra.mxu0 %v5103
        %v5142 = vpop.f32.mrf.mxu0
        %v5143 = vadd.f32 %v639, %v5142
        %v5144 = vpop.f32.mrf.mxu0
        %v5145 = vadd.f32 %v643, %v5144
        %v5146 = vpop.f32.mrf.mxu0
        %v5147 = vadd.f32 %v639, %v5146
        %v5148 = vpop.f32.mrf.mxu0
        %v5149 = vadd.f32 %v643, %v5148
        %5150 = vmatprep.mubr.bf16.mxu0 0
        %5151 = vmatmul.mubr.bf16.gmra.mxu0 %v5106
        %v5152 = vpop.f32.mrf.mxu0
        %v5153 = vadd.f32 %v639, %v5152
        %v5154 = vpop.f32.mrf.mxu0
        %v5155 = vadd.f32 %v643, %v5154
        %v5156 = vpop.f32.mrf.mxu0
        %v5157 = vadd.f32 %v639, %v5156
        %v5158 = vpop.f32.mrf.mxu0
        %v5159 = vadd.f32 %v643, %v5158
        %5160 = vdwg.mxu0
        %5161 = vmatprep.subr.bf16.mxu0 0
        %5162 = vmatpush1.bf16.msra.mxu0 0
        %5163 = vmatprep.subr.bf16.mxu0 0
        %5164 = vmatpush1.bf16.msra.mxu0 0
        %5165 = vmatprep.subr.bf16.mxu0 0
        %5166 = vmatpush1.bf16.msra.mxu0 0
        %5167 = vmatprep.subr.bf16.mxu0 0
        %5168 = vmatpush1.bf16.msra.mxu0 0
        %5169 = vmatprep.subr.bf16.mxu0 0
        %5170 = vmatpush1.bf16.msra.mxu0 0
        %5171 = vmatprep.subr.bf16.mxu0 0
        %5172 = vmatpush1.bf16.msra.mxu0 0
        %5173 = vmatprep.subr.bf16.mxu0 0
        %5174 = vmatpush1.bf16.msra.mxu0 0
        %5175 = vmatprep.subr.bf16.mxu0 %v729
        %5176 = vmatpush1.bf16.msra.mxu0 %v726
        %5177 = vmatprep.subr.bf16.mxu0 0
        %5178 = vmatpush2.bf16.msra.mxu0 0
        %5179 = vmatprep.subr.bf16.mxu0 0
        %5180 = vmatpush2.bf16.msra.mxu0 0
        %5181 = vmatprep.subr.bf16.mxu0 0
        %5182 = vmatpush2.bf16.msra.mxu0 0
        %5183 = vmatprep.subr.bf16.mxu0 0
        %5184 = vmatpush2.bf16.msra.mxu0 0
        %5185 = vmatprep.subr.bf16.mxu0 0
        %5186 = vmatpush2.bf16.msra.mxu0 0
        %5187 = vmatprep.subr.bf16.mxu0 0
        %5188 = vmatpush2.bf16.msra.mxu0 0
        %5189 = vmatprep.subr.bf16.mxu0 0
        %5190 = vmatpush2.bf16.msra.mxu0 0
        %5191 = vmatprep.subr.bf16.mxu0 0
        %5192 = vmatpush2.bf16.msra.mxu0 0
        %5193 = vmatprep.mubr.bf16.mxu0 0
        %5194 = vmatmul.mubr.bf16.gmra.mxu0 %v5103
        %v5195 = vpop.f32.mrf.mxu0
        %v5196 = vadd.f32 %v647, %v5195
        %v5197 = vpop.f32.mrf.mxu0
        %v5198 = vadd.f32 %v651, %v5197
        %v5199 = vpop.f32.mrf.mxu0
        %v5200 = vadd.f32 %v647, %v5199
        %v5201 = vpop.f32.mrf.mxu0
        %v5202 = vadd.f32 %v651, %v5201
        %5203 = vmatprep.mubr.bf16.mxu0 0
        %5204 = vmatmul.mubr.bf16.gmra.mxu0 %v5106
        %v5205 = vpop.f32.mrf.mxu0
        %v5206 = vadd.f32 %v647, %v5205
        %v5207 = vpop.f32.mrf.mxu0
        %v5208 = vadd.f32 %v651, %v5207
        %v5209 = vpop.f32.mrf.mxu0
        %v5210 = vadd.f32 %v647, %v5209
        %v5211 = vpop.f32.mrf.mxu0
        %v5212 = vadd.f32 %v651, %v5211
        %5213 = vdwg.mxu0
        %5214 = vmatprep.subr.bf16.mxu0 0
        %5215 = vmatpush1.bf16.msra.mxu0 0
        %5216 = vmatprep.subr.bf16.mxu0 0
        %5217 = vmatpush1.bf16.msra.mxu0 0
        %5218 = vmatprep.subr.bf16.mxu0 0
        %5219 = vmatpush1.bf16.msra.mxu0 0
        %5220 = vmatprep.subr.bf16.mxu0 0
        %5221 = vmatpush1.bf16.msra.mxu0 0
        %5222 = vmatprep.subr.bf16.mxu0 0
        %5223 = vmatpush1.bf16.msra.mxu0 0
        %5224 = vmatprep.subr.bf16.mxu0 0
        %5225 = vmatpush1.bf16.msra.mxu0 0
        %5226 = vmatprep.subr.bf16.mxu0 0
        %5227 = vmatpush1.bf16.msra.mxu0 0
        %5228 = vmatprep.subr.bf16.mxu0 %v735
        %5229 = vmatpush1.bf16.msra.mxu0 %v732
        %5230 = vmatprep.subr.bf16.mxu0 0
        %5231 = vmatpush2.bf16.msra.mxu0 0
        %5232 = vmatprep.subr.bf16.mxu0 0
        %5233 = vmatpush2.bf16.msra.mxu0 0
        %5234 = vmatprep.subr.bf16.mxu0 0
        %5235 = vmatpush2.bf16.msra.mxu0 0
        %5236 = vmatprep.subr.bf16.mxu0 0
        %5237 = vmatpush2.bf16.msra.mxu0 0
        %5238 = vmatprep.subr.bf16.mxu0 0
        %5239 = vmatpush2.bf16.msra.mxu0 0
        %5240 = vmatprep.subr.bf16.mxu0 0
        %5241 = vmatpush2.bf16.msra.mxu0 0
        %5242 = vmatprep.subr.bf16.mxu0 0
        %5243 = vmatpush2.bf16.msra.mxu0 0
        %5244 = vmatprep.subr.bf16.mxu0 0
        %5245 = vmatpush2.bf16.msra.mxu0 0
        %5246 = vmatprep.mubr.bf16.mxu0 0
        %5247 = vmatmul.mubr.bf16.gmra.mxu0 %v5103
        %v5248 = vpop.f32.mrf.mxu0
        %v5249 = vadd.f32 %v655, %v5248
        %v5250 = vpop.f32.mrf.mxu0
        %v5251 = vadd.f32 %v659, %v5250
        %v5252 = vpop.f32.mrf.mxu0
        %v5253 = vadd.f32 %v655, %v5252
        %v5254 = vpop.f32.mrf.mxu0
        %v5255 = vadd.f32 %v659, %v5254
        %5256 = vmatprep.mubr.bf16.mxu0 0
        %5257 = vmatmul.mubr.bf16.gmra.mxu0 %v5106
        %v5258 = vpop.f32.mrf.mxu0
        %v5259 = vadd.f32 %v655, %v5258
        %v5260 = vpop.f32.mrf.mxu0
        %v5261 = vadd.f32 %v659, %v5260
        %v5262 = vpop.f32.mrf.mxu0
        %v5263 = vadd.f32 %v655, %v5262
        %v5264 = vpop.f32.mrf.mxu0
        %v5265 = vadd.f32 %v659, %v5264
        %5266 = vdwg.mxu0
        %5267 = vmatprep.subr.bf16.mxu0 0
        %5268 = vmatpush1.bf16.msra.mxu0 0
        %5269 = vmatprep.subr.bf16.mxu0 0
        %5270 = vmatpush1.bf16.msra.mxu0 0
        %5271 = vmatprep.subr.bf16.mxu0 0
        %5272 = vmatpush1.bf16.msra.mxu0 0
        %5273 = vmatprep.subr.bf16.mxu0 0
        %5274 = vmatpush1.bf16.msra.mxu0 0
        %5275 = vmatprep.subr.bf16.mxu0 0
        %5276 = vmatpush1.bf16.msra.mxu0 0
        %5277 = vmatprep.subr.bf16.mxu0 0
        %5278 = vmatpush1.bf16.msra.mxu0 0
        %5279 = vmatprep.subr.bf16.mxu0 0
        %5280 = vmatpush1.bf16.msra.mxu0 0
        %5281 = vmatprep.subr.bf16.mxu0 %v741
        %5282 = vmatpush1.bf16.msra.mxu0 %v738
        %5283 = vmatprep.subr.bf16.mxu0 0
        %5284 = vmatpush2.bf16.msra.mxu0 0
        %5285 = vmatprep.subr.bf16.mxu0 0
        %5286 = vmatpush2.bf16.msra.mxu0 0
        %5287 = vmatprep.subr.bf16.mxu0 0
        %5288 = vmatpush2.bf16.msra.mxu0 0
        %5289 = vmatprep.subr.bf16.mxu0 0
        %5290 = vmatpush2.bf16.msra.mxu0 0
        %5291 = vmatprep.subr.bf16.mxu0 0
        %5292 = vmatpush2.bf16.msra.mxu0 0
        %5293 = vmatprep.subr.bf16.mxu0 0
        %5294 = vmatpush2.bf16.msra.mxu0 0
        %5295 = vmatprep.subr.bf16.mxu0 0
        %5296 = vmatpush2.bf16.msra.mxu0 0
        %5297 = vmatprep.subr.bf16.mxu0 0
        %5298 = vmatpush2.bf16.msra.mxu0 0
        %5299 = vmatprep.mubr.bf16.mxu0 0
        %5300 = vmatmul.mubr.bf16.gmra.mxu0 %v5103
        %v5301 = vpop.f32.mrf.mxu0
        %v5302 = vadd.f32 %v663, %v5301
        %v5303 = vpop.f32.mrf.mxu0
        %v5304 = vadd.f32 %v667, %v5303
        %v5305 = vpop.f32.mrf.mxu0
        %v5306 = vadd.f32 %v663, %v5305
        %v5307 = vpop.f32.mrf.mxu0
        %v5308 = vadd.f32 %v667, %v5307
        %5309 = vmatprep.mubr.bf16.mxu0 0
        %5310 = vmatmul.mubr.bf16.gmra.mxu0 %v5106
        %v5311 = vpop.f32.mrf.mxu0
        %v5312 = vadd.f32 %v663, %v5311
        %v5313 = vpop.f32.mrf.mxu0
        %v5314 = vadd.f32 %v667, %v5313
        %v5315 = vpop.f32.mrf.mxu0
        %v5316 = vadd.f32 %v663, %v5315
        %v5317 = vpop.f32.mrf.mxu0
        %v5318 = vadd.f32 %v667, %v5317
        %5319 = vdwg.mxu0
        %5320 = vmatprep.subr.bf16.mxu0 %v2520
        %5321 = vmatpush1.bf16.msra.mxu0 %v2519
        %5322 = vmatprep.subr.bf16.mxu0 %v2512
        %5323 = vmatpush1.bf16.msra.mxu0 %v2511
        %5324 = vmatprep.subr.bf16.mxu0 %v2504
        %5325 = vmatpush1.bf16.msra.mxu0 %v2503
        %5326 = vmatprep.subr.bf16.mxu0 %v2496
        %5327 = vmatpush1.bf16.msra.mxu0 %v2495
        %5328 = vmatprep.subr.bf16.mxu0 %v2488
        %5329 = vmatpush1.bf16.msra.mxu0 %v2487
        %5330 = vmatprep.subr.bf16.mxu0 %v2480
        %5331 = vmatpush1.bf16.msra.mxu0 %v2479
        %5332 = vmatprep.subr.bf16.mxu0 %v2472
        %5333 = vmatpush1.bf16.msra.mxu0 %v2471
        %5334 = vmatprep.subr.bf16.mxu0 %v2464
        %5335 = vmatpush1.bf16.msra.mxu0 %v2463
        %5336 = vmatprep.subr.bf16.mxu0 %v2584
        %5337 = vmatpush2.bf16.msra.mxu0 %v2583
        %5338 = vmatprep.subr.bf16.mxu0 %v2576
        %5339 = vmatpush2.bf16.msra.mxu0 %v2575
        %5340 = vmatprep.subr.bf16.mxu0 %v2568
        %5341 = vmatpush2.bf16.msra.mxu0 %v2567
        %5342 = vmatprep.subr.bf16.mxu0 %v2560
        %5343 = vmatpush2.bf16.msra.mxu0 %v2559
        %5344 = vmatprep.subr.bf16.mxu0 %v2552
        %5345 = vmatpush2.bf16.msra.mxu0 %v2551
        %5346 = vmatprep.subr.bf16.mxu0 %v2544
        %5347 = vmatpush2.bf16.msra.mxu0 %v2543
        %5348 = vmatprep.subr.bf16.mxu0 %v2536
        %5349 = vmatpush2.bf16.msra.mxu0 %v2535
        %5350 = vmatprep.subr.bf16.mxu0 %v2528
        %5351 = vmatpush2.bf16.msra.mxu0 %v2527
        %5352 = vmatprep.mubr.bf16.mxu0 %v4818
        %5353 = vmatmul.mubr.bf16.gmra.mxu0 %v4817
        %v5354 = vpop.f32.mrf.mxu0
        %v5355 = vadd.f32 0.0, %v5354
        %v5356 = vpop.f32.mrf.mxu0
        %v5357 = vadd.f32 0.0, %v5356
        %v5358 = vpop.f32.mrf.mxu0
        %v5359 = vadd.f32 0.0, %v5358
        %v5360 = vpop.f32.mrf.mxu0
        %v5361 = vadd.f32 0.0, %v5360
        %5362 = vmatprep.mubr.bf16.mxu0 %v4820
        %5363 = vmatmul.mubr.bf16.gmra.mxu0 %v4819
        %v5364 = vpop.f32.mrf.mxu0
        %v5365 = vadd.f32 0.0, %v5364
        %v5366 = vpop.f32.mrf.mxu0
        %v5367 = vadd.f32 0.0, %v5366
        %v5368 = vpop.f32.mrf.mxu0
        %v5369 = vadd.f32 0.0, %v5368
        %v5370 = vpop.f32.mrf.mxu0
        %v5371 = vadd.f32 0.0, %v5370
        %5372 = vdwg.mxu0
        %5373 = vmatprep.subr.bf16.mxu0 %v2522
        %5374 = vmatpush1.bf16.msra.mxu0 %v2521
        %5375 = vmatprep.subr.bf16.mxu0 %v2514
        %5376 = vmatpush1.bf16.msra.mxu0 %v2513
        %5377 = vmatprep.subr.bf16.mxu0 %v2506
        %5378 = vmatpush1.bf16.msra.mxu0 %v2505
        %5379 = vmatprep.subr.bf16.mxu0 %v2498
        %5380 = vmatpush1.bf16.msra.mxu0 %v2497
        %5381 = vmatprep.subr.bf16.mxu0 %v2490
        %5382 = vmatpush1.bf16.msra.mxu0 %v2489
        %5383 = vmatprep.subr.bf16.mxu0 %v2482
        %5384 = vmatpush1.bf16.msra.mxu0 %v2481
        %5385 = vmatprep.subr.bf16.mxu0 %v2474
        %5386 = vmatpush1.bf16.msra.mxu0 %v2473
        %5387 = vmatprep.subr.bf16.mxu0 %v2466
        %5388 = vmatpush1.bf16.msra.mxu0 %v2465
        %5389 = vmatprep.subr.bf16.mxu0 %v2586
        %5390 = vmatpush2.bf16.msra.mxu0 %v2585
        %5391 = vmatprep.subr.bf16.mxu0 %v2578
        %5392 = vmatpush2.bf16.msra.mxu0 %v2577
        %5393 = vmatprep.subr.bf16.mxu0 %v2570
        %5394 = vmatpush2.bf16.msra.mxu0 %v2569
        %5395 = vmatprep.subr.bf16.mxu0 %v2562
        %5396 = vmatpush2.bf16.msra.mxu0 %v2561
        %5397 = vmatprep.subr.bf16.mxu0 %v2554
        %5398 = vmatpush2.bf16.msra.mxu0 %v2553
        %5399 = vmatprep.subr.bf16.mxu0 %v2546
        %5400 = vmatpush2.bf16.msra.mxu0 %v2545
        %5401 = vmatprep.subr.bf16.mxu0 %v2538
        %5402 = vmatpush2.bf16.msra.mxu0 %v2537
        %5403 = vmatprep.subr.bf16.mxu0 %v2530
        %5404 = vmatpush2.bf16.msra.mxu0 %v2529
        %5405 = vmatprep.mubr.bf16.mxu0 %v4818
        %5406 = vmatmul.mubr.bf16.gmra.mxu0 %v4817
        %v5407 = vpop.f32.mrf.mxu0
        %v5408 = vadd.f32 0.0, %v5407
        %v5409 = vpop.f32.mrf.mxu0
        %v5410 = vadd.f32 0.0, %v5409
        %v5411 = vpop.f32.mrf.mxu0
        %v5412 = vadd.f32 0.0, %v5411
        %v5413 = vpop.f32.mrf.mxu0
        %v5414 = vadd.f32 0.0, %v5413
        %5415 = vmatprep.mubr.bf16.mxu0 %v4820
        %5416 = vmatmul.mubr.bf16.gmra.mxu0 %v4819
        %v5417 = vpop.f32.mrf.mxu0
        %v5418 = vadd.f32 0.0, %v5417
        %v5419 = vpop.f32.mrf.mxu0
        %v5420 = vadd.f32 0.0, %v5419
        %v5421 = vpop.f32.mrf.mxu0
        %v5422 = vadd.f32 0.0, %v5421
        %v5423 = vpop.f32.mrf.mxu0
        %v5424 = vadd.f32 0.0, %v5423
        %5425 = vdwg.mxu0
        %5426 = vmatprep.subr.bf16.mxu0 %v2524
        %5427 = vmatpush1.bf16.msra.mxu0 %v2523
        %5428 = vmatprep.subr.bf16.mxu0 %v2516
        %5429 = vmatpush1.bf16.msra.mxu0 %v2515
        %5430 = vmatprep.subr.bf16.mxu0 %v2508
        %5431 = vmatpush1.bf16.msra.mxu0 %v2507
        %5432 = vmatprep.subr.bf16.mxu0 %v2500
        %5433 = vmatpush1.bf16.msra.mxu0 %v2499
        %5434 = vmatprep.subr.bf16.mxu0 %v2492
        %5435 = vmatpush1.bf16.msra.mxu0 %v2491
        %5436 = vmatprep.subr.bf16.mxu0 %v2484
        %5437 = vmatpush1.bf16.msra.mxu0 %v2483
        %5438 = vmatprep.subr.bf16.mxu0 %v2476
        %5439 = vmatpush1.bf16.msra.mxu0 %v2475
        %5440 = vmatprep.subr.bf16.mxu0 %v2468
        %5441 = vmatpush1.bf16.msra.mxu0 %v2467
        %5442 = vmatprep.subr.bf16.mxu0 %v2588
        %5443 = vmatpush2.bf16.msra.mxu0 %v2587
        %5444 = vmatprep.subr.bf16.mxu0 %v2580
        %5445 = vmatpush2.bf16.msra.mxu0 %v2579
        %5446 = vmatprep.subr.bf16.mxu0 %v2572
        %5447 = vmatpush2.bf16.msra.mxu0 %v2571
        %5448 = vmatprep.subr.bf16.mxu0 %v2564
        %5449 = vmatpush2.bf16.msra.mxu0 %v2563
        %5450 = vmatprep.subr.bf16.mxu0 %v2556
        %5451 = vmatpush2.bf16.msra.mxu0 %v2555
        %5452 = vmatprep.subr.bf16.mxu0 %v2548
        %5453 = vmatpush2.bf16.msra.mxu0 %v2547
        %5454 = vmatprep.subr.bf16.mxu0 %v2540
        %5455 = vmatpush2.bf16.msra.mxu0 %v2539
        %5456 = vmatprep.subr.bf16.mxu0 %v2532
        %5457 = vmatpush2.bf16.msra.mxu0 %v2531
        %5458 = vmatprep.mubr.bf16.mxu0 %v4818
        %5459 = vmatmul.mubr.bf16.gmra.mxu0 %v4817
        %v5460 = vpop.f32.mrf.mxu0
        %v5461 = vadd.f32 0.0, %v5460
        %v5462 = vpop.f32.mrf.mxu0
        %v5463 = vadd.f32 0.0, %v5462
        %v5464 = vpop.f32.mrf.mxu0
        %v5465 = vadd.f32 0.0, %v5464
        %v5466 = vpop.f32.mrf.mxu0
        %v5467 = vadd.f32 0.0, %v5466
        %5468 = vmatprep.mubr.bf16.mxu0 %v4820
        %5469 = vmatmul.mubr.bf16.gmra.mxu0 %v4819
        %v5470 = vpop.f32.mrf.mxu0
        %v5471 = vadd.f32 0.0, %v5470
        %v5472 = vpop.f32.mrf.mxu0
        %v5473 = vadd.f32 0.0, %v5472
        %v5474 = vpop.f32.mrf.mxu0
        %v5475 = vadd.f32 0.0, %v5474
        %v5476 = vpop.f32.mrf.mxu0
        %v5477 = vadd.f32 0.0, %v5476
        %5478 = vdwg.mxu0
        %5479 = vmatprep.subr.bf16.mxu0 %v2526
        %5480 = vmatpush1.bf16.msra.mxu0 %v2525
        %5481 = vmatprep.subr.bf16.mxu0 %v2518
        %5482 = vmatpush1.bf16.msra.mxu0 %v2517
        %5483 = vmatprep.subr.bf16.mxu0 %v2510
        %5484 = vmatpush1.bf16.msra.mxu0 %v2509
        %5485 = vmatprep.subr.bf16.mxu0 %v2502
        %5486 = vmatpush1.bf16.msra.mxu0 %v2501
        %5487 = vmatprep.subr.bf16.mxu0 %v2494
        %5488 = vmatpush1.bf16.msra.mxu0 %v2493
        %5489 = vmatprep.subr.bf16.mxu0 %v2486
        %5490 = vmatpush1.bf16.msra.mxu0 %v2485
        %5491 = vmatprep.subr.bf16.mxu0 %v2478
        %5492 = vmatpush1.bf16.msra.mxu0 %v2477
        %5493 = vmatprep.subr.bf16.mxu0 %v2470
        %5494 = vmatpush1.bf16.msra.mxu0 %v2469
        %5495 = vmatprep.subr.bf16.mxu0 %v2590
        %5496 = vmatpush2.bf16.msra.mxu0 %v2589
        %5497 = vmatprep.subr.bf16.mxu0 %v2582
        %5498 = vmatpush2.bf16.msra.mxu0 %v2581
        %5499 = vmatprep.subr.bf16.mxu0 %v2574
        %5500 = vmatpush2.bf16.msra.mxu0 %v2573
        %5501 = vmatprep.subr.bf16.mxu0 %v2566
        %5502 = vmatpush2.bf16.msra.mxu0 %v2565
        %5503 = vmatprep.subr.bf16.mxu0 %v2558
        %5504 = vmatpush2.bf16.msra.mxu0 %v2557
        %5505 = vmatprep.subr.bf16.mxu0 %v2550
        %5506 = vmatpush2.bf16.msra.mxu0 %v2549
        %5507 = vmatprep.subr.bf16.mxu0 %v2542
        %5508 = vmatpush2.bf16.msra.mxu0 %v2541
        %5509 = vmatprep.subr.bf16.mxu0 %v2534
        %5510 = vmatpush2.bf16.msra.mxu0 %v2533
        %5511 = vmatprep.mubr.bf16.mxu0 %v4818
        %5512 = vmatmul.mubr.bf16.gmra.mxu0 %v4817
        %v5513 = vpop.f32.mrf.mxu0
        %v5514 = vadd.f32 0.0, %v5513
        %v5515 = vpop.f32.mrf.mxu0
        %v5516 = vadd.f32 0.0, %v5515
        %v5517 = vpop.f32.mrf.mxu0
        %v5518 = vadd.f32 0.0, %v5517
        %v5519 = vpop.f32.mrf.mxu0
        %v5520 = vadd.f32 0.0, %v5519
        %5521 = vmatprep.mubr.bf16.mxu0 %v4820
        %5522 = vmatmul.mubr.bf16.gmra.mxu0 %v4819
        %v5523 = vpop.f32.mrf.mxu0
        %v5524 = vadd.f32 0.0, %v5523
        %v5525 = vpop.f32.mrf.mxu0
        %v5526 = vadd.f32 0.0, %v5525
        %v5527 = vpop.f32.mrf.mxu0
        %v5528 = vadd.f32 0.0, %v5527
        %v5529 = vpop.f32.mrf.mxu0
        %v5530 = vadd.f32 0.0, %v5529
        %5531 = vdwg.mxu0
        %v5532 = vadd.f32 %v5143, %v5355
        %v5533 = vadd.f32 %v5145, %v5357
        %v5534 = vadd.f32 %v5196, %v5408
        %v5535 = vadd.f32 %v5198, %v5410
        %v5536 = vadd.f32 %v5249, %v5461
        %v5537 = vadd.f32 %v5251, %v5463
        %v5538 = vadd.f32 %v5302, %v5514
        %v5539 = vadd.f32 %v5304, %v5516
        %v5540 = vadd.f32 %v5147, %v5359
        %v5541 = vadd.f32 %v5149, %v5361
        %v5542 = vadd.f32 %v5200, %v5412
        %v5543 = vadd.f32 %v5202, %v5414
        %v5544 = vadd.f32 %v5253, %v5465
        %v5545 = vadd.f32 %v5255, %v5467
        %v5546 = vadd.f32 %v5306, %v5518
        %v5547 = vadd.f32 %v5308, %v5520
        %v5548 = vadd.f32 %v5153, %v5365
        %v5549 = vadd.f32 %v5155, %v5367
        %v5550 = vadd.f32 %v5206, %v5418
        %v5551 = vadd.f32 %v5208, %v5420
        %v5552 = vadd.f32 %v5259, %v5471
        %v5553 = vadd.f32 %v5261, %v5473
        %v5554 = vadd.f32 %v5312, %v5524
        %v5555 = vadd.f32 %v5314, %v5526
        %v5556 = vadd.f32 %v5157, %v5369
        %v5557 = vadd.f32 %v5159, %v5371
        %v5558 = vadd.f32 %v5210, %v5422
        %v5559 = vadd.f32 %v5212, %v5424
        %v5560 = vadd.f32 %v5263, %v5475
        %v5561 = vadd.f32 %v5265, %v5477
        %v5562 = vadd.f32 %v5316, %v5528
        %v5563 = vadd.f32 %v5318, %v5530
        %v5564 = vtanh.pop %v5532
        %v5565 = vtanh.pop %v5533
        %v5566 = vtanh.pop %v5540
        %v5567 = vtanh.pop %v5541
        %v5568 = vtanh.pop %v5548
        %v5569 = vtanh.pop %v5549
        %v5570 = vtanh.pop %v5556
        %v5571 = vtanh.pop %v5557
        %v5572 = vmul.f32 %v5564, 0.5
        %v5573 = vmul.f32 %v5565, 0.5
        %v5574 = vmul.f32 %v5566, 0.5
        %v5575 = vmul.f32 %v5567, 0.5
        %v5576 = vmul.f32 %v5568, 0.5
        %v5577 = vmul.f32 %v5569, 0.5
        %v5578 = vmul.f32 %v5570, 0.5
        %v5579 = vmul.f32 %v5571, 0.5
        %v5580 = vadd.f32 %v5572, 0.5
        %v5581 = vadd.f32 %v5573, 0.5
        %v5582 = vadd.f32 %v5574, 0.5
        %v5583 = vadd.f32 %v5575, 0.5
        %v5584 = vadd.f32 %v5576, 0.5
        %v5585 = vadd.f32 %v5577, 0.5
        %v5586 = vadd.f32 %v5578, 0.5
        %v5587 = vadd.f32 %v5579, 0.5
        %v5588 = vtanh.pop %v5534
        %v5589 = vtanh.pop %v5535
        %v5590 = vtanh.pop %v5542
        %v5591 = vtanh.pop %v5543
        %v5592 = vtanh.pop %v5550
        %v5593 = vtanh.pop %v5551
        %v5594 = vtanh.pop %v5558
        %v5595 = vtanh.pop %v5559
        %v5596 = vmul.f32 %v5588, 0.5
        %v5597 = vmul.f32 %v5589, 0.5
        %v5598 = vmul.f32 %v5590, 0.5
        %v5599 = vmul.f32 %v5591, 0.5
        %v5600 = vmul.f32 %v5592, 0.5
        %v5601 = vmul.f32 %v5593, 0.5
        %v5602 = vmul.f32 %v5594, 0.5
        %v5603 = vmul.f32 %v5595, 0.5
        %v5604 = vadd.f32 %v5596, 0.5
        %v5605 = vadd.f32 %v5597, 0.5
        %v5606 = vadd.f32 %v5598, 0.5
        %v5607 = vadd.f32 %v5599, 0.5
        %v5608 = vadd.f32 %v5600, 0.5
        %v5609 = vadd.f32 %v5601, 0.5
        %v5610 = vadd.f32 %v5602, 0.5
        %v5611 = vadd.f32 %v5603, 0.5
        %v5612 = vtanh.pop %v5536
        %v5613 = vtanh.pop %v5537
        %v5614 = vtanh.pop %v5544
        %v5615 = vtanh.pop %v5545
        %v5616 = vtanh.pop %v5552
        %v5617 = vtanh.pop %v5553
        %v5618 = vtanh.pop %v5560
        %v5619 = vtanh.pop %v5561
        %v5620 = vtanh.pop %v5538
        %v5621 = vtanh.pop %v5539
        %v5622 = vtanh.pop %v5546
        %v5623 = vtanh.pop %v5547
        %v5624 = vtanh.pop %v5554
        %v5625 = vtanh.pop %v5555
        %v5626 = vtanh.pop %v5562
        %v5627 = vtanh.pop %v5563
        %v5628 = vmul.f32 %v5620, 0.5
        %v5629 = vmul.f32 %v5621, 0.5
        %v5630 = vmul.f32 %v5622, 0.5
        %v5631 = vmul.f32 %v5623, 0.5
        %v5632 = vmul.f32 %v5624, 0.5
        %v5633 = vmul.f32 %v5625, 0.5
        %v5634 = vmul.f32 %v5626, 0.5
        %v5635 = vmul.f32 %v5627, 0.5
        %v5636 = vadd.f32 %v5628, 0.5
        %v5637 = vadd.f32 %v5629, 0.5
        %v5638 = vadd.f32 %v5630, 0.5
        %v5639 = vadd.f32 %v5631, 0.5
        %v5640 = vadd.f32 %v5632, 0.5
        %v5641 = vadd.f32 %v5633, 0.5
        %v5642 = vadd.f32 %v5634, 0.5
        %v5643 = vadd.f32 %v5635, 0.5
        %v5644 = vmul.f32 %v5604, %v4793
        %v5645 = vmul.f32 %v5605, %v4794
        %v5646 = vmul.f32 %v5606, %v4795
        %v5647 = vmul.f32 %v5607, %v4796
        %v5648 = vmul.f32 %v5608, %v4797
        %v5649 = vmul.f32 %v5609, %v4798
        %v5650 = vmul.f32 %v5610, %v4799
        %v5651 = vmul.f32 %v5611, %v4800
        %v5652 = vmul.f32 %v5580, %v5612
        %v5653 = vmul.f32 %v5581, %v5613
        %v5654 = vmul.f32 %v5582, %v5614
        %v5655 = vmul.f32 %v5583, %v5615
        %v5656 = vmul.f32 %v5584, %v5616
        %v5657 = vmul.f32 %v5585, %v5617
        %v5658 = vmul.f32 %v5586, %v5618
        %v5659 = vmul.f32 %v5587, %v5619
        %v5660 = vadd.f32 %v5644, %v5652
        %v5661 = vadd.f32 %v5645, %v5653
        %v5662 = vadd.f32 %v5646, %v5654
        %v5663 = vadd.f32 %v5647, %v5655
        %v5664 = vadd.f32 %v5648, %v5656
        %v5665 = vadd.f32 %v5649, %v5657
        %v5666 = vadd.f32 %v5650, %v5658
        %v5667 = vadd.f32 %v5651, %v5659
        %v5668 = vtanh.pop %v5660
        %v5669 = vtanh.pop %v5661
        %v5670 = vtanh.pop %v5662
        %v5671 = vtanh.pop %v5663
        %v5672 = vtanh.pop %v5664
        %v5673 = vtanh.pop %v5665
        %v5674 = vtanh.pop %v5666
        %v5675 = vtanh.pop %v5667
        %v5676 = vmul.f32 %v5636, %v5668
        %v5677 = vmul.f32 %v5637, %v5669
        %v5678 = vmul.f32 %v5638, %v5670
        %v5679 = vmul.f32 %v5639, %v5671
        %v5680 = vmul.f32 %v5640, %v5672
        %v5681 = vmul.f32 %v5641, %v5673
        %v5682 = vmul.f32 %v5642, %v5674
        %v5683 = vmul.f32 %v5643, %v5675
        %v5684 = vpack.c.bf16 %v5678, %v5676
        %v5685 = vpack.c.bf16 %v5679, %v5677
        %v5686 = vpack.c.bf16 %v5682, %v5680
        %v5687 = vpack.c.bf16 %v5683, %v5681
        %5688 = vmatprep.subr.bf16.mxu0 %v1417
        %5689 = vmatpush1.bf16.msra.mxu0 %v1416
        %5690 = vmatprep.subr.bf16.mxu0 %v1413
        %5691 = vmatpush1.bf16.msra.mxu0 %v1412
        %5692 = vmatprep.subr.bf16.mxu0 %v1409
        %5693 = vmatpush1.bf16.msra.mxu0 %v1408
        %5694 = vmatprep.subr.bf16.mxu0 %v1405
        %5695 = vmatpush1.bf16.msra.mxu0 %v1404
        %5696 = vmatprep.subr.bf16.mxu0 %v1401
        %5697 = vmatpush1.bf16.msra.mxu0 %v1400
        %5698 = vmatprep.subr.bf16.mxu0 %v1397
        %5699 = vmatpush1.bf16.msra.mxu0 %v1396
        %5700 = vmatprep.subr.bf16.mxu0 %v1393
        %5701 = vmatpush1.bf16.msra.mxu0 %v1392
        %5702 = vmatprep.subr.bf16.mxu0 %v1389
        %5703 = vmatpush1.bf16.msra.mxu0 %v1388
        %5704 = vmatprep.subr.bf16.mxu0 %v1449
        %5705 = vmatpush2.bf16.msra.mxu0 %v1448
        %5706 = vmatprep.subr.bf16.mxu0 %v1445
        %5707 = vmatpush2.bf16.msra.mxu0 %v1444
        %5708 = vmatprep.subr.bf16.mxu0 %v1441
        %5709 = vmatpush2.bf16.msra.mxu0 %v1440
        %5710 = vmatprep.subr.bf16.mxu0 %v1437
        %5711 = vmatpush2.bf16.msra.mxu0 %v1436
        %5712 = vmatprep.subr.bf16.mxu0 %v1433
        %5713 = vmatpush2.bf16.msra.mxu0 %v1432
        %5714 = vmatprep.subr.bf16.mxu0 %v1429
        %5715 = vmatpush2.bf16.msra.mxu0 %v1428
        %5716 = vmatprep.subr.bf16.mxu0 %v1425
        %5717 = vmatpush2.bf16.msra.mxu0 %v1424
        %5718 = vmatprep.subr.bf16.mxu0 %v1421
        %5719 = vmatpush2.bf16.msra.mxu0 %v1420
        %5720 = vmatprep.mubr.bf16.mxu0 %v5685
        %5721 = vmatmul.mubr.bf16.gmra.mxu0 %v5684
        %v5722 = vpop.f32.mrf.mxu0
        %v5723 = vadd.f32 %v1083, %v5722
        %v5724 = vpop.f32.mrf.mxu0
        %v5725 = vadd.f32 %v1087, %v5724
        %v5726 = vpop.f32.mrf.mxu0
        %v5727 = vadd.f32 %v1083, %v5726
        %v5728 = vpop.f32.mrf.mxu0
        %v5729 = vadd.f32 %v1087, %v5728
        %5730 = vmatprep.mubr.bf16.mxu0 %v5687
        %5731 = vmatmul.mubr.bf16.gmra.mxu0 %v5686
        %v5732 = vpop.f32.mrf.mxu0
        %v5733 = vadd.f32 %v1083, %v5732
        %v5734 = vpop.f32.mrf.mxu0
        %v5735 = vadd.f32 %v1087, %v5734
        %v5736 = vpop.f32.mrf.mxu0
        %v5737 = vadd.f32 %v1083, %v5736
        %v5738 = vpop.f32.mrf.mxu0
        %v5739 = vadd.f32 %v1087, %v5738
        %5740 = vdwg.mxu0
        %5741 = vmatprep.subr.bf16.mxu0 %v1481
        %5742 = vmatpush1.bf16.msra.mxu0 %v1480
        %5743 = vmatprep.subr.bf16.mxu0 %v1477
        %5744 = vmatpush1.bf16.msra.mxu0 %v1476
        %5745 = vmatprep.subr.bf16.mxu0 %v1473
        %5746 = vmatpush1.bf16.msra.mxu0 %v1472
        %5747 = vmatprep.subr.bf16.mxu0 %v1469
        %5748 = vmatpush1.bf16.msra.mxu0 %v1468
        %5749 = vmatprep.subr.bf16.mxu0 %v1465
        %5750 = vmatpush1.bf16.msra.mxu0 %v1464
        %5751 = vmatprep.subr.bf16.mxu0 %v1461
        %5752 = vmatpush1.bf16.msra.mxu0 %v1460
        %5753 = vmatprep.subr.bf16.mxu0 %v1457
        %5754 = vmatpush1.bf16.msra.mxu0 %v1456
        %5755 = vmatprep.subr.bf16.mxu0 %v1453
        %5756 = vmatpush1.bf16.msra.mxu0 %v1452
        %5757 = vmatprep.subr.bf16.mxu0 0
        %5758 = vmatpush2.bf16.msra.mxu0 0
        %5759 = vmatprep.subr.bf16.mxu0 0
        %5760 = vmatpush2.bf16.msra.mxu0 0
        %5761 = vmatprep.subr.bf16.mxu0 0
        %5762 = vmatpush2.bf16.msra.mxu0 0
        %5763 = vmatprep.subr.bf16.mxu0 0
        %5764 = vmatpush2.bf16.msra.mxu0 0
        %5765 = vmatprep.subr.bf16.mxu0 0
        %5766 = vmatpush2.bf16.msra.mxu0 0
        %5767 = vmatprep.subr.bf16.mxu0 0
        %5768 = vmatpush2.bf16.msra.mxu0 0
        %5769 = vmatprep.subr.bf16.mxu0 0
        %5770 = vmatpush2.bf16.msra.mxu0 0
        %5771 = vmatprep.subr.bf16.mxu0 0
        %5772 = vmatpush2.bf16.msra.mxu0 0
        %5773 = vmatprep.mubr.bf16.mxu0 0
        %5774 = vmatmul.mubr.bf16.gmra.mxu0 %v5093
        %v5775 = vpop.f32.mrf.mxu0
        %v5776 = vadd.f32 %v5723, %v5775
        %v5777 = vpop.f32.mrf.mxu0
        %v5778 = vadd.f32 %v5725, %v5777
        %v5779 = vpop.f32.mrf.mxu0
        %v5780 = vadd.f32 %v5727, %v5779
        %v5781 = vpop.f32.mrf.mxu0
        %v5782 = vadd.f32 %v5729, %v5781
        %5783 = vmatprep.mubr.bf16.mxu0 0
        %5784 = vmatmul.mubr.bf16.gmra.mxu0 %v5094
        %v5785 = vpop.f32.mrf.mxu0
        %v5786 = vadd.f32 %v5733, %v5785
        %v5787 = vpop.f32.mrf.mxu0
        %v5788 = vadd.f32 %v5735, %v5787
        %v5789 = vpop.f32.mrf.mxu0
        %v5790 = vadd.f32 %v5737, %v5789
        %v5791 = vpop.f32.mrf.mxu0
        %v5792 = vadd.f32 %v5739, %v5791
        %5793 = vdwg.mxu0
        %5794 = vmatprep.subr.bf16.mxu0 %v1419
        %5795 = vmatpush1.bf16.msra.mxu0 %v1418
        %5796 = vmatprep.subr.bf16.mxu0 %v1415
        %5797 = vmatpush1.bf16.msra.mxu0 %v1414
        %5798 = vmatprep.subr.bf16.mxu0 %v1411
        %5799 = vmatpush1.bf16.msra.mxu0 %v1410
        %5800 = vmatprep.subr.bf16.mxu0 %v1407
        %5801 = vmatpush1.bf16.msra.mxu0 %v1406
        %5802 = vmatprep.subr.bf16.mxu0 %v1403
        %5803 = vmatpush1.bf16.msra.mxu0 %v1402
        %5804 = vmatprep.subr.bf16.mxu0 %v1399
        %5805 = vmatpush1.bf16.msra.mxu0 %v1398
        %5806 = vmatprep.subr.bf16.mxu0 %v1395
        %5807 = vmatpush1.bf16.msra.mxu0 %v1394
        %5808 = vmatprep.subr.bf16.mxu0 %v1391
        %5809 = vmatpush1.bf16.msra.mxu0 %v1390
        %5810 = vmatprep.subr.bf16.mxu0 %v1451
        %5811 = vmatpush2.bf16.msra.mxu0 %v1450
        %5812 = vmatprep.subr.bf16.mxu0 %v1447
        %5813 = vmatpush2.bf16.msra.mxu0 %v1446
        %5814 = vmatprep.subr.bf16.mxu0 %v1443
        %5815 = vmatpush2.bf16.msra.mxu0 %v1442
        %5816 = vmatprep.subr.bf16.mxu0 %v1439
        %5817 = vmatpush2.bf16.msra.mxu0 %v1438
        %5818 = vmatprep.subr.bf16.mxu0 %v1435
        %5819 = vmatpush2.bf16.msra.mxu0 %v1434
        %5820 = vmatprep.subr.bf16.mxu0 %v1431
        %5821 = vmatpush2.bf16.msra.mxu0 %v1430
        %5822 = vmatprep.subr.bf16.mxu0 %v1427
        %5823 = vmatpush2.bf16.msra.mxu0 %v1426
        %5824 = vmatprep.subr.bf16.mxu0 %v1423
        %5825 = vmatpush2.bf16.msra.mxu0 %v1422
        %5826 = vmatprep.mubr.bf16.mxu0 %v5685
        %5827 = vmatmul.mubr.bf16.gmra.mxu0 %v5684
        %v5828 = vpop.f32.mrf.mxu0
        %v5829 = vadd.f32 %v1091, %v5828
        %v5830 = vpop.f32.mrf.mxu0
        %v5831 = vadd.f32 %v1095, %v5830
        %v5832 = vpop.f32.mrf.mxu0
        %v5833 = vadd.f32 %v1091, %v5832
        %v5834 = vpop.f32.mrf.mxu0
        %v5835 = vadd.f32 %v1095, %v5834
        %5836 = vmatprep.mubr.bf16.mxu0 %v5687
        %5837 = vmatmul.mubr.bf16.gmra.mxu0 %v5686
        %v5838 = vpop.f32.mrf.mxu0
        %v5839 = vadd.f32 %v1091, %v5838
        %v5840 = vpop.f32.mrf.mxu0
        %v5841 = vadd.f32 %v1095, %v5840
        %v5842 = vpop.f32.mrf.mxu0
        %v5843 = vadd.f32 %v1091, %v5842
        %v5844 = vpop.f32.mrf.mxu0
        %v5845 = vadd.f32 %v1095, %v5844
        %5846 = vdwg.mxu0
        %5847 = vmatprep.subr.bf16.mxu0 %v1483
        %5848 = vmatpush1.bf16.msra.mxu0 %v1482
        %5849 = vmatprep.subr.bf16.mxu0 %v1479
        %5850 = vmatpush1.bf16.msra.mxu0 %v1478
        %5851 = vmatprep.subr.bf16.mxu0 %v1475
        %5852 = vmatpush1.bf16.msra.mxu0 %v1474
        %5853 = vmatprep.subr.bf16.mxu0 %v1471
        %5854 = vmatpush1.bf16.msra.mxu0 %v1470
        %5855 = vmatprep.subr.bf16.mxu0 %v1467
        %5856 = vmatpush1.bf16.msra.mxu0 %v1466
        %5857 = vmatprep.subr.bf16.mxu0 %v1463
        %5858 = vmatpush1.bf16.msra.mxu0 %v1462
        %5859 = vmatprep.subr.bf16.mxu0 %v1459
        %5860 = vmatpush1.bf16.msra.mxu0 %v1458
        %5861 = vmatprep.subr.bf16.mxu0 %v1455
        %5862 = vmatpush1.bf16.msra.mxu0 %v1454
        %5863 = vmatprep.subr.bf16.mxu0 0
        %5864 = vmatpush2.bf16.msra.mxu0 0
        %5865 = vmatprep.subr.bf16.mxu0 0
        %5866 = vmatpush2.bf16.msra.mxu0 0
        %5867 = vmatprep.subr.bf16.mxu0 0
        %5868 = vmatpush2.bf16.msra.mxu0 0
        %5869 = vmatprep.subr.bf16.mxu0 0
        %5870 = vmatpush2.bf16.msra.mxu0 0
        %5871 = vmatprep.subr.bf16.mxu0 0
        %5872 = vmatpush2.bf16.msra.mxu0 0
        %5873 = vmatprep.subr.bf16.mxu0 0
        %5874 = vmatpush2.bf16.msra.mxu0 0
        %5875 = vmatprep.subr.bf16.mxu0 0
        %5876 = vmatpush2.bf16.msra.mxu0 0
        %5877 = vmatprep.subr.bf16.mxu0 0
        %5878 = vmatpush2.bf16.msra.mxu0 0
        %5879 = vmatprep.mubr.bf16.mxu0 0
        %5880 = vmatmul.mubr.bf16.gmra.mxu0 %v5093
        %v5881 = vpop.f32.mrf.mxu0
        %v5882 = vadd.f32 %v5829, %v5881
        %v5883 = vpop.f32.mrf.mxu0
        %v5884 = vadd.f32 %v5831, %v5883
        %v5885 = vpop.f32.mrf.mxu0
        %v5886 = vadd.f32 %v5833, %v5885
        %v5887 = vpop.f32.mrf.mxu0
        %v5888 = vadd.f32 %v5835, %v5887
        %5889 = vmatprep.mubr.bf16.mxu0 0
        %5890 = vmatmul.mubr.bf16.gmra.mxu0 %v5094
        %v5891 = vpop.f32.mrf.mxu0
        %v5892 = vadd.f32 %v5839, %v5891
        %v5893 = vpop.f32.mrf.mxu0
        %v5894 = vadd.f32 %v5841, %v5893
        %v5895 = vpop.f32.mrf.mxu0
        %v5896 = vadd.f32 %v5843, %v5895
        %v5897 = vpop.f32.mrf.mxu0
        %v5898 = vadd.f32 %v5845, %v5897
        %5899 = vdwg.mxu0
        %v5900 = vtanh.pop %v5776
        %v5901 = vtanh.pop %v5780
        %v5902 = vtanh.pop %v5786
        %v5903 = vtanh.pop %v5790
        %v5904 = vmul.f32 %v5900, 0.5
        %v5905 = vmul.f32 %v5901, 0.5
        %v5906 = vmul.f32 %v5902, 0.5
        %v5907 = vmul.f32 %v5903, 0.5
        %v5908 = vadd.f32 %v5904, 0.5
        %v5909 = vadd.f32 %v5905, 0.5
        %v5910 = vadd.f32 %v5906, 0.5
        %v5911 = vadd.f32 %v5907, 0.5
        %v5912 = vtanh.pop %v5778
        %v5913 = vtanh.pop %v5782
        %v5914 = vtanh.pop %v5788
        %v5915 = vtanh.pop %v5792
        %v5916 = vmul.f32 %v5912, 0.5
        %v5917 = vmul.f32 %v5913, 0.5
        %v5918 = vmul.f32 %v5914, 0.5
        %v5919 = vmul.f32 %v5915, 0.5
        %v5920 = vadd.f32 %v5916, 0.5
        %v5921 = vadd.f32 %v5917, 0.5
        %v5922 = vadd.f32 %v5918, 0.5
        %v5923 = vadd.f32 %v5919, 0.5
        %v5924 = vtanh.pop %v5882
        %v5925 = vtanh.pop %v5886
        %v5926 = vtanh.pop %v5892
        %v5927 = vtanh.pop %v5896
        %v5928 = vtanh.pop %v5884
        %v5929 = vtanh.pop %v5888
        %v5930 = vtanh.pop %v5894
        %v5931 = vtanh.pop %v5898
        %v5932 = vmul.f32 %v5928, 0.5
        %v5933 = vmul.f32 %v5929, 0.5
        %v5934 = vmul.f32 %v5930, 0.5
        %v5935 = vmul.f32 %v5931, 0.5
        %v5936 = vadd.f32 %v5932, 0.5
        %v5937 = vadd.f32 %v5933, 0.5
        %v5938 = vadd.f32 %v5934, 0.5
        %v5939 = vadd.f32 %v5935, 0.5
        %v5940 = vmul.f32 %v5920, %v5081
        %v5941 = vmul.f32 %v5921, %v5082
        %v5942 = vmul.f32 %v5922, %v5083
        %v5943 = vmul.f32 %v5923, %v5084
        %v5944 = vmul.f32 %v5908, %v5924
        %v5945 = vmul.f32 %v5909, %v5925
        %v5946 = vmul.f32 %v5910, %v5926
        %v5947 = vmul.f32 %v5911, %v5927
        %v5948 = vadd.f32 %v5940, %v5944
        %v5949 = vadd.f32 %v5941, %v5945
        %v5950 = vadd.f32 %v5942, %v5946
        %v5951 = vadd.f32 %v5943, %v5947
        %v5952 = vtanh.pop %v5948
        %v5953 = vtanh.pop %v5949
        %v5954 = vtanh.pop %v5950
        %v5955 = vtanh.pop %v5951
        %v5956 = vmul.f32 %v5936, %v5952
        %v5957 = vmul.f32 %v5937, %v5953
        %v5958 = vmul.f32 %v5938, %v5954
        %v5959 = vmul.f32 %v5939, %v5955
        %5960 = vst [vmem:[%s391] sm:$0xff] %v5956
        %5961 = vst [vmem:[%s391 + $0x8] sm:$0xff] %v5957
        %5962 = vst [vmem:[%s391 + $0x10] sm:$0xff] %v5958
        %5963 = vst [vmem:[%s391 + $0x18] sm:$0xff] %v5959
        %s5964 = sand.u32 %s161, 1
        %s5965 = scalar_lea.sflag [#allocation5], %s5964
        %s5966 = sand.u32 %s161, 1
        %s5967 = smul.addr %s5966, 32
        %s5968 = scalar_lea.vmem [#allocation8], %s5967
        // Predicated region
        $region91: #{tpu_custom_call.1} parent=77 // pred_check
          %p5969 = pneg %p171
        $region92: #{tpu_custom_call.1} parent=77 // pred_check_branch
          %5971 = sbr.rel (%p5969) target = $region94
        $region93: #{tpu_custom_call.1} parent=77 // pred_region
          %s5972 = smul.u32 4, %s22
          %s5974 = ssub.s32 512, 512
          %5975 = vsyncadd %s5965, %s5974
          %s5976 = smul.addr %s5972, 128
          %s5977 = scalar_lea.hbm %s6, %s5976
          %s5978 = sshll.u32 %s5968, 4
          %s5979 = int_to_ptr.vmem [resolvable:$true] %s5978
          %5984 = dma.vmem_to_hbm [thread:$0]  %s5979, 512, %s5977, %s5965, 128, 128, 8
        $region94: #{tpu_custom_call.1} parent=77 // pred_fallthru
          _
      $region78: #{tpu_custom_call.1} parent=5 // pred_fallthru
        _
      %p5985 = scmp.le.s32.totalorder 2, %s17
      // Predicated region
      $region95: #{tpu_custom_call.1} parent=5 // pred_check
        %p5986 = pneg %p5985
      $region96: #{tpu_custom_call.1} parent=5 // pred_check_branch
        %5988 = sbr.rel (%p5986) target = $region98
      $region97: #{tpu_custom_call.1} parent=5 // pred_region
        %s5989 = ssub.s32 %s17, 2
        // Predicated region
        $region99: #{tpu_custom_call.1} parent=97 // pred_check
          %p5990 = pneg %p177
        $region100: #{tpu_custom_call.1} parent=97 // pred_check_branch
          %5992 = sbr.rel (%p5990) target = $region102
        $region101: #{tpu_custom_call.1} parent=97 // pred_region
          %s5993 = sand.u32 %s162, 1
          %s5994 = scalar_lea.sflag [#allocation5], %s5993
          %s5995 = sand.u32 %s162, 1
          %s5996 = smul.addr %s5995, 32
          %s5997 = scalar_lea.vmem [#allocation8], %s5996
          %5998 = dma.done %s5994, 512
        $region102: #{tpu_custom_call.1} parent=97 // pred_fallthru
          _
      $region98: #{tpu_custom_call.1} parent=5 // pred_fallthru
        _
    $region6: #{tpu_custom_call.1} parent=1 // loop_footer
      %s21 = sadd.s32 1, %s17
    $region7: #{tpu_custom_call.1} parent=1 // loop_footer_branch
      %16 = sbr.rel target = $region3
    $region8: #{tpu_custom_call.1} parent=1 // loop_exit
      _
    %5999 = vsyncpa [#allocation4], 1
    %s6000 = scalar_lea.sflag [#allocation4], 1
    %6001 = vsyncpa %s6000, 1
    %6002 = vsyncpa [#allocation7], 1
    %6003 = vsyncpa [#allocation5], 1
    %s6004 = scalar_lea.sflag [#allocation5], 1
    %6005 = vsyncpa %s6004, 1

</llo_original>
